<compile_context>
chip_gen: v5e
topology: v5e:2x2
jax: 0.10.0
libtpu: 0.0.40
codegen_flags: <defaults>
</compile_context>

<pallas_src>
import functools
import math

import jax
import jax.numpy as jnp
from jax.experimental import pallas as pl
from jax.experimental.pallas import tpu as pltpu


# ----------------------------- in-kernel helpers -----------------------------

def _layernorm(v, gamma, beta, eps=1e-5):
    mu = jnp.mean(v, axis=-1, keepdims=True)
    var = jnp.mean(jnp.square(v - mu), axis=-1, keepdims=True)
    return (v - mu) * jax.lax.rsqrt(var + eps) * gamma + beta


def _gelu_tanh(x):
    # TODO(synk): PyTorch nn.GELU uses exact erf; tanh approximation differs slightly
    # (the chaotic regime amplifies any rounding delta anyway).
    c = 0.7978845608028654  # sqrt(2/pi)
    return 0.5 * x * (1.0 + jnp.tanh(c * (x + 0.044715 * x * x * x)))


# ---------------------------------- kernel -----------------------------------

def chaos_vit_kernel(patches_ref, pw_ref, pb_ref, cls_ref, pos_ref,
                     ln1g_ref, ln1b_ref, wqkv_ref, bqkv_ref, wo_ref, bo_ref,
                     ln2g_ref, ln2b_ref, w1_ref, b1_ref, w2_ref, b2_ref,
                     hg_ref, hb_ref, hw_ref, hbias_ref, r_ref,
                     out_ref, xbuf, ctx_slab,
                     *, batch_tile, s_pad, num_iterations, matmul_dtype):
    BT = batch_tile
    S_pad = s_pad
    S_real, D = pos_ref.shape               # real sequence length, embed dim
    N = S_real - 1                          # patches per image
    H = r_ref.shape[1]                      # heads
    dk = D // H
    scale = 1.0 / math.sqrt(float(dk))
    l = pl.program_id(1)                    # layer grid index (fastest axis)
    n_layers = pl.num_programs(1)

    def mm(a, b):                           # dense projection on the MXU (f32 accum)
        return jnp.dot(a.astype(matmul_dtype), b.astype(matmul_dtype),
                       preferred_element_type=jnp.float32)

    def mm_t_f32(a, b):                     # q @ k.T, kept f32 for score-path parity
        return jax.lax.dot_general(a, b, (((1,), (1,)), ((), ())),
                                   preferred_element_type=jnp.float32)

    # ------------- layer 0: patch embedding + [cls]+pos token assembly -------------
    @pl.when(l == 0)
    def _embed():
        tok = mm(patches_ref[...], pw_ref[...]) + pb_ref[...]        # (BT*N, D)
        pos = pos_ref[...]
        cls_row = cls_ref[...] + pos[0:1, :]                         # (1, D)
        pos_patch = pos[1:, :]                                       # (N, D)
        for b in range(BT):
            base = b * S_pad
            xbuf[base:base + 1, :] = cls_row
            xbuf[base + 1:base + 1 + N, :] = tok[b * N:(b + 1) * N, :] + pos_patch
            if S_pad > S_real:
                # zero ONLY the pad rows: masked keys get probability 0, but their
                # V rows still enter a matmul and must be finite.
                xbuf[base + S_real:base + S_pad, :] = jnp.zeros(
                    (S_pad - S_real, D), jnp.float32)
        # embedding dropout: identity (eval mode)

    # Additive key-padding mask row: 0 for valid keys, -1e9 for pad keys.
    col = jax.lax.broadcasted_iota(jnp.int32, (1, S_pad), 1)
    mask_add = jnp.where(col < S_real, 0.0, -1e9).astype(jnp.float32)

    # ------------------- encoder layer `l` (weights streamed per step) -------------------
    x = xbuf[...]                                                    # (BT*S_pad, D)
    xn = _layernorm(x, ln1g_ref[...], ln1b_ref[...])
    qkv = mm(xn, wqkv_ref[...]) + bqkv_ref[...]                      # fused QKV (BT*S_pad, 3D)
    wo = wo_ref[...]

    for b in range(BT):
        base = b * S_pad
        qkv_b = qkv[base:base + S_pad, :]
        for h in range(H):
            q_h = qkv_b[:, h * dk:(h + 1) * dk]
            k_h = qkv_b[:, D + h * dk:D + (h + 1) * dk]
            v_h = qkv_b[:, 2 * D + h * dk:2 * D + (h + 1) * dk]
            s = mm_t_f32(q_h, k_h) * scale + mask_add                # (S_pad, S_pad)
            # first softmax: EXACT division so probabilities stay in [0,1] before chaos
            e = jnp.exp(s - jnp.max(s, axis=-1, keepdims=True))
            s = e / jnp.sum(e, axis=-1, keepdims=True)
            r_h = r_ref[l, h]                                        # SMEM scalar
            for _ in range(num_iterations):                          # chaotic logistic map
                s = r_h * s * (1.0 - s)
            # second softmax: approx reciprocal (EUP) is safe post-chaos
            s = s + mask_add
            e = jnp.exp(s - jnp.max(s, axis=-1, keepdims=True))
            p = e * pl.reciprocal(jnp.sum(e, axis=-1, keepdims=True), approx=True)
            # attention dropout: identity (eval mode)
            ctx_slab[:, h * dk:(h + 1) * dk] = mm(p, v_h)            # stage head ctx
        attn_b = mm(ctx_slab[...], wo) + bo_ref[...]                 # ONE large-K W_o matmul
        xbuf[base:base + S_pad, :] = x[base:base + S_pad, :] + attn_b  # residual 1

    x2 = xbuf[...]
    xn2 = _layernorm(x2, ln2g_ref[...], ln2b_ref[...])
    h1 = _gelu_tanh(mm(xn2, w1_ref[...]) + b1_ref[...])
    xbuf[...] = x2 + mm(h1, w2_ref[...]) + b2_ref[...]               # residual 2

    # ---------------- last layer: anomaly head, lane-dense (rows, 128) output ---------------
    @pl.when(l == n_layers - 1)
    def _head():
        xh = _layernorm(xbuf[...], hg_ref[...], hb_ref[...])
        out_ref[...] = (mm(xh, hw_ref[...]) + hbias_ref[...]).astype(out_ref.dtype)


# ------------------------------ pallas wrapper --------------------------------

def _const_spec(shape):
    nd = len(shape)
    return pl.BlockSpec(shape, lambda b, l, _nd=nd: (0,) * _nd)


def _layer_spec(shape):
    # Stacked (L, ...) weight: stream one layer per grid step (leading dim squeezed).
    tail = tuple(shape[1:])
    nz = len(tail)
    return pl.BlockSpec((None,) + tail, lambda b, l, _nz=nz: (l,) + (0,) * _nz)


def extract_patches_nchw(x, patch):
    # Conv2d(kernel=stride=patch) im2col: (B,C,H,W) -> (B, N, C*P*P), row-major
    # patch-grid order matching PyTorch's flatten(2).permute(0,2,1).
    B, C, H, W = x.shape
    gh, gw = H // patch, W // patch
    x = x.reshape(B, C, gh, patch, gw, patch)
    x = x.transpose(0, 2, 4, 1, 3, 5)            # (B, gh, gw, C, P, P)
    return x.reshape(B, gh * gw, C * patch * patch)


def chaos_vit_forward(x, params, *, patch_size, num_iterations=5,
                      batch_tile=None, matmul_dtype=jnp.bfloat16):
    B = x.shape[0]
    S_real, D = params["pos"].shape
    N = S_real - 1
    L = params["wqkv"].shape[0]
    M = params["w1"].shape[-1]
    S_pad = ((S_real + 7) // 8) * 8

    patches = extract_patches_nchw(x, patch_size)                    # (B, N, CPP)
    cpp = patches.shape[-1]
    cpp_pad = params["patch_w"].shape[0]                             # 128-aligned K
    patches = patches.reshape(B * N, cpp)
    if cpp_pad != cpp:
        patches = jnp.pad(patches, ((0, 0), (0, cpp_pad - cpp)))

    BT = B if batch_tile is None else batch_tile
    assert B % BT == 0, "batch must be divisible by batch_tile"
    if B // BT > 1:
        # (8,128) BlockSpec constraint once the batch grid has more than one step.
        assert (BT * N) % 8 == 0, "batch_tile * num_patches must be a multiple of 8"

    weights = (params["patch_w"], params["patch_b"], params["cls"], params["pos"])
    layer_weights = (params["ln1_g"], params["ln1_b"], params["wqkv"], params["bqkv"],
                     params["wo"], params["bo"], params["ln2_g"], params["ln2_b"],
                     params["w1"], params["b1"], params["w2"], params["b2"])
    head_weights = (params["head_ln_g"], params["head_ln_b"],
                    params["head_w"], params["head_b"])

    # Explicit VMEM budget: 2x one layer's weights (streamed, double-buffered) +
    # constants + traced activations + scratch + I/O blocks, with headroom.
    fb = 4
    per_layer = fb * (2 * D + D * 3 * D + 3 * D + D * D + D + 2 * D
                      + D * M + M + M * D + D)
    const = fb * (cpp_pad * D + 3 * D + S_real * D + 2 * D + D * 128 + 128)
    act = fb * BT * S_pad * (2 * D + 3 * D + M + 2 * D)
    scratch = fb * (BT * S_pad * D + S_pad * D)
    io = fb * (BT * N * cpp_pad + BT * S_pad * 128) * 2
    vmem_bytes = int(min(max(2 * per_layer + const + 2 * act + scratch + io + (8 << 20),
                             32 << 20), 96 << 20))

    kern = functools.partial(chaos_vit_kernel, batch_tile=BT, s_pad=S_pad,
                             num_iterations=num_iterations, matmul_dtype=matmul_dtype)

    in_specs = ([pl.BlockSpec((BT * N, cpp_pad), lambda b, l: (b, 0))]
                + [_const_spec(w.shape) for w in weights]
                + [_layer_spec(w.shape) for w in layer_weights]
                + [_const_spec(w.shape) for w in head_weights]
                + [pl.BlockSpec(memory_space=pltpu.MemorySpace.SMEM)])

    out = pl.pallas_call(
        kern,
        out_shape=jax.ShapeDtypeStruct((B * S_pad, 128), jnp.float32),
        grid=(B // BT, L),                           # layer axis iterates fastest
        in_specs=in_specs,
        out_specs=pl.BlockSpec((BT * S_pad, 128), lambda b, l: (b, 0)),
        scratch_shapes=[pltpu.VMEM((BT * S_pad, D), jnp.float32),   # persistent activation
                        pltpu.VMEM((S_pad, D), jnp.float32)],       # per-batch ctx slab
        compiler_params=pltpu.CompilerParams(
            dimension_semantics=("parallel", "arbitrary"),
            vmem_limit_bytes=vmem_bytes),
    )(patches, *weights, *layer_weights, *head_weights, params["r"])

    # (B*S_pad, 128) -> (B, N, 1): drop cls row, pad rows and pad lanes.
    return out.reshape(B, S_pad, 128)[:, 1:1 + N, 0:1]


# --------------------------- deterministic params -----------------------------

def init_params(key, *, in_channels, patch_size, embedding_dim, mlp_size,
                num_heads, num_layers, num_patches, r_min=3.8, r_max=4.0):
    D, M, L, H = embedding_dim, mlp_size, num_layers, num_heads
    S = num_patches + 1
    cpp = in_channels * patch_size * patch_size
    cpp_pad = ((cpp + 127) // 128) * 128

    state = {"k": key}

    def nxt():
        state["k"], sub = jax.random.split(state["k"])
        return sub

    def dense(fi, fo):
        w = jax.random.normal(nxt(), (fi, fo), jnp.float32) / math.sqrt(fi)
        b = jax.random.normal(nxt(), (1, fo), jnp.float32) * 0.01
        return w, b

    p = {}
    pw, pb = dense(cpp, D)
    if cpp_pad != cpp:                      # zero-pad K dim: matmul result unchanged
        pw = jnp.concatenate([pw, jnp.zeros((cpp_pad - cpp, D), jnp.float32)], axis=0)
    p["patch_w"], p["patch_b"] = pw, pb
    p["cls"] = jax.random.normal(nxt(), (1, D), jnp.float32)
    p["pos"] = jax.random.normal(nxt(), (S, D), jnp.float32)

    names = ["ln1_g", "ln1_b", "wqkv", "bqkv", "wo", "bo",
             "ln2_g", "ln2_b", "w1", "b1", "w2", "b2", "r"]
    stacks = {k: [] for k in names}
    for _ in range(L):
        wq, bq = dense(D, D); wk, bk = dense(D, D); wv, bv = dense(D, D)
        stacks["wqkv"].append(jnp.concatenate([wq, wk, wv], axis=1))   # fused (D, 3D)
        stacks["bqkv"].append(jnp.concatenate([bq, bk, bv], axis=1))   # fused (1, 3D)
        w, b = dense(D, D); stacks["wo"].append(w); stacks["bo"].append(b)
        w, b = dense(D, M); stacks["w1"].append(w); stacks["b1"].append(b)
        w, b = dense(M, D); stacks["w2"].append(w); stacks["b2"].append(b)
        stacks["ln1_g"].append(jnp.ones((1, D), jnp.float32))
        stacks["ln1_b"].append(jnp.zeros((1, D), jnp.float32))
        stacks["ln2_g"].append(jnp.ones((1, D), jnp.float32))
        stacks["ln2_b"].append(jnp.zeros((1, D), jnp.float32))
        stacks["r"].append(jax.random.uniform(nxt(), (H,), jnp.float32)
                           * (r_max - r_min) + r_min)
    for k in names:
        p[k] = jnp.stack(stacks[k])                                    # leading layer dim

    hw, hb = dense(D, 1)
    p["head_ln_g"] = jnp.ones((1, D), jnp.float32)
    p["head_ln_b"] = jnp.zeros((1, D), jnp.float32)
    # lane-dense head: real weight/bias live in column 0, zeros elsewhere
    p["head_w"] = jnp.pad(hw, ((0, 0), (0, 127)))                      # (D, 128)
    p["head_b"] = jnp.pad(hb, ((0, 0), (0, 127)))                      # (1, 128)
    return p


# ---------------------------------- main --------------------------------------

if __name__ == "__main__":
    # Small config consistent with the module:
    #   img 32, patch 8 -> 16 patches, seq 17 (padded to 24), embed 32, 4 heads,
    #   mlp 64, 2 layers. batch 2 with batch_tile=1 -> grid (2, 2): a 2-step
    #   "parallel" batch axis (megacore) and a streamed "arbitrary" layer axis.
    B, C, IMG, P = 2, 3, 32, 8
    D, HEADS, MLP, LAYERS = 32, 4, 64, 2
    N = (IMG // P) ** 2

    key = jax.random.PRNGKey(0)
    kx, kp = jax.random.split(key)
    x = jax.random.normal(kx, (B, C, IMG, IMG), jnp.float32)
    params = init_params(kp, in_channels=C, patch_size=P, embedding_dim=D,
                         mlp_size=MLP, num_heads=HEADS, num_layers=LAYERS,
                         num_patches=N)

    fwd = jax.jit(functools.partial(chaos_vit_forward, patch_size=P,
                                    num_iterations=5, batch_tile=1))
    out = jax.block_until_ready(fwd(x, params))
    assert out.shape == (B, N, 1) and out.dtype == jnp.float32
    assert bool(jnp.all(jnp.isfinite(out)))
    print("KERNEL_OK")
</pallas_src>

<mosaic_0001>
module attributes {stable_mosaic.version = 11 : i64} {
  func.func @chaos_vit_kernel(%arg0: i32, %arg1: i32, %arg2: memref<16x256xf32, #tpu.memory_space<vmem>>, %arg3: memref<256x32xf32, #tpu.memory_space<vmem>>, %arg4: memref<1x32xf32, #tpu.memory_space<vmem>>, %arg5: memref<1x32xf32, #tpu.memory_space<vmem>>, %arg6: memref<17x32xf32, #tpu.memory_space<vmem>>, %arg7: memref<1x1x32xf32, #tpu.memory_space<vmem>>, %arg8: memref<1x1x32xf32, #tpu.memory_space<vmem>>, %arg9: memref<1x32x96xf32, #tpu.memory_space<vmem>>, %arg10: memref<1x1x96xf32, #tpu.memory_space<vmem>>, %arg11: memref<1x32x32xf32, #tpu.memory_space<vmem>>, %arg12: memref<1x1x32xf32, #tpu.memory_space<vmem>>, %arg13: memref<1x1x32xf32, #tpu.memory_space<vmem>>, %arg14: memref<1x1x32xf32, #tpu.memory_space<vmem>>, %arg15: memref<1x32x64xf32, #tpu.memory_space<vmem>>, %arg16: memref<1x1x64xf32, #tpu.memory_space<vmem>>, %arg17: memref<1x64x32xf32, #tpu.memory_space<vmem>>, %arg18: memref<1x1x32xf32, #tpu.memory_space<vmem>>, %arg19: memref<1x32xf32, #tpu.memory_space<vmem>>, %arg20: memref<1x32xf32, #tpu.memory_space<vmem>>, %arg21: memref<32x128xf32, #tpu.memory_space<vmem>>, %arg22: memref<1x128xf32, #tpu.memory_space<vmem>>, %arg23: memref<2x4xf32, #tpu.memory_space<smem>>, %arg24: memref<24x128xf32, #tpu.memory_space<vmem>>, %arg25: memref<24x32xf32, #tpu.memory_space<vmem>>, %arg26: memref<24x32xf32, #tpu.memory_space<vmem>>) attributes {dimension_semantics = [#tpu.dimension_semantics<parallel>, #tpu.dimension_semantics<arbitrary>], iteration_bounds = array<i64: 2, 2>, scalar_prefetch = 0 : i64, scratch_operands = 2 : i64, tpu.core_type = #tpu.core_type<tc>, window_params = [{transform_indices = @transform_0, window_bounds = array<i64: 16, 256>}, {pipeline_mode = #tpu.pipeline_mode<synchronous>, transform_indices = @transform_1, window_bounds = array<i64: 256, 32>}, {pipeline_mode = #tpu.pipeline_mode<synchronous>, transform_indices = @transform_2, window_bounds = array<i64: 1, 32>}, {pipeline_mode = #tpu.pipeline_mode<synchronous>, transform_indices = @transform_3, window_bounds = array<i64: 1, 32>}, {pipeline_mode = #tpu.pipeline_mode<synchronous>, transform_indices = @transform_4, window_bounds = array<i64: 17, 32>}, {transform_indices = @transform_5, window_bounds = array<i64: 1, 1, 32>}, {transform_indices = @transform_6, window_bounds = array<i64: 1, 1, 32>}, {transform_indices = @transform_7, window_bounds = array<i64: 1, 32, 96>}, {transform_indices = @transform_8, window_bounds = array<i64: 1, 1, 96>}, {transform_indices = @transform_9, window_bounds = array<i64: 1, 32, 32>}, {transform_indices = @transform_10, window_bounds = array<i64: 1, 1, 32>}, {transform_indices = @transform_11, window_bounds = array<i64: 1, 1, 32>}, {transform_indices = @transform_12, window_bounds = array<i64: 1, 1, 32>}, {transform_indices = @transform_13, window_bounds = array<i64: 1, 32, 64>}, {transform_indices = @transform_14, window_bounds = array<i64: 1, 1, 64>}, {transform_indices = @transform_15, window_bounds = array<i64: 1, 64, 32>}, {transform_indices = @transform_16, window_bounds = array<i64: 1, 1, 32>}, {pipeline_mode = #tpu.pipeline_mode<synchronous>, transform_indices = @transform_17, window_bounds = array<i64: 1, 32>}, {pipeline_mode = #tpu.pipeline_mode<synchronous>, transform_indices = @transform_18, window_bounds = array<i64: 1, 32>}, {pipeline_mode = #tpu.pipeline_mode<synchronous>, transform_indices = @transform_19, window_bounds = array<i64: 32, 128>}, {pipeline_mode = #tpu.pipeline_mode<synchronous>, transform_indices = @transform_20, window_bounds = array<i64: 1, 128>}, {transform_indices = @transform_21, window_bounds = array<i64: 2, 4>}, {transform_indices = @transform_22, window_bounds = array<i64: 24, 128>}]} {
    %c0_i32 = arith.constant 0 : i32
    %0 = arith.cmpi eq, %arg1, %c0_i32 : i32
    %1 = arith.extui %0 : i1 to i32
    %c0_i32_0 = arith.constant 0 : i32
    %2 = arith.cmpi ne, %1, %c0_i32_0 : i32
    scf.if %2 {
      %c0_120 = arith.constant 0 : index
      %c0_121 = arith.constant 0 : index
      %360 = vector.load %arg2[%c0_120, %c0_121] : memref<16x256xf32, #tpu.memory_space<vmem>>, vector<16x256xf32>
      %c0_122 = arith.constant 0 : index
      %c0_123 = arith.constant 0 : index
      %361 = vector.load %arg3[%c0_122, %c0_123] : memref<256x32xf32, #tpu.memory_space<vmem>>, vector<256x32xf32>
      %362 = arith.truncf %360 : vector<16x256xf32> to vector<16x256xbf16>
      %363 = arith.truncf %361 : vector<256x32xf32> to vector<256x32xbf16>
      %cst_124 = arith.constant dense<0.000000e+00> : vector<16x32xf32>
      %364 = tpu.matmul %362, %363, %cst_124 {dimension_numbers = #tpu.dot_dimension_numbers<[1], [0], [0], [1], [0, 0, 1, 1], [], []>} : vector<16x256xbf16>, vector<256x32xbf16>, vector<16x32xf32> -> vector<16x32xf32>
      %c0_125 = arith.constant 0 : index
      %c0_126 = arith.constant 0 : index
      %365 = vector.load %arg4[%c0_125, %c0_126] : memref<1x32xf32, #tpu.memory_space<vmem>>, vector<1x32xf32>
      %366 = vector.broadcast %365 : vector<1x32xf32> to vector<16x32xf32>
      %367 = arith.addf %364, %366 : vector<16x32xf32>
      %c0_127 = arith.constant 0 : index
      %c0_128 = arith.constant 0 : index
      %368 = vector.load %arg6[%c0_127, %c0_128] : memref<17x32xf32, #tpu.memory_space<vmem>>, vector<17x32xf32>
      %c0_129 = arith.constant 0 : index
      %c0_130 = arith.constant 0 : index
      %369 = vector.load %arg5[%c0_129, %c0_130] : memref<1x32xf32, #tpu.memory_space<vmem>>, vector<1x32xf32>
      %370 = vector.extract_strided_slice %368 {offsets = [0, 0], sizes = [1, 32], strides = [1, 1]} : vector<17x32xf32> to vector<1x32xf32>
      %371 = arith.addf %369, %370 : vector<1x32xf32>
      %372 = vector.extract_strided_slice %368 {offsets = [1, 0], sizes = [16, 32], strides = [1, 1]} : vector<17x32xf32> to vector<16x32xf32>
      %c0_131 = arith.constant 0 : index
      %c0_132 = arith.constant 0 : index
      %373 = vector.load %arg25[%c0_131, %c0_132] : memref<24x32xf32, #tpu.memory_space<vmem>>, vector<1x32xf32>
      tpu.vector_store %arg25[%c0_131, %c0_132], %371 {strides = array<i32>} : memref<24x32xf32, #tpu.memory_space<vmem>>, vector<1x32xf32>,
      %374 = arith.addf %367, %372 : vector<16x32xf32>
      %c1_133 = arith.constant 1 : index
      %c0_134 = arith.constant 0 : index
      %375 = vector.load %arg25[%c1_133, %c0_134] : memref<24x32xf32, #tpu.memory_space<vmem>>, vector<16x32xf32>
      tpu.vector_store %arg25[%c1_133, %c0_134], %374 {strides = array<i32>} : memref<24x32xf32, #tpu.memory_space<vmem>>, vector<16x32xf32>,
      %cst_135 = arith.constant 0.000000e+00 : f32
      %376 = vector.broadcast %cst_135 : f32 to vector<7x32xf32>
      %c17 = arith.constant 17 : index
      %c0_136 = arith.constant 0 : index
      %377 = vector.load %arg25[%c17, %c0_136] : memref<24x32xf32, #tpu.memory_space<vmem>>, vector<7x32xf32>
      tpu.vector_store %arg25[%c17, %c0_136], %376 {strides = array<i32>} : memref<24x32xf32, #tpu.memory_space<vmem>>, vector<7x32xf32>,
    } else {
    }
    %3 = tpu.iota {dimensions = array<i32: 1>} : vector<1x24xi32>
    %c17_i32 = arith.constant 17 : i32
    %4 = vector.broadcast %c17_i32 : i32 to vector<1x24xi32>
    %5 = arith.cmpi slt, %3, %4 : vector<1x24xi32>
    %cst = arith.constant 0.000000e+00 : f32
    %cst_1 = arith.constant -1.000000e+09 : f32
    %6 = vector.broadcast %cst : f32 to vector<1x24xf32>
    %7 = vector.broadcast %cst_1 : f32 to vector<1x24xf32>
    %8 = arith.select %5, %6, %7 : vector<1x24xi1>, vector<1x24xf32>
    %c0 = arith.constant 0 : index
    %c0_2 = arith.constant 0 : index
    %9 = vector.load %arg25[%c0, %c0_2] : memref<24x32xf32, #tpu.memory_space<vmem>>, vector<24x32xf32>
    %c0_3 = arith.constant 0 : index
    %c0_4 = arith.constant 0 : index
    %c0_5 = arith.constant 0 : index
    %10 = vector.load %arg7[%c0_3, %c0_4, %c0_5] : memref<1x1x32xf32, #tpu.memory_space<vmem>>, vector<1x1x32xf32>
    %11 = vector.shape_cast %10 : vector<1x1x32xf32> to vector<1x32xf32>
    %c0_6 = arith.constant 0 : index
    %c0_7 = arith.constant 0 : index
    %c0_8 = arith.constant 0 : index
    %12 = vector.load %arg8[%c0_6, %c0_7, %c0_8] : memref<1x1x32xf32, #tpu.memory_space<vmem>>, vector<1x1x32xf32>
    %13 = vector.shape_cast %12 : vector<1x1x32xf32> to vector<1x32xf32>
    %cst_9 = arith.constant dense<0.000000e+00> : vector<24xf32>
    %14 = vector.multi_reduction <add>, %9, %cst_9 [1] : vector<24x32xf32> to vector<24xf32>
    %15 = vector.shape_cast %14 : vector<24xf32> to vector<24x1xf32>
    %cst_10 = arith.constant 3.200000e+01 : f32
    %16 = vector.broadcast %cst_10 : f32 to vector<24x1xf32>
    %17 = arith.divf %15, %16 : vector<24x1xf32>
    %18 = vector.broadcast %17 : vector<24x1xf32> to vector<24x32xf32>
    %19 = arith.subf %9, %18 : vector<24x32xf32>
    %20 = arith.mulf %19, %19 : vector<24x32xf32>
    %cst_11 = arith.constant dense<0.000000e+00> : vector<24xf32>
    %21 = vector.multi_reduction <add>, %20, %cst_11 [1] : vector<24x32xf32> to vector<24xf32>
    %22 = vector.shape_cast %21 : vector<24xf32> to vector<24x1xf32>
    %cst_12 = arith.constant 3.200000e+01 : f32
    %23 = vector.broadcast %cst_12 : f32 to vector<24x1xf32>
    %24 = arith.divf %22, %23 : vector<24x1xf32>
    %25 = vector.broadcast %17 : vector<24x1xf32> to vector<24x32xf32>
    %26 = arith.subf %9, %25 : vector<24x32xf32>
    %cst_13 = arith.constant 9.99999974E-6 : f32
    %27 = vector.broadcast %cst_13 : f32 to vector<24x1xf32>
    %28 = arith.addf %24, %27 : vector<24x1xf32>
    %29 = math.rsqrt %28 : vector<24x1xf32>
    %30 = vector.broadcast %29 : vector<24x1xf32> to vector<24x32xf32>
    %31 = arith.mulf %26, %30 : vector<24x32xf32>
    %32 = vector.broadcast %11 : vector<1x32xf32> to vector<24x32xf32>
    %33 = arith.mulf %31, %32 : vector<24x32xf32>
    %34 = vector.broadcast %13 : vector<1x32xf32> to vector<24x32xf32>
    %35 = arith.addf %33, %34 : vector<24x32xf32>
    %c0_14 = arith.constant 0 : index
    %c0_15 = arith.constant 0 : index
    %c0_16 = arith.constant 0 : index
    %36 = vector.load %arg9[%c0_14, %c0_15, %c0_16] : memref<1x32x96xf32, #tpu.memory_space<vmem>>, vector<1x32x96xf32>
    %37 = vector.shape_cast %36 : vector<1x32x96xf32> to vector<32x96xf32>
    %38 = arith.truncf %35 : vector<24x32xf32> to vector<24x32xbf16>
    %39 = arith.truncf %37 : vector<32x96xf32> to vector<32x96xbf16>
    %cst_17 = arith.constant dense<0.000000e+00> : vector<24x96xf32>
    %40 = tpu.matmul %38, %39, %cst_17 {dimension_numbers = #tpu.dot_dimension_numbers<[1], [0], [0], [1], [0, 0, 1, 1], [], []>} : vector<24x32xbf16>, vector<32x96xbf16>, vector<24x96xf32> -> vector<24x96xf32>
    %c0_18 = arith.constant 0 : index
    %c0_19 = arith.constant 0 : index
    %c0_20 = arith.constant 0 : index
    %41 = vector.load %arg10[%c0_18, %c0_19, %c0_20] : memref<1x1x96xf32, #tpu.memory_space<vmem>>, vector<1x1x96xf32>
    %42 = vector.shape_cast %41 : vector<1x1x96xf32> to vector<1x96xf32>
    %43 = vector.broadcast %42 : vector<1x96xf32> to vector<24x96xf32>
    %44 = arith.addf %40, %43 : vector<24x96xf32>
    %c0_21 = arith.constant 0 : index
    %c0_22 = arith.constant 0 : index
    %c0_23 = arith.constant 0 : index
    %45 = vector.load %arg11[%c0_21, %c0_22, %c0_23] : memref<1x32x32xf32, #tpu.memory_space<vmem>>, vector<1x32x32xf32>
    %46 = vector.shape_cast %45 : vector<1x32x32xf32> to vector<32x32xf32>
    %47 = vector.extract_strided_slice %44 {offsets = [0, 0], sizes = [24, 8], strides = [1, 1]} : vector<24x96xf32> to vector<24x8xf32>
    %48 = vector.extract_strided_slice %44 {offsets = [0, 32], sizes = [24, 8], strides = [1, 1]} : vector<24x96xf32> to vector<24x8xf32>
    %49 = vector.extract_strided_slice %44 {offsets = [0, 64], sizes = [24, 8], strides = [1, 1]} : vector<24x96xf32> to vector<24x8xf32>
    %cst_24 = arith.constant dense<0.000000e+00> : vector<24x24xf32>
    %50 = tpu.matmul %47, %48, %cst_24 {dimension_numbers = #tpu.dot_dimension_numbers<[1], [1], [0], [0], [0, 0, 1, 0], [], []>} : vector<24x8xf32>, vector<24x8xf32>, vector<24x24xf32> -> vector<24x24xf32>
    %cst_25 = arith.constant 0.353553385 : f32
    %51 = vector.broadcast %cst_25 : f32 to vector<24x24xf32>
    %52 = arith.mulf %50, %51 : vector<24x24xf32>
    %53 = vector.broadcast %8 : vector<1x24xf32> to vector<24x24xf32>
    %54 = arith.addf %52, %53 : vector<24x24xf32>
    %cst_26 = arith.constant dense<0xFF800000> : vector<24xf32>
    %55 = vector.multi_reduction <maximumf>, %54, %cst_26 [1] : vector<24x24xf32> to vector<24xf32>
    %56 = vector.shape_cast %55 : vector<24xf32> to vector<24x1xf32>
    %57 = vector.broadcast %56 : vector<24x1xf32> to vector<24x24xf32>
    %58 = arith.subf %54, %57 : vector<24x24xf32>
    %59 = math.exp %58 : vector<24x24xf32>
    %cst_27 = arith.constant dense<0.000000e+00> : vector<24xf32>
    %60 = vector.multi_reduction <add>, %59, %cst_27 [1] : vector<24x24xf32> to vector<24xf32>
    %61 = vector.shape_cast %60 : vector<24xf32> to vector<24x1xf32>
    %62 = vector.broadcast %61 : vector<24x1xf32> to vector<24x24xf32>
    %63 = arith.divf %59, %62 : vector<24x24xf32>
    %64 = arith.index_cast %arg1 : i32 to index
    %c0_28 = arith.constant 0 : index
    %65 = memref.load %arg23[%64, %c0_28] : memref<2x4xf32, #tpu.memory_space<smem>>
    %66 = vector.broadcast %65 : f32 to vector<24x24xf32>
    %67 = arith.mulf %66, %63 : vector<24x24xf32>
    %cst_29 = arith.constant 1.000000e+00 : f32
    %68 = vector.broadcast %cst_29 : f32 to vector<24x24xf32>
    %69 = arith.subf %68, %63 : vector<24x24xf32>
    %70 = arith.mulf %67, %69 : vector<24x24xf32>
    %71 = vector.broadcast %65 : f32 to vector<24x24xf32>
    %72 = arith.mulf %71, %70 : vector<24x24xf32>
    %cst_30 = arith.constant 1.000000e+00 : f32
    %73 = vector.broadcast %cst_30 : f32 to vector<24x24xf32>
    %74 = arith.subf %73, %70 : vector<24x24xf32>
    %75 = arith.mulf %72, %74 : vector<24x24xf32>
    %76 = vector.broadcast %65 : f32 to vector<24x24xf32>
    %77 = arith.mulf %76, %75 : vector<24x24xf32>
    %cst_31 = arith.constant 1.000000e+00 : f32
    %78 = vector.broadcast %cst_31 : f32 to vector<24x24xf32>
    %79 = arith.subf %78, %75 : vector<24x24xf32>
    %80 = arith.mulf %77, %79 : vector<24x24xf32>
    %81 = vector.broadcast %65 : f32 to vector<24x24xf32>
    %82 = arith.mulf %81, %80 : vector<24x24xf32>
    %cst_32 = arith.constant 1.000000e+00 : f32
    %83 = vector.broadcast %cst_32 : f32 to vector<24x24xf32>
    %84 = arith.subf %83, %80 : vector<24x24xf32>
    %85 = arith.mulf %82, %84 : vector<24x24xf32>
    %86 = vector.broadcast %65 : f32 to vector<24x24xf32>
    %87 = arith.mulf %86, %85 : vector<24x24xf32>
    %cst_33 = arith.constant 1.000000e+00 : f32
    %88 = vector.broadcast %cst_33 : f32 to vector<24x24xf32>
    %89 = arith.subf %88, %85 : vector<24x24xf32>
    %90 = arith.mulf %87, %89 : vector<24x24xf32>
    %91 = vector.broadcast %8 : vector<1x24xf32> to vector<24x24xf32>
    %92 = arith.addf %90, %91 : vector<24x24xf32>
    %cst_34 = arith.constant dense<0xFF800000> : vector<24xf32>
    %93 = vector.multi_reduction <maximumf>, %92, %cst_34 [1] : vector<24x24xf32> to vector<24xf32>
    %94 = vector.shape_cast %93 : vector<24xf32> to vector<24x1xf32>
    %95 = vector.broadcast %94 : vector<24x1xf32> to vector<24x24xf32>
    %96 = arith.subf %92, %95 : vector<24x24xf32>
    %97 = math.exp %96 : vector<24x24xf32>
    %cst_35 = arith.constant dense<0.000000e+00> : vector<24xf32>
    %98 = vector.multi_reduction <add>, %97, %cst_35 [1] : vector<24x24xf32> to vector<24xf32>
    %99 = vector.shape_cast %98 : vector<24xf32> to vector<24x1xf32>
    %100 = tpu.reciprocal %99 {approx = true} : vector<24x1xf32> -> vector<24x1xf32>
    %101 = vector.broadcast %100 : vector<24x1xf32> to vector<24x24xf32>
    %102 = arith.mulf %97, %101 : vector<24x24xf32>
    %103 = arith.truncf %102 : vector<24x24xf32> to vector<24x24xbf16>
    %104 = arith.truncf %49 : vector<24x8xf32> to vector<24x8xbf16>
    %cst_36 = arith.constant dense<0.000000e+00> : vector<24x8xf32>
    %105 = tpu.matmul %103, %104, %cst_36 {dimension_numbers = #tpu.dot_dimension_numbers<[1], [0], [0], [1], [0, 0, 1, 1], [], []>} : vector<24x24xbf16>, vector<24x8xbf16>, vector<24x8xf32> -> vector<24x8xf32>
    %c0_37 = arith.constant 0 : index
    %c0_38 = arith.constant 0 : index
    %106 = vector.load %arg26[%c0_37, %c0_38] : memref<24x32xf32, #tpu.memory_space<vmem>>, vector<24x8xf32>
    tpu.vector_store %arg26[%c0_37, %c0_38], %105 {strides = array<i32>} : memref<24x32xf32, #tpu.memory_space<vmem>>, vector<24x8xf32>,
    %107 = vector.extract_strided_slice %44 {offsets = [0, 8], sizes = [24, 8], strides = [1, 1]} : vector<24x96xf32> to vector<24x8xf32>
    %108 = vector.extract_strided_slice %44 {offsets = [0, 40], sizes = [24, 8], strides = [1, 1]} : vector<24x96xf32> to vector<24x8xf32>
    %109 = vector.extract_strided_slice %44 {offsets = [0, 72], sizes = [24, 8], strides = [1, 1]} : vector<24x96xf32> to vector<24x8xf32>
    %cst_39 = arith.constant dense<0.000000e+00> : vector<24x24xf32>
    %110 = tpu.matmul %107, %108, %cst_39 {dimension_numbers = #tpu.dot_dimension_numbers<[1], [1], [0], [0], [0, 0, 1, 0], [], []>} : vector<24x8xf32>, vector<24x8xf32>, vector<24x24xf32> -> vector<24x24xf32>
    %cst_40 = arith.constant 0.353553385 : f32
    %111 = vector.broadcast %cst_40 : f32 to vector<24x24xf32>
    %112 = arith.mulf %110, %111 : vector<24x24xf32>
    %113 = vector.broadcast %8 : vector<1x24xf32> to vector<24x24xf32>
    %114 = arith.addf %112, %113 : vector<24x24xf32>
    %cst_41 = arith.constant dense<0xFF800000> : vector<24xf32>
    %115 = vector.multi_reduction <maximumf>, %114, %cst_41 [1] : vector<24x24xf32> to vector<24xf32>
    %116 = vector.shape_cast %115 : vector<24xf32> to vector<24x1xf32>
    %117 = vector.broadcast %116 : vector<24x1xf32> to vector<24x24xf32>
    %118 = arith.subf %114, %117 : vector<24x24xf32>
    %119 = math.exp %118 : vector<24x24xf32>
    %cst_42 = arith.constant dense<0.000000e+00> : vector<24xf32>
    %120 = vector.multi_reduction <add>, %119, %cst_42 [1] : vector<24x24xf32> to vector<24xf32>
    %121 = vector.shape_cast %120 : vector<24xf32> to vector<24x1xf32>
    %122 = vector.broadcast %121 : vector<24x1xf32> to vector<24x24xf32>
    %123 = arith.divf %119, %122 : vector<24x24xf32>
    %124 = arith.index_cast %arg1 : i32 to index
    %c1 = arith.constant 1 : index
    %125 = memref.load %arg23[%124, %c1] : memref<2x4xf32, #tpu.memory_space<smem>>
    %126 = vector.broadcast %125 : f32 to vector<24x24xf32>
    %127 = arith.mulf %126, %123 : vector<24x24xf32>
    %cst_43 = arith.constant 1.000000e+00 : f32
    %128 = vector.broadcast %cst_43 : f32 to vector<24x24xf32>
    %129 = arith.subf %128, %123 : vector<24x24xf32>
    %130 = arith.mulf %127, %129 : vector<24x24xf32>
    %131 = vector.broadcast %125 : f32 to vector<24x24xf32>
    %132 = arith.mulf %131, %130 : vector<24x24xf32>
    %cst_44 = arith.constant 1.000000e+00 : f32
    %133 = vector.broadcast %cst_44 : f32 to vector<24x24xf32>
    %134 = arith.subf %133, %130 : vector<24x24xf32>
    %135 = arith.mulf %132, %134 : vector<24x24xf32>
    %136 = vector.broadcast %125 : f32 to vector<24x24xf32>
    %137 = arith.mulf %136, %135 : vector<24x24xf32>
    %cst_45 = arith.constant 1.000000e+00 : f32
    %138 = vector.broadcast %cst_45 : f32 to vector<24x24xf32>
    %139 = arith.subf %138, %135 : vector<24x24xf32>
    %140 = arith.mulf %137, %139 : vector<24x24xf32>
    %141 = vector.broadcast %125 : f32 to vector<24x24xf32>
    %142 = arith.mulf %141, %140 : vector<24x24xf32>
    %cst_46 = arith.constant 1.000000e+00 : f32
    %143 = vector.broadcast %cst_46 : f32 to vector<24x24xf32>
    %144 = arith.subf %143, %140 : vector<24x24xf32>
    %145 = arith.mulf %142, %144 : vector<24x24xf32>
    %146 = vector.broadcast %125 : f32 to vector<24x24xf32>
    %147 = arith.mulf %146, %145 : vector<24x24xf32>
    %cst_47 = arith.constant 1.000000e+00 : f32
    %148 = vector.broadcast %cst_47 : f32 to vector<24x24xf32>
    %149 = arith.subf %148, %145 : vector<24x24xf32>
    %150 = arith.mulf %147, %149 : vector<24x24xf32>
    %151 = vector.broadcast %8 : vector<1x24xf32> to vector<24x24xf32>
    %152 = arith.addf %150, %151 : vector<24x24xf32>
    %cst_48 = arith.constant dense<0xFF800000> : vector<24xf32>
    %153 = vector.multi_reduction <maximumf>, %152, %cst_48 [1] : vector<24x24xf32> to vector<24xf32>
    %154 = vector.shape_cast %153 : vector<24xf32> to vector<24x1xf32>
    %155 = vector.broadcast %154 : vector<24x1xf32> to vector<24x24xf32>
    %156 = arith.subf %152, %155 : vector<24x24xf32>
    %157 = math.exp %156 : vector<24x24xf32>
    %cst_49 = arith.constant dense<0.000000e+00> : vector<24xf32>
    %158 = vector.multi_reduction <add>, %157, %cst_49 [1] : vector<24x24xf32> to vector<24xf32>
    %159 = vector.shape_cast %158 : vector<24xf32> to vector<24x1xf32>
    %160 = tpu.reciprocal %159 {approx = true} : vector<24x1xf32> -> vector<24x1xf32>
    %161 = vector.broadcast %160 : vector<24x1xf32> to vector<24x24xf32>
    %162 = arith.mulf %157, %161 : vector<24x24xf32>
    %163 = arith.truncf %162 : vector<24x24xf32> to vector<24x24xbf16>
    %164 = arith.truncf %109 : vector<24x8xf32> to vector<24x8xbf16>
    %cst_50 = arith.constant dense<0.000000e+00> : vector<24x8xf32>
    %165 = tpu.matmul %163, %164, %cst_50 {dimension_numbers = #tpu.dot_dimension_numbers<[1], [0], [0], [1], [0, 0, 1, 1], [], []>} : vector<24x24xbf16>, vector<24x8xbf16>, vector<24x8xf32> -> vector<24x8xf32>
    %c0_51 = arith.constant 0 : index
    %c8 = arith.constant 8 : index
    %166 = vector.load %arg26[%c0_51, %c8] : memref<24x32xf32, #tpu.memory_space<vmem>>, vector<24x8xf32>
    tpu.vector_store %arg26[%c0_51, %c8], %165 {strides = array<i32>} : memref<24x32xf32, #tpu.memory_space<vmem>>, vector<24x8xf32>,
    %167 = vector.extract_strided_slice %44 {offsets = [0, 16], sizes = [24, 8], strides = [1, 1]} : vector<24x96xf32> to vector<24x8xf32>
    %168 = vector.extract_strided_slice %44 {offsets = [0, 48], sizes = [24, 8], strides = [1, 1]} : vector<24x96xf32> to vector<24x8xf32>
    %169 = vector.extract_strided_slice %44 {offsets = [0, 80], sizes = [24, 8], strides = [1, 1]} : vector<24x96xf32> to vector<24x8xf32>
    %cst_52 = arith.constant dense<0.000000e+00> : vector<24x24xf32>
    %170 = tpu.matmul %167, %168, %cst_52 {dimension_numbers = #tpu.dot_dimension_numbers<[1], [1], [0], [0], [0, 0, 1, 0], [], []>} : vector<24x8xf32>, vector<24x8xf32>, vector<24x24xf32> -> vector<24x24xf32>
    %cst_53 = arith.constant 0.353553385 : f32
    %171 = vector.broadcast %cst_53 : f32 to vector<24x24xf32>
    %172 = arith.mulf %170, %171 : vector<24x24xf32>
    %173 = vector.broadcast %8 : vector<1x24xf32> to vector<24x24xf32>
    %174 = arith.addf %172, %173 : vector<24x24xf32>
    %cst_54 = arith.constant dense<0xFF800000> : vector<24xf32>
    %175 = vector.multi_reduction <maximumf>, %174, %cst_54 [1] : vector<24x24xf32> to vector<24xf32>
    %176 = vector.shape_cast %175 : vector<24xf32> to vector<24x1xf32>
    %177 = vector.broadcast %176 : vector<24x1xf32> to vector<24x24xf32>
    %178 = arith.subf %174, %177 : vector<24x24xf32>
    %179 = math.exp %178 : vector<24x24xf32>
    %cst_55 = arith.constant dense<0.000000e+00> : vector<24xf32>
    %180 = vector.multi_reduction <add>, %179, %cst_55 [1] : vector<24x24xf32> to vector<24xf32>
    %181 = vector.shape_cast %180 : vector<24xf32> to vector<24x1xf32>
    %182 = vector.broadcast %181 : vector<24x1xf32> to vector<24x24xf32>
    %183 = arith.divf %179, %182 : vector<24x24xf32>
    %184 = arith.index_cast %arg1 : i32 to index
    %c2 = arith.constant 2 : index
    %185 = memref.load %arg23[%184, %c2] : memref<2x4xf32, #tpu.memory_space<smem>>
    %186 = vector.broadcast %185 : f32 to vector<24x24xf32>
    %187 = arith.mulf %186, %183 : vector<24x24xf32>
    %cst_56 = arith.constant 1.000000e+00 : f32
    %188 = vector.broadcast %cst_56 : f32 to vector<24x24xf32>
    %189 = arith.subf %188, %183 : vector<24x24xf32>
    %190 = arith.mulf %187, %189 : vector<24x24xf32>
    %191 = vector.broadcast %185 : f32 to vector<24x24xf32>
    %192 = arith.mulf %191, %190 : vector<24x24xf32>
    %cst_57 = arith.constant 1.000000e+00 : f32
    %193 = vector.broadcast %cst_57 : f32 to vector<24x24xf32>
    %194 = arith.subf %193, %190 : vector<24x24xf32>
    %195 = arith.mulf %192, %194 : vector<24x24xf32>
    %196 = vector.broadcast %185 : f32 to vector<24x24xf32>
    %197 = arith.mulf %196, %195 : vector<24x24xf32>
    %cst_58 = arith.constant 1.000000e+00 : f32
    %198 = vector.broadcast %cst_58 : f32 to vector<24x24xf32>
    %199 = arith.subf %198, %195 : vector<24x24xf32>
    %200 = arith.mulf %197, %199 : vector<24x24xf32>
    %201 = vector.broadcast %185 : f32 to vector<24x24xf32>
    %202 = arith.mulf %201, %200 : vector<24x24xf32>
    %cst_59 = arith.constant 1.000000e+00 : f32
    %203 = vector.broadcast %cst_59 : f32 to vector<24x24xf32>
    %204 = arith.subf %203, %200 : vector<24x24xf32>
    %205 = arith.mulf %202, %204 : vector<24x24xf32>
    %206 = vector.broadcast %185 : f32 to vector<24x24xf32>
    %207 = arith.mulf %206, %205 : vector<24x24xf32>
    %cst_60 = arith.constant 1.000000e+00 : f32
    %208 = vector.broadcast %cst_60 : f32 to vector<24x24xf32>
    %209 = arith.subf %208, %205 : vector<24x24xf32>
    %210 = arith.mulf %207, %209 : vector<24x24xf32>
    %211 = vector.broadcast %8 : vector<1x24xf32> to vector<24x24xf32>
    %212 = arith.addf %210, %211 : vector<24x24xf32>
    %cst_61 = arith.constant dense<0xFF800000> : vector<24xf32>
    %213 = vector.multi_reduction <maximumf>, %212, %cst_61 [1] : vector<24x24xf32> to vector<24xf32>
    %214 = vector.shape_cast %213 : vector<24xf32> to vector<24x1xf32>
    %215 = vector.broadcast %214 : vector<24x1xf32> to vector<24x24xf32>
    %216 = arith.subf %212, %215 : vector<24x24xf32>
    %217 = math.exp %216 : vector<24x24xf32>
    %cst_62 = arith.constant dense<0.000000e+00> : vector<24xf32>
    %218 = vector.multi_reduction <add>, %217, %cst_62 [1] : vector<24x24xf32> to vector<24xf32>
    %219 = vector.shape_cast %218 : vector<24xf32> to vector<24x1xf32>
    %220 = tpu.reciprocal %219 {approx = true} : vector<24x1xf32> -> vector<24x1xf32>
    %221 = vector.broadcast %220 : vector<24x1xf32> to vector<24x24xf32>
    %222 = arith.mulf %217, %221 : vector<24x24xf32>
    %223 = arith.truncf %222 : vector<24x24xf32> to vector<24x24xbf16>
    %224 = arith.truncf %169 : vector<24x8xf32> to vector<24x8xbf16>
    %cst_63 = arith.constant dense<0.000000e+00> : vector<24x8xf32>
    %225 = tpu.matmul %223, %224, %cst_63 {dimension_numbers = #tpu.dot_dimension_numbers<[1], [0], [0], [1], [0, 0, 1, 1], [], []>} : vector<24x24xbf16>, vector<24x8xbf16>, vector<24x8xf32> -> vector<24x8xf32>
    %c0_64 = arith.constant 0 : index
    %c16 = arith.constant 16 : index
    %226 = vector.load %arg26[%c0_64, %c16] : memref<24x32xf32, #tpu.memory_space<vmem>>, vector<24x8xf32>
    tpu.vector_store %arg26[%c0_64, %c16], %225 {strides = array<i32>} : memref<24x32xf32, #tpu.memory_space<vmem>>, vector<24x8xf32>,
    %227 = vector.extract_strided_slice %44 {offsets = [0, 24], sizes = [24, 8], strides = [1, 1]} : vector<24x96xf32> to vector<24x8xf32>
    %228 = vector.extract_strided_slice %44 {offsets = [0, 56], sizes = [24, 8], strides = [1, 1]} : vector<24x96xf32> to vector<24x8xf32>
    %229 = vector.extract_strided_slice %44 {offsets = [0, 88], sizes = [24, 8], strides = [1, 1]} : vector<24x96xf32> to vector<24x8xf32>
    %cst_65 = arith.constant dense<0.000000e+00> : vector<24x24xf32>
    %230 = tpu.matmul %227, %228, %cst_65 {dimension_numbers = #tpu.dot_dimension_numbers<[1], [1], [0], [0], [0, 0, 1, 0], [], []>} : vector<24x8xf32>, vector<24x8xf32>, vector<24x24xf32> -> vector<24x24xf32>
    %cst_66 = arith.constant 0.353553385 : f32
    %231 = vector.broadcast %cst_66 : f32 to vector<24x24xf32>
    %232 = arith.mulf %230, %231 : vector<24x24xf32>
    %233 = vector.broadcast %8 : vector<1x24xf32> to vector<24x24xf32>
    %234 = arith.addf %232, %233 : vector<24x24xf32>
    %cst_67 = arith.constant dense<0xFF800000> : vector<24xf32>
    %235 = vector.multi_reduction <maximumf>, %234, %cst_67 [1] : vector<24x24xf32> to vector<24xf32>
    %236 = vector.shape_cast %235 : vector<24xf32> to vector<24x1xf32>
    %237 = vector.broadcast %236 : vector<24x1xf32> to vector<24x24xf32>
    %238 = arith.subf %234, %237 : vector<24x24xf32>
    %239 = math.exp %238 : vector<24x24xf32>
    %cst_68 = arith.constant dense<0.000000e+00> : vector<24xf32>
    %240 = vector.multi_reduction <add>, %239, %cst_68 [1] : vector<24x24xf32> to vector<24xf32>
    %241 = vector.shape_cast %240 : vector<24xf32> to vector<24x1xf32>
    %242 = vector.broadcast %241 : vector<24x1xf32> to vector<24x24xf32>
    %243 = arith.divf %239, %242 : vector<24x24xf32>
    %244 = arith.index_cast %arg1 : i32 to index
    %c3 = arith.constant 3 : index
    %245 = memref.load %arg23[%244, %c3] : memref<2x4xf32, #tpu.memory_space<smem>>
    %246 = vector.broadcast %245 : f32 to vector<24x24xf32>
    %247 = arith.mulf %246, %243 : vector<24x24xf32>
    %cst_69 = arith.constant 1.000000e+00 : f32
    %248 = vector.broadcast %cst_69 : f32 to vector<24x24xf32>
    %249 = arith.subf %248, %243 : vector<24x24xf32>
    %250 = arith.mulf %247, %249 : vector<24x24xf32>
    %251 = vector.broadcast %245 : f32 to vector<24x24xf32>
    %252 = arith.mulf %251, %250 : vector<24x24xf32>
    %cst_70 = arith.constant 1.000000e+00 : f32
    %253 = vector.broadcast %cst_70 : f32 to vector<24x24xf32>
    %254 = arith.subf %253, %250 : vector<24x24xf32>
    %255 = arith.mulf %252, %254 : vector<24x24xf32>
    %256 = vector.broadcast %245 : f32 to vector<24x24xf32>
    %257 = arith.mulf %256, %255 : vector<24x24xf32>
    %cst_71 = arith.constant 1.000000e+00 : f32
    %258 = vector.broadcast %cst_71 : f32 to vector<24x24xf32>
    %259 = arith.subf %258, %255 : vector<24x24xf32>
    %260 = arith.mulf %257, %259 : vector<24x24xf32>
    %261 = vector.broadcast %245 : f32 to vector<24x24xf32>
    %262 = arith.mulf %261, %260 : vector<24x24xf32>
    %cst_72 = arith.constant 1.000000e+00 : f32
    %263 = vector.broadcast %cst_72 : f32 to vector<24x24xf32>
    %264 = arith.subf %263, %260 : vector<24x24xf32>
    %265 = arith.mulf %262, %264 : vector<24x24xf32>
    %266 = vector.broadcast %245 : f32 to vector<24x24xf32>
    %267 = arith.mulf %266, %265 : vector<24x24xf32>
    %cst_73 = arith.constant 1.000000e+00 : f32
    %268 = vector.broadcast %cst_73 : f32 to vector<24x24xf32>
    %269 = arith.subf %268, %265 : vector<24x24xf32>
    %270 = arith.mulf %267, %269 : vector<24x24xf32>
    %271 = vector.broadcast %8 : vector<1x24xf32> to vector<24x24xf32>
    %272 = arith.addf %270, %271 : vector<24x24xf32>
    %cst_74 = arith.constant dense<0xFF800000> : vector<24xf32>
    %273 = vector.multi_reduction <maximumf>, %272, %cst_74 [1] : vector<24x24xf32> to vector<24xf32>
    %274 = vector.shape_cast %273 : vector<24xf32> to vector<24x1xf32>
    %275 = vector.broadcast %274 : vector<24x1xf32> to vector<24x24xf32>
    %276 = arith.subf %272, %275 : vector<24x24xf32>
    %277 = math.exp %276 : vector<24x24xf32>
    %cst_75 = arith.constant dense<0.000000e+00> : vector<24xf32>
    %278 = vector.multi_reduction <add>, %277, %cst_75 [1] : vector<24x24xf32> to vector<24xf32>
    %279 = vector.shape_cast %278 : vector<24xf32> to vector<24x1xf32>
    %280 = tpu.reciprocal %279 {approx = true} : vector<24x1xf32> -> vector<24x1xf32>
    %281 = vector.broadcast %280 : vector<24x1xf32> to vector<24x24xf32>
    %282 = arith.mulf %277, %281 : vector<24x24xf32>
    %283 = arith.truncf %282 : vector<24x24xf32> to vector<24x24xbf16>
    %284 = arith.truncf %229 : vector<24x8xf32> to vector<24x8xbf16>
    %cst_76 = arith.constant dense<0.000000e+00> : vector<24x8xf32>
    %285 = tpu.matmul %283, %284, %cst_76 {dimension_numbers = #tpu.dot_dimension_numbers<[1], [0], [0], [1], [0, 0, 1, 1], [], []>} : vector<24x24xbf16>, vector<24x8xbf16>, vector<24x8xf32> -> vector<24x8xf32>
    %c0_77 = arith.constant 0 : index
    %c24 = arith.constant 24 : index
    %286 = vector.load %arg26[%c0_77, %c24] : memref<24x32xf32, #tpu.memory_space<vmem>>, vector<24x8xf32>
    tpu.vector_store %arg26[%c0_77, %c24], %285 {strides = array<i32>} : memref<24x32xf32, #tpu.memory_space<vmem>>, vector<24x8xf32>,
    %c0_78 = arith.constant 0 : index
    %c0_79 = arith.constant 0 : index
    %287 = vector.load %arg26[%c0_78, %c0_79] : memref<24x32xf32, #tpu.memory_space<vmem>>, vector<24x32xf32>
    %288 = arith.truncf %287 : vector<24x32xf32> to vector<24x32xbf16>
    %289 = arith.truncf %46 : vector<32x32xf32> to vector<32x32xbf16>
    %cst_80 = arith.constant dense<0.000000e+00> : vector<24x32xf32>
    %290 = tpu.matmul %288, %289, %cst_80 {dimension_numbers = #tpu.dot_dimension_numbers<[1], [0], [0], [1], [0, 0, 1, 1], [], []>} : vector<24x32xbf16>, vector<32x32xbf16>, vector<24x32xf32> -> vector<24x32xf32>
    %c0_81 = arith.constant 0 : index
    %c0_82 = arith.constant 0 : index
    %c0_83 = arith.constant 0 : index
    %291 = vector.load %arg12[%c0_81, %c0_82, %c0_83] : memref<1x1x32xf32, #tpu.memory_space<vmem>>, vector<1x1x32xf32>
    %292 = vector.shape_cast %291 : vector<1x1x32xf32> to vector<1x32xf32>
    %293 = vector.broadcast %292 : vector<1x32xf32> to vector<24x32xf32>
    %294 = arith.addf %290, %293 : vector<24x32xf32>
    %295 = arith.addf %9, %294 : vector<24x32xf32>
    %c0_84 = arith.constant 0 : index
    %c0_85 = arith.constant 0 : index
    %296 = vector.load %arg25[%c0_84, %c0_85] : memref<24x32xf32, #tpu.memory_space<vmem>>, vector<24x32xf32>
    tpu.vector_store %arg25[%c0_84, %c0_85], %295 {strides = array<i32>} : memref<24x32xf32, #tpu.memory_space<vmem>>, vector<24x32xf32>,
    %c0_86 = arith.constant 0 : index
    %c0_87 = arith.constant 0 : index
    %297 = vector.load %arg25[%c0_86, %c0_87] : memref<24x32xf32, #tpu.memory_space<vmem>>, vector<24x32xf32>
    %c0_88 = arith.constant 0 : index
    %c0_89 = arith.constant 0 : index
    %c0_90 = arith.constant 0 : index
    %298 = vector.load %arg13[%c0_88, %c0_89, %c0_90] : memref<1x1x32xf32, #tpu.memory_space<vmem>>, vector<1x1x32xf32>
    %299 = vector.shape_cast %298 : vector<1x1x32xf32> to vector<1x32xf32>
    %c0_91 = arith.constant 0 : index
    %c0_92 = arith.constant 0 : index
    %c0_93 = arith.constant 0 : index
    %300 = vector.load %arg14[%c0_91, %c0_92, %c0_93] : memref<1x1x32xf32, #tpu.memory_space<vmem>>, vector<1x1x32xf32>
    %301 = vector.shape_cast %300 : vector<1x1x32xf32> to vector<1x32xf32>
    %cst_94 = arith.constant dense<0.000000e+00> : vector<24xf32>
    %302 = vector.multi_reduction <add>, %297, %cst_94 [1] : vector<24x32xf32> to vector<24xf32>
    %303 = vector.shape_cast %302 : vector<24xf32> to vector<24x1xf32>
    %cst_95 = arith.constant 3.200000e+01 : f32
    %304 = vector.broadcast %cst_95 : f32 to vector<24x1xf32>
    %305 = arith.divf %303, %304 : vector<24x1xf32>
    %306 = vector.broadcast %305 : vector<24x1xf32> to vector<24x32xf32>
    %307 = arith.subf %297, %306 : vector<24x32xf32>
    %308 = arith.mulf %307, %307 : vector<24x32xf32>
    %cst_96 = arith.constant dense<0.000000e+00> : vector<24xf32>
    %309 = vector.multi_reduction <add>, %308, %cst_96 [1] : vector<24x32xf32> to vector<24xf32>
    %310 = vector.shape_cast %309 : vector<24xf32> to vector<24x1xf32>
    %cst_97 = arith.constant 3.200000e+01 : f32
    %311 = vector.broadcast %cst_97 : f32 to vector<24x1xf32>
    %312 = arith.divf %310, %311 : vector<24x1xf32>
    %313 = vector.broadcast %305 : vector<24x1xf32> to vector<24x32xf32>
    %314 = arith.subf %297, %313 : vector<24x32xf32>
    %cst_98 = arith.constant 9.99999974E-6 : f32
    %315 = vector.broadcast %cst_98 : f32 to vector<24x1xf32>
    %316 = arith.addf %312, %315 : vector<24x1xf32>
    %317 = math.rsqrt %316 : vector<24x1xf32>
    %318 = vector.broadcast %317 : vector<24x1xf32> to vector<24x32xf32>
    %319 = arith.mulf %314, %318 : vector<24x32xf32>
    %320 = vector.broadcast %299 : vector<1x32xf32> to vector<24x32xf32>
    %321 = arith.mulf %319, %320 : vector<24x32xf32>
    %322 = vector.broadcast %301 : vector<1x32xf32> to vector<24x32xf32>
    %323 = arith.addf %321, %322 : vector<24x32xf32>
    %c0_99 = arith.constant 0 : index
    %c0_100 = arith.constant 0 : index
    %c0_101 = arith.constant 0 : index
    %324 = vector.load %arg15[%c0_99, %c0_100, %c0_101] : memref<1x32x64xf32, #tpu.memory_space<vmem>>, vector<1x32x64xf32>
    %325 = vector.shape_cast %324 : vector<1x32x64xf32> to vector<32x64xf32>
    %326 = arith.truncf %323 : vector<24x32xf32> to vector<24x32xbf16>
    %327 = arith.truncf %325 : vector<32x64xf32> to vector<32x64xbf16>
    %cst_102 = arith.constant dense<0.000000e+00> : vector<24x64xf32>
    %328 = tpu.matmul %326, %327, %cst_102 {dimension_numbers = #tpu.dot_dimension_numbers<[1], [0], [0], [1], [0, 0, 1, 1], [], []>} : vector<24x32xbf16>, vector<32x64xbf16>, vector<24x64xf32> -> vector<24x64xf32>
    %c0_103 = arith.constant 0 : index
    %c0_104 = arith.constant 0 : index
    %c0_105 = arith.constant 0 : index
    %329 = vector.load %arg16[%c0_103, %c0_104, %c0_105] : memref<1x1x64xf32, #tpu.memory_space<vmem>>, vector<1x1x64xf32>
    %330 = vector.shape_cast %329 : vector<1x1x64xf32> to vector<1x64xf32>
    %331 = vector.broadcast %330 : vector<1x64xf32> to vector<24x64xf32>
    %332 = arith.addf %328, %331 : vector<24x64xf32>
    %cst_106 = arith.constant 5.000000e-01 : f32
    %333 = vector.broadcast %cst_106 : f32 to vector<24x64xf32>
    %334 = arith.mulf %333, %332 : vector<24x64xf32>
    %cst_107 = arith.constant 4.471500e-02 : f32
    %335 = vector.broadcast %cst_107 : f32 to vector<24x64xf32>
    %336 = arith.mulf %335, %332 : vector<24x64xf32>
    %337 = arith.mulf %336, %332 : vector<24x64xf32>
    %338 = arith.mulf %337, %332 : vector<24x64xf32>
    %339 = arith.addf %332, %338 : vector<24x64xf32>
    %cst_108 = arith.constant 0.797884583 : f32
    %340 = vector.broadcast %cst_108 : f32 to vector<24x64xf32>
    %341 = arith.mulf %340, %339 : vector<24x64xf32>
    %342 = math.tanh %341 : vector<24x64xf32>
    %cst_109 = arith.constant 1.000000e+00 : f32
    %343 = vector.broadcast %cst_109 : f32 to vector<24x64xf32>
    %344 = arith.addf %343, %342 : vector<24x64xf32>
    %345 = arith.mulf %334, %344 : vector<24x64xf32>
    %c0_110 = arith.constant 0 : index
    %c0_111 = arith.constant 0 : index
    %c0_112 = arith.constant 0 : index
    %346 = vector.load %arg17[%c0_110, %c0_111, %c0_112] : memref<1x64x32xf32, #tpu.memory_space<vmem>>, vector<1x64x32xf32>
    %347 = vector.shape_cast %346 : vector<1x64x32xf32> to vector<64x32xf32>
    %348 = arith.truncf %345 : vector<24x64xf32> to vector<24x64xbf16>
    %349 = arith.truncf %347 : vector<64x32xf32> to vector<64x32xbf16>
    %cst_113 = arith.constant dense<0.000000e+00> : vector<24x32xf32>
    %350 = tpu.matmul %348, %349, %cst_113 {dimension_numbers = #tpu.dot_dimension_numbers<[1], [0], [0], [1], [0, 0, 1, 1], [], []>} : vector<24x64xbf16>, vector<64x32xbf16>, vector<24x32xf32> -> vector<24x32xf32>
    %351 = arith.addf %297, %350 : vector<24x32xf32>
    %c0_114 = arith.constant 0 : index
    %c0_115 = arith.constant 0 : index
    %c0_116 = arith.constant 0 : index
    %352 = vector.load %arg18[%c0_114, %c0_115, %c0_116] : memref<1x1x32xf32, #tpu.memory_space<vmem>>, vector<1x1x32xf32>
    %353 = vector.shape_cast %352 : vector<1x1x32xf32> to vector<1x32xf32>
    %354 = vector.broadcast %353 : vector<1x32xf32> to vector<24x32xf32>
    %355 = arith.addf %351, %354 : vector<24x32xf32>
    %c0_117 = arith.constant 0 : index
    %c0_118 = arith.constant 0 : index
    %356 = vector.load %arg25[%c0_117, %c0_118] : memref<24x32xf32, #tpu.memory_space<vmem>>, vector<24x32xf32>
    tpu.vector_store %arg25[%c0_117, %c0_118], %355 {strides = array<i32>} : memref<24x32xf32, #tpu.memory_space<vmem>>, vector<24x32xf32>,
    %c1_i32 = arith.constant 1 : i32
    %357 = arith.cmpi eq, %arg1, %c1_i32 : i32
    %358 = arith.extui %357 : i1 to i32
    %c0_i32_119 = arith.constant 0 : i32
    %359 = arith.cmpi ne, %358, %c0_i32_119 : i32
    scf.if %359 {
      %c0_120 = arith.constant 0 : index
      %c0_121 = arith.constant 0 : index
      %360 = vector.load %arg25[%c0_120, %c0_121] : memref<24x32xf32, #tpu.memory_space<vmem>>, vector<24x32xf32>
      %c0_122 = arith.constant 0 : index
      %c0_123 = arith.constant 0 : index
      %361 = vector.load %arg19[%c0_122, %c0_123] : memref<1x32xf32, #tpu.memory_space<vmem>>, vector<1x32xf32>
      %c0_124 = arith.constant 0 : index
      %c0_125 = arith.constant 0 : index
      %362 = vector.load %arg20[%c0_124, %c0_125] : memref<1x32xf32, #tpu.memory_space<vmem>>, vector<1x32xf32>
      %cst_126 = arith.constant dense<0.000000e+00> : vector<24xf32>
      %363 = vector.multi_reduction <add>, %360, %cst_126 [1] : vector<24x32xf32> to vector<24xf32>
      %364 = vector.shape_cast %363 : vector<24xf32> to vector<24x1xf32>
      %cst_127 = arith.constant 3.200000e+01 : f32
      %365 = vector.broadcast %cst_127 : f32 to vector<24x1xf32>
      %366 = arith.divf %364, %365 : vector<24x1xf32>
      %367 = vector.broadcast %366 : vector<24x1xf32> to vector<24x32xf32>
      %368 = arith.subf %360, %367 : vector<24x32xf32>
      %369 = arith.mulf %368, %368 : vector<24x32xf32>
      %cst_128 = arith.constant dense<0.000000e+00> : vector<24xf32>
      %370 = vector.multi_reduction <add>, %369, %cst_128 [1] : vector<24x32xf32> to vector<24xf32>
      %371 = vector.shape_cast %370 : vector<24xf32> to vector<24x1xf32>
      %cst_129 = arith.constant 3.200000e+01 : f32
      %372 = vector.broadcast %cst_129 : f32 to vector<24x1xf32>
      %373 = arith.divf %371, %372 : vector<24x1xf32>
      %374 = vector.broadcast %366 : vector<24x1xf32> to vector<24x32xf32>
      %375 = arith.subf %360, %374 : vector<24x32xf32>
      %cst_130 = arith.constant 9.99999974E-6 : f32
      %376 = vector.broadcast %cst_130 : f32 to vector<24x1xf32>
      %377 = arith.addf %373, %376 : vector<24x1xf32>
      %378 = math.rsqrt %377 : vector<24x1xf32>
      %379 = vector.broadcast %378 : vector<24x1xf32> to vector<24x32xf32>
      %380 = arith.mulf %375, %379 : vector<24x32xf32>
      %381 = vector.broadcast %361 : vector<1x32xf32> to vector<24x32xf32>
      %382 = arith.mulf %380, %381 : vector<24x32xf32>
      %383 = vector.broadcast %362 : vector<1x32xf32> to vector<24x32xf32>
      %384 = arith.addf %382, %383 : vector<24x32xf32>
      %c0_131 = arith.constant 0 : index
      %c0_132 = arith.constant 0 : index
      %385 = vector.load %arg21[%c0_131, %c0_132] : memref<32x128xf32, #tpu.memory_space<vmem>>, vector<32x128xf32>
      %386 = arith.truncf %384 : vector<24x32xf32> to vector<24x32xbf16>
      %387 = arith.truncf %385 : vector<32x128xf32> to vector<32x128xbf16>
      %cst_133 = arith.constant dense<0.000000e+00> : vector<24x128xf32>
      %388 = tpu.matmul %386, %387, %cst_133 {dimension_numbers = #tpu.dot_dimension_numbers<[1], [0], [0], [1], [0, 0, 1, 1], [], []>} : vector<24x32xbf16>, vector<32x128xbf16>, vector<24x128xf32> -> vector<24x128xf32>
      %c0_134 = arith.constant 0 : index
      %c0_135 = arith.constant 0 : index
      %389 = vector.load %arg22[%c0_134, %c0_135] : memref<1x128xf32, #tpu.memory_space<vmem>>, vector<1x128xf32>
      %390 = vector.broadcast %389 : vector<1x128xf32> to vector<24x128xf32>
      %391 = arith.addf %388, %390 : vector<24x128xf32>
      %c0_136 = arith.constant 0 : index
      %c0_137 = arith.constant 0 : index
      %392 = vector.load %arg24[%c0_136, %c0_137] : memref<24x128xf32, #tpu.memory_space<vmem>>, vector<24x128xf32>
      tpu.vector_store %arg24[%c0_136, %c0_137], %391 {strides = array<i32>} : memref<24x128xf32, #tpu.memory_space<vmem>>, vector<24x128xf32>,
    } else {
    }
    return
  }
  func.func @transform_0(%arg0: i32, %arg1: i32) -> (i32, i32) {
    %c0_i32 = arith.constant 0 : i32
    %c0_i32_0 = arith.constant 0 : i32
    return %arg0, %c0_i32 : i32, i32
  }
  func.func @transform_1(%arg0: i32, %arg1: i32) -> (i32, i32) {
    %c0_i32 = arith.constant 0 : i32
    %c0_i32_0 = arith.constant 0 : i32
    %c0_i32_1 = arith.constant 0 : i32
    return %c0_i32, %c0_i32_0 : i32, i32
  }
  func.func @transform_2(%arg0: i32, %arg1: i32) -> (i32, i32) {
    %c0_i32 = arith.constant 0 : i32
    %c0_i32_0 = arith.constant 0 : i32
    %c0_i32_1 = arith.constant 0 : i32
    return %c0_i32, %c0_i32_0 : i32, i32
  }
  func.func @transform_3(%arg0: i32, %arg1: i32) -> (i32, i32) {
    %c0_i32 = arith.constant 0 : i32
    %c0_i32_0 = arith.constant 0 : i32
    %c0_i32_1 = arith.constant 0 : i32
    return %c0_i32, %c0_i32_0 : i32, i32
  }
  func.func @transform_4(%arg0: i32, %arg1: i32) -> (i32, i32) {
    %c0_i32 = arith.constant 0 : i32
    %c0_i32_0 = arith.constant 0 : i32
    %c0_i32_1 = arith.constant 0 : i32
    return %c0_i32, %c0_i32_0 : i32, i32
  }
  func.func @transform_5(%arg0: i32, %arg1: i32) -> (i32, i32, i32) {
    %c0_i32 = arith.constant 0 : i32
    %c0_i32_0 = arith.constant 0 : i32
    %c0_i32_1 = arith.constant 0 : i32
    return %arg1, %c0_i32, %c0_i32_0 : i32, i32, i32
  }
  func.func @transform_6(%arg0: i32, %arg1: i32) -> (i32, i32, i32) {
    %c0_i32 = arith.constant 0 : i32
    %c0_i32_0 = arith.constant 0 : i32
    %c0_i32_1 = arith.constant 0 : i32
    return %arg1, %c0_i32, %c0_i32_0 : i32, i32, i32
  }
  func.func @transform_7(%arg0: i32, %arg1: i32) -> (i32, i32, i32) {
    %c0_i32 = arith.constant 0 : i32
    %c0_i32_0 = arith.constant 0 : i32
    %c0_i32_1 = arith.constant 0 : i32
    return %arg1, %c0_i32, %c0_i32_0 : i32, i32, i32
  }
  func.func @transform_8(%arg0: i32, %arg1: i32) -> (i32, i32, i32) {
    %c0_i32 = arith.constant 0 : i32
    %c0_i32_0 = arith.constant 0 : i32
    %c0_i32_1 = arith.constant 0 : i32
    return %arg1, %c0_i32, %c0_i32_0 : i32, i32, i32
  }
  func.func @transform_9(%arg0: i32, %arg1: i32) -> (i32, i32, i32) {
    %c0_i32 = arith.constant 0 : i32
    %c0_i32_0 = arith.constant 0 : i32
    %c0_i32_1 = arith.constant 0 : i32
    return %arg1, %c0_i32, %c0_i32_0 : i32, i32, i32
  }
  func.func @transform_10(%arg0: i32, %arg1: i32) -> (i32, i32, i32) {
    %c0_i32 = arith.constant 0 : i32
    %c0_i32_0 = arith.constant 0 : i32
    %c0_i32_1 = arith.constant 0 : i32
    return %arg1, %c0_i32, %c0_i32_0 : i32, i32, i32
  }
  func.func @transform_11(%arg0: i32, %arg1: i32) -> (i32, i32, i32) {
    %c0_i32 = arith.constant 0 : i32
    %c0_i32_0 = arith.constant 0 : i32
    %c0_i32_1 = arith.constant 0 : i32
    return %arg1, %c0_i32, %c0_i32_0 : i32, i32, i32
  }
  func.func @transform_12(%arg0: i32, %arg1: i32) -> (i32, i32, i32) {
    %c0_i32 = arith.constant 0 : i32
    %c0_i32_0 = arith.constant 0 : i32
    %c0_i32_1 = arith.constant 0 : i32
    return %arg1, %c0_i32, %c0_i32_0 : i32, i32, i32
  }
  func.func @transform_13(%arg0: i32, %arg1: i32) -> (i32, i32, i32) {
    %c0_i32 = arith.constant 0 : i32
    %c0_i32_0 = arith.constant 0 : i32
    %c0_i32_1 = arith.constant 0 : i32
    return %arg1, %c0_i32, %c0_i32_0 : i32, i32, i32
  }
  func.func @transform_14(%arg0: i32, %arg1: i32) -> (i32, i32, i32) {
    %c0_i32 = arith.constant 0 : i32
    %c0_i32_0 = arith.constant 0 : i32
    %c0_i32_1 = arith.constant 0 : i32
    return %arg1, %c0_i32, %c0_i32_0 : i32, i32, i32
  }
  func.func @transform_15(%arg0: i32, %arg1: i32) -> (i32, i32, i32) {
    %c0_i32 = arith.constant 0 : i32
    %c0_i32_0 = arith.constant 0 : i32
    %c0_i32_1 = arith.constant 0 : i32
    return %arg1, %c0_i32, %c0_i32_0 : i32, i32, i32
  }
  func.func @transform_16(%arg0: i32, %arg1: i32) -> (i32, i32, i32) {
    %c0_i32 = arith.constant 0 : i32
    %c0_i32_0 = arith.constant 0 : i32
    %c0_i32_1 = arith.constant 0 : i32
    return %arg1, %c0_i32, %c0_i32_0 : i32, i32, i32
  }
  func.func @transform_17(%arg0: i32, %arg1: i32) -> (i32, i32) {
    %c0_i32 = arith.constant 0 : i32
    %c0_i32_0 = arith.constant 0 : i32
    %c0_i32_1 = arith.constant 0 : i32
    return %c0_i32, %c0_i32_0 : i32, i32
  }
  func.func @transform_18(%arg0: i32, %arg1: i32) -> (i32, i32) {
    %c0_i32 = arith.constant 0 : i32
    %c0_i32_0 = arith.constant 0 : i32
    %c0_i32_1 = arith.constant 0 : i32
    return %c0_i32, %c0_i32_0 : i32, i32
  }
  func.func @transform_19(%arg0: i32, %arg1: i32) -> (i32, i32) {
    %c0_i32 = arith.constant 0 : i32
    %c0_i32_0 = arith.constant 0 : i32
    %c0_i32_1 = arith.constant 0 : i32
    return %c0_i32, %c0_i32_0 : i32, i32
  }
  func.func @transform_20(%arg0: i32, %arg1: i32) -> (i32, i32) {
    %c0_i32 = arith.constant 0 : i32
    %c0_i32_0 = arith.constant 0 : i32
    %c0_i32_1 = arith.constant 0 : i32
    return %c0_i32, %c0_i32_0 : i32, i32
  }
  func.func @transform_21(%arg0: i32, %arg1: i32) -> (i32, i32) {
    %c0_i32 = arith.constant 0 : i32
    %c0_i32_0 = arith.constant 0 : i32
    %c0_i32_1 = arith.constant 0 : i32
    return %c0_i32, %c0_i32_0 : i32, i32
  }
  func.func @transform_22(%arg0: i32, %arg1: i32) -> (i32, i32) {
    %c0_i32 = arith.constant 0 : i32
    %c0_i32_0 = arith.constant 0 : i32
    return %arg0, %c0_i32 : i32, i32
  }
}

</mosaic_0001>

<llo_original>
// kernel: chaos_vit_forward.1
$region0: #{chaos_vit_forward.1}
  #allocation0 [shape = 'u32[]', space=smem, size = 0x4, offset = 0x4, fixed_abs, tag = 'smem constant byte address 0x4 - core index']
  #allocation1 [shape = 'u32[72,128]{1,0:T(1,128)}', space=vmem, size = 0x9000, scoped, tag = 'internal scratch']
  #allocation2 [shape = 'f32[24,32]{1,0:T(8,128)}', space=vmem, size = 0x3000, scoped, tag = 'scratch operand']
  #allocation3 [shape = 'f32[24,32]{1,0:T(8,128)}', space=vmem, size = 0x3000, scoped, tag = 'scratch operand']
  %s0 = inlined_call_operand.vmem [shape: f32[32,256], index: 0, kind: input, shape index: {}]
  %s1 = inlined_call_operand.vmem [shape: f32[256,32], index: 1, kind: input, shape index: {}]
  %s2 = inlined_call_operand.vmem [shape: f32[1,32], index: 2, kind: input, shape index: {}]
  %s3 = inlined_call_operand.vmem [shape: f32[1,32], index: 3, kind: input, shape index: {}]
  %s4 = inlined_call_operand.vmem [shape: f32[17,32], index: 4, kind: input, shape index: {}]
  %s5 = inlined_call_operand.vmem [shape: f32[2,1,32], index: 5, kind: input, shape index: {}]
  %s6 = inlined_call_operand.vmem [shape: f32[2,1,32], index: 6, kind: input, shape index: {}]
  %s7 = inlined_call_operand.vmem [shape: f32[2,32,96], index: 7, kind: input, shape index: {}]
  %s8 = inlined_call_operand.vmem [shape: f32[2,1,96], index: 8, kind: input, shape index: {}]
  %s9 = inlined_call_operand.vmem [shape: f32[2,32,32], index: 9, kind: input, shape index: {}]
  %s10 = inlined_call_operand.vmem [shape: f32[2,1,32], index: 10, kind: input, shape index: {}]
  %s11 = inlined_call_operand.vmem [shape: f32[2,1,32], index: 11, kind: input, shape index: {}]
  %s12 = inlined_call_operand.vmem [shape: f32[2,1,32], index: 12, kind: input, shape index: {}]
  %s13 = inlined_call_operand.vmem [shape: f32[2,32,64], index: 13, kind: input, shape index: {}]
  %s14 = inlined_call_operand.vmem [shape: f32[2,1,64], index: 14, kind: input, shape index: {}]
  %s15 = inlined_call_operand.vmem [shape: f32[2,64,32], index: 15, kind: input, shape index: {}]
  %s16 = inlined_call_operand.vmem [shape: f32[2,1,32], index: 16, kind: input, shape index: {}]
  %s17 = inlined_call_operand.vmem [shape: f32[1,32], index: 17, kind: input, shape index: {}]
  %s18 = inlined_call_operand.vmem [shape: f32[1,32], index: 18, kind: input, shape index: {}]
  %s19 = inlined_call_operand.vmem [shape: f32[32,128], index: 19, kind: input, shape index: {}]
  %s20 = inlined_call_operand.vmem [shape: f32[1,128], index: 20, kind: input, shape index: {}]
  %s21 = inlined_call_operand.vmem [shape: f32[2,4], index: 21, kind: input, shape index: {}]
  %s22 = inlined_call_operand.vmem [shape: f32[48,128], index: 22, kind: output, shape index: {}]
  %s23 = sld [smem:[#allocation0]]
  $region133: #{chaos_vit_forward.1} parent=0
    _
  %s25 = ssub.s32 1, %s23
  %s26 = scalar_select 0, %s25, %s23
  $region1: #{chaos_vit_forward.1} parent=0
    #allocation4 [shape = 'u8[1024]{0}', space=smem, size = 0x400, scoped, tag = 'input window, operand 21, single buffered']
    #allocation5 [shape = 's32[2]{0}', space=sflag, size = 0x8, scoped, tag = 'scoped memory for chaos_vit_forward.1']
    %27 = vsyncpa [#allocation5], 0
    loop: start=0, step=1, limit=6
    $region2: #{chaos_vit_forward.1} parent=1 // loop_pre_header
      _
    $region3: #{chaos_vit_forward.1} parent=1 // loop_header
      %s29 = sphi 0, %s33
      %p30 = scmp.ge.s32.totalorder %s29, 6
      %s36 = sphi 0, %s48
      %s37 = sphi 0, %s44
      %s38 = sphi 0, %s36
      %s39 = sphi 0, %s37
      %s40 = sphi 0, %s38
      %s41 = sphi 0, %s39
      %s51 = sphi 0, %s53
      %s54 = sphi 0, %s51
      %s55 = sphi 0, %s54
      %s71 = sphi 0, %s55
      %s75 = sphi 0, %s75
      %s77 = sphi 0, %s75
      %s78 = sphi 0, %s77
      %s92 = sphi 0, %s78
      %s96 = sphi 0, %s96
      %s98 = sphi 0, %s96
      %s99 = sphi 0, %s98
      %s113 = sphi 0, %s99
      %s117 = sphi 0, %s117
      %s119 = sphi 0, %s117
      %s120 = sphi 0, %s119
      %s134 = sphi 0, %s120
      %s138 = sphi 0, %s138
      %s140 = sphi 0, %s138
      %s141 = sphi 0, %s140
      %s155 = sphi 0, %s141
      %s161 = sphi 0, %s163
      %s164 = sphi 0, %s161
      %s165 = sphi 0, %s164
      %s181 = sphi 0, %s165
      %s187 = sphi 0, %s189
      %s190 = sphi 0, %s187
      %s191 = sphi 0, %s190
      %s207 = sphi 0, %s191
      %s213 = sphi 0, %s215
      %s216 = sphi 0, %s213
      %s217 = sphi 0, %s216
      %s233 = sphi 0, %s217
      %s239 = sphi 0, %s241
      %s242 = sphi 0, %s239
      %s243 = sphi 0, %s242
      %s259 = sphi 0, %s243
      %s265 = sphi 0, %s267
      %s268 = sphi 0, %s265
      %s269 = sphi 0, %s268
      %s285 = sphi 0, %s269
      %s291 = sphi 0, %s293
      %s294 = sphi 0, %s291
      %s295 = sphi 0, %s294
      %s311 = sphi 0, %s295
      %s317 = sphi 0, %s319
      %s320 = sphi 0, %s317
      %s321 = sphi 0, %s320
      %s337 = sphi 0, %s321
      %s343 = sphi 0, %s345
      %s346 = sphi 0, %s343
      %s347 = sphi 0, %s346
      %s363 = sphi 0, %s347
      %s369 = sphi 0, %s371
      %s372 = sphi 0, %s369
      %s373 = sphi 0, %s372
      %s389 = sphi 0, %s373
      %s395 = sphi 0, %s397
      %s398 = sphi 0, %s395
      %s399 = sphi 0, %s398
      %s415 = sphi 0, %s399
      %s421 = sphi 0, %s423
      %s424 = sphi 0, %s421
      %s425 = sphi 0, %s424
      %s441 = sphi 0, %s425
      %s447 = sphi 0, %s449
      %s450 = sphi 0, %s447
      %s451 = sphi 0, %s450
      %s467 = sphi 0, %s451
      %s471 = sphi 0, %s471
      %s473 = sphi 0, %s471
      %s474 = sphi 0, %s473
      %s488 = sphi 0, %s474
      %s492 = sphi 0, %s492
      %s494 = sphi 0, %s492
      %s495 = sphi 0, %s494
      %s509 = sphi 0, %s495
      %s513 = sphi 0, %s513
      %s515 = sphi 0, %s513
      %s516 = sphi 0, %s515
      %s530 = sphi 0, %s516
      %s534 = sphi 0, %s534
      %s536 = sphi 0, %s534
      %s537 = sphi 0, %s536
      %s551 = sphi 0, %s537
      %s555 = sphi 0, %s555
      %s557 = sphi 0, %s555
      %s558 = sphi 0, %s557
      %s572 = sphi 0, %s558
      %s578 = sphi 0, %s580
      %s581 = sphi 0, %s578
      %s582 = sphi 0, %s581
      %s598 = sphi 0, %s582
    $region4: #{chaos_vit_forward.1} parent=1 // loop_header_branch
      %32 = sbr.rel (%p30) target = $region8
    $region5: #{chaos_vit_forward.1} parent=1 // loop_body
      %s34 = ssub.s32 %s29, 1
      %s35 = ssub.s32 %s29, 2
      %s42 = sadd.s32 1, %s37
      %p43 = scmp.ge.s32.totalorder %s42, 2
      %s44 = scalar_select %p43, 0, %s42
      %s45 = sadd.s32 1, %s36
      %s46 = scalar_select %p43, %s45, %s36
      %p47 = scmp.ge.s32.totalorder %s46, 2
      %s48 = scalar_select %p47, 0, %s46
      %s49 = ssub.s32 %s36, %s48
      %p50 = scmp.eq.s32.totalorder %s49, 0
      %s52 = sadd.s32 %s51, 1
      %s53 = scalar_select %p50, %s51, %s52
      %p56 = pneg %p50
      %p57 = scmp.eq.s32.totalorder %s29, 3
      %p58 = por %p56, %p57
      %p59 = scmp.ne.s32.totalorder %s51, %s54
      %p60 = scmp.eq.s32.totalorder %s29, 0
      %p61 = por %p59, %p60
      %p62 = scmp.ne.s32.totalorder %s51, %s54
      %p63 = scmp.eq.s32.totalorder %s34, 3
      %p64 = por %p62, %p63
      %p65 = scmp.ne.s32.totalorder %s54, %s55
      %p66 = scmp.eq.s32.totalorder %s34, 0
      %p67 = por %p65, %p66
      %p68 = scmp.ne.s32.totalorder %s54, %s55
      %p69 = scmp.eq.s32.totalorder %s35, 3
      %p70 = por %p68, %p69
      %p72 = scmp.ne.s32.totalorder %s55, %s71
      %p73 = scmp.eq.s32.totalorder %s35, 0
      %p74 = por %p72, %p73
      %s76 = sadd.s32 %s75, 1
      %p79 = scmp.eq.s32.totalorder %s29, 3
      %p80 = scmp.ne.s32.totalorder %s75, %s77
      %p81 = scmp.eq.s32.totalorder %s29, 0
      %p82 = por %p80, %p81
      %p83 = scmp.ne.s32.totalorder %s75, %s77
      %p84 = scmp.eq.s32.totalorder %s34, 3
      %p85 = por %p83, %p84
      %p86 = scmp.ne.s32.totalorder %s77, %s78
      %p87 = scmp.eq.s32.totalorder %s34, 0
      %p88 = por %p86, %p87
      %p89 = scmp.ne.s32.totalorder %s77, %s78
      %p90 = scmp.eq.s32.totalorder %s35, 3
      %p91 = por %p89, %p90
      %p93 = scmp.ne.s32.totalorder %s78, %s92
      %p94 = scmp.eq.s32.totalorder %s35, 0
      %p95 = por %p93, %p94
      %s97 = sadd.s32 %s96, 1
      %p100 = scmp.eq.s32.totalorder %s29, 3
      %p101 = scmp.ne.s32.totalorder %s96, %s98
      %p102 = scmp.eq.s32.totalorder %s29, 0
      %p103 = por %p101, %p102
      %p104 = scmp.ne.s32.totalorder %s96, %s98
      %p105 = scmp.eq.s32.totalorder %s34, 3
      %p106 = por %p104, %p105
      %p107 = scmp.ne.s32.totalorder %s98, %s99
      %p108 = scmp.eq.s32.totalorder %s34, 0
      %p109 = por %p107, %p108
      %p110 = scmp.ne.s32.totalorder %s98, %s99
      %p111 = scmp.eq.s32.totalorder %s35, 3
      %p112 = por %p110, %p111
      %p114 = scmp.ne.s32.totalorder %s99, %s113
      %p115 = scmp.eq.s32.totalorder %s35, 0
      %p116 = por %p114, %p115
      %s118 = sadd.s32 %s117, 1
      %p121 = scmp.eq.s32.totalorder %s29, 3
      %p122 = scmp.ne.s32.totalorder %s117, %s119
      %p123 = scmp.eq.s32.totalorder %s29, 0
      %p124 = por %p122, %p123
      %p125 = scmp.ne.s32.totalorder %s117, %s119
      %p126 = scmp.eq.s32.totalorder %s34, 3
      %p127 = por %p125, %p126
      %p128 = scmp.ne.s32.totalorder %s119, %s120
      %p129 = scmp.eq.s32.totalorder %s34, 0
      %p130 = por %p128, %p129
      %p131 = scmp.ne.s32.totalorder %s119, %s120
      %p132 = scmp.eq.s32.totalorder %s35, 3
      %p133 = por %p131, %p132
      %p135 = scmp.ne.s32.totalorder %s120, %s134
      %p136 = scmp.eq.s32.totalorder %s35, 0
      %p137 = por %p135, %p136
      %s139 = sadd.s32 %s138, 1
      %p142 = scmp.eq.s32.totalorder %s29, 3
      %p143 = scmp.ne.s32.totalorder %s138, %s140
      %p144 = scmp.eq.s32.totalorder %s29, 0
      %p145 = por %p143, %p144
      %p146 = scmp.ne.s32.totalorder %s138, %s140
      %p147 = scmp.eq.s32.totalorder %s34, 3
      %p148 = por %p146, %p147
      %p149 = scmp.ne.s32.totalorder %s140, %s141
      %p150 = scmp.eq.s32.totalorder %s34, 0
      %p151 = por %p149, %p150
      %p152 = scmp.ne.s32.totalorder %s140, %s141
      %p153 = scmp.eq.s32.totalorder %s35, 3
      %p154 = por %p152, %p153
      %p156 = scmp.ne.s32.totalorder %s141, %s155
      %p157 = scmp.eq.s32.totalorder %s35, 0
      %p158 = por %p156, %p157
      %s159 = ssub.s32 %s37, %s44
      %p160 = scmp.eq.s32.totalorder %s159, 0
      %s162 = sadd.s32 %s161, 1
      %s163 = scalar_select %p160, %s161, %s162
      %p166 = pneg %p160
      %p167 = scmp.eq.s32.totalorder %s29, 3
      %p168 = por %p166, %p167
      %p169 = scmp.ne.s32.totalorder %s161, %s164
      %p170 = scmp.eq.s32.totalorder %s29, 0
      %p171 = por %p169, %p170
      %p172 = scmp.ne.s32.totalorder %s161, %s164
      %p173 = scmp.eq.s32.totalorder %s34, 3
      %p174 = por %p172, %p173
      %p175 = scmp.ne.s32.totalorder %s164, %s165
      %p176 = scmp.eq.s32.totalorder %s34, 0
      %p177 = por %p175, %p176
      %p178 = scmp.ne.s32.totalorder %s164, %s165
      %p179 = scmp.eq.s32.totalorder %s35, 3
      %p180 = por %p178, %p179
      %p182 = scmp.ne.s32.totalorder %s165, %s181
      %p183 = scmp.eq.s32.totalorder %s35, 0
      %p184 = por %p182, %p183
      %s185 = ssub.s32 %s37, %s44
      %p186 = scmp.eq.s32.totalorder %s185, 0
      %s188 = sadd.s32 %s187, 1
      %s189 = scalar_select %p186, %s187, %s188
      %p192 = pneg %p186
      %p193 = scmp.eq.s32.totalorder %s29, 3
      %p194 = por %p192, %p193
      %p195 = scmp.ne.s32.totalorder %s187, %s190
      %p196 = scmp.eq.s32.totalorder %s29, 0
      %p197 = por %p195, %p196
      %p198 = scmp.ne.s32.totalorder %s187, %s190
      %p199 = scmp.eq.s32.totalorder %s34, 3
      %p200 = por %p198, %p199
      %p201 = scmp.ne.s32.totalorder %s190, %s191
      %p202 = scmp.eq.s32.totalorder %s34, 0
      %p203 = por %p201, %p202
      %p204 = scmp.ne.s32.totalorder %s190, %s191
      %p205 = scmp.eq.s32.totalorder %s35, 3
      %p206 = por %p204, %p205
      %p208 = scmp.ne.s32.totalorder %s191, %s207
      %p209 = scmp.eq.s32.totalorder %s35, 0
      %p210 = por %p208, %p209
      %s211 = ssub.s32 %s37, %s44
      %p212 = scmp.eq.s32.totalorder %s211, 0
      %s214 = sadd.s32 %s213, 1
      %s215 = scalar_select %p212, %s213, %s214
      %p218 = pneg %p212
      %p219 = scmp.eq.s32.totalorder %s29, 3
      %p220 = por %p218, %p219
      %p221 = scmp.ne.s32.totalorder %s213, %s216
      %p222 = scmp.eq.s32.totalorder %s29, 0
      %p223 = por %p221, %p222
      %p224 = scmp.ne.s32.totalorder %s213, %s216
      %p225 = scmp.eq.s32.totalorder %s34, 3
      %p226 = por %p224, %p225
      %p227 = scmp.ne.s32.totalorder %s216, %s217
      %p228 = scmp.eq.s32.totalorder %s34, 0
      %p229 = por %p227, %p228
      %p230 = scmp.ne.s32.totalorder %s216, %s217
      %p231 = scmp.eq.s32.totalorder %s35, 3
      %p232 = por %p230, %p231
      %p234 = scmp.ne.s32.totalorder %s217, %s233
      %p235 = scmp.eq.s32.totalorder %s35, 0
      %p236 = por %p234, %p235
      %s237 = ssub.s32 %s37, %s44
      %p238 = scmp.eq.s32.totalorder %s237, 0
      %s240 = sadd.s32 %s239, 1
      %s241 = scalar_select %p238, %s239, %s240
      %p244 = pneg %p238
      %p245 = scmp.eq.s32.totalorder %s29, 3
      %p246 = por %p244, %p245
      %p247 = scmp.ne.s32.totalorder %s239, %s242
      %p248 = scmp.eq.s32.totalorder %s29, 0
      %p249 = por %p247, %p248
      %p250 = scmp.ne.s32.totalorder %s239, %s242
      %p251 = scmp.eq.s32.totalorder %s34, 3
      %p252 = por %p250, %p251
      %p253 = scmp.ne.s32.totalorder %s242, %s243
      %p254 = scmp.eq.s32.totalorder %s34, 0
      %p255 = por %p253, %p254
      %p256 = scmp.ne.s32.totalorder %s242, %s243
      %p257 = scmp.eq.s32.totalorder %s35, 3
      %p258 = por %p256, %p257
      %p260 = scmp.ne.s32.totalorder %s243, %s259
      %p261 = scmp.eq.s32.totalorder %s35, 0
      %p262 = por %p260, %p261
      %s263 = ssub.s32 %s37, %s44
      %p264 = scmp.eq.s32.totalorder %s263, 0
      %s266 = sadd.s32 %s265, 1
      %s267 = scalar_select %p264, %s265, %s266
      %p270 = pneg %p264
      %p271 = scmp.eq.s32.totalorder %s29, 3
      %p272 = por %p270, %p271
      %p273 = scmp.ne.s32.totalorder %s265, %s268
      %p274 = scmp.eq.s32.totalorder %s29, 0
      %p275 = por %p273, %p274
      %p276 = scmp.ne.s32.totalorder %s265, %s268
      %p277 = scmp.eq.s32.totalorder %s34, 3
      %p278 = por %p276, %p277
      %p279 = scmp.ne.s32.totalorder %s268, %s269
      %p280 = scmp.eq.s32.totalorder %s34, 0
      %p281 = por %p279, %p280
      %p282 = scmp.ne.s32.totalorder %s268, %s269
      %p283 = scmp.eq.s32.totalorder %s35, 3
      %p284 = por %p282, %p283
      %p286 = scmp.ne.s32.totalorder %s269, %s285
      %p287 = scmp.eq.s32.totalorder %s35, 0
      %p288 = por %p286, %p287
      %s289 = ssub.s32 %s37, %s44
      %p290 = scmp.eq.s32.totalorder %s289, 0
      %s292 = sadd.s32 %s291, 1
      %s293 = scalar_select %p290, %s291, %s292
      %p296 = pneg %p290
      %p297 = scmp.eq.s32.totalorder %s29, 3
      %p298 = por %p296, %p297
      %p299 = scmp.ne.s32.totalorder %s291, %s294
      %p300 = scmp.eq.s32.totalorder %s29, 0
      %p301 = por %p299, %p300
      %p302 = scmp.ne.s32.totalorder %s291, %s294
      %p303 = scmp.eq.s32.totalorder %s34, 3
      %p304 = por %p302, %p303
      %p305 = scmp.ne.s32.totalorder %s294, %s295
      %p306 = scmp.eq.s32.totalorder %s34, 0
      %p307 = por %p305, %p306
      %p308 = scmp.ne.s32.totalorder %s294, %s295
      %p309 = scmp.eq.s32.totalorder %s35, 3
      %p310 = por %p308, %p309
      %p312 = scmp.ne.s32.totalorder %s295, %s311
      %p313 = scmp.eq.s32.totalorder %s35, 0
      %p314 = por %p312, %p313
      %s315 = ssub.s32 %s37, %s44
      %p316 = scmp.eq.s32.totalorder %s315, 0
      %s318 = sadd.s32 %s317, 1
      %s319 = scalar_select %p316, %s317, %s318
      %p322 = pneg %p316
      %p323 = scmp.eq.s32.totalorder %s29, 3
      %p324 = por %p322, %p323
      %p325 = scmp.ne.s32.totalorder %s317, %s320
      %p326 = scmp.eq.s32.totalorder %s29, 0
      %p327 = por %p325, %p326
      %p328 = scmp.ne.s32.totalorder %s317, %s320
      %p329 = scmp.eq.s32.totalorder %s34, 3
      %p330 = por %p328, %p329
      %p331 = scmp.ne.s32.totalorder %s320, %s321
      %p332 = scmp.eq.s32.totalorder %s34, 0
      %p333 = por %p331, %p332
      %p334 = scmp.ne.s32.totalorder %s320, %s321
      %p335 = scmp.eq.s32.totalorder %s35, 3
      %p336 = por %p334, %p335
      %p338 = scmp.ne.s32.totalorder %s321, %s337
      %p339 = scmp.eq.s32.totalorder %s35, 0
      %p340 = por %p338, %p339
      %s341 = ssub.s32 %s37, %s44
      %p342 = scmp.eq.s32.totalorder %s341, 0
      %s344 = sadd.s32 %s343, 1
      %s345 = scalar_select %p342, %s343, %s344
      %p348 = pneg %p342
      %p349 = scmp.eq.s32.totalorder %s29, 3
      %p350 = por %p348, %p349
      %p351 = scmp.ne.s32.totalorder %s343, %s346
      %p352 = scmp.eq.s32.totalorder %s29, 0
      %p353 = por %p351, %p352
      %p354 = scmp.ne.s32.totalorder %s343, %s346
      %p355 = scmp.eq.s32.totalorder %s34, 3
      %p356 = por %p354, %p355
      %p357 = scmp.ne.s32.totalorder %s346, %s347
      %p358 = scmp.eq.s32.totalorder %s34, 0
      %p359 = por %p357, %p358
      %p360 = scmp.ne.s32.totalorder %s346, %s347
      %p361 = scmp.eq.s32.totalorder %s35, 3
      %p362 = por %p360, %p361
      %p364 = scmp.ne.s32.totalorder %s347, %s363
      %p365 = scmp.eq.s32.totalorder %s35, 0
      %p366 = por %p364, %p365
      %s367 = ssub.s32 %s37, %s44
      %p368 = scmp.eq.s32.totalorder %s367, 0
      %s370 = sadd.s32 %s369, 1
      %s371 = scalar_select %p368, %s369, %s370
      %p374 = pneg %p368
      %p375 = scmp.eq.s32.totalorder %s29, 3
      %p376 = por %p374, %p375
      %p377 = scmp.ne.s32.totalorder %s369, %s372
      %p378 = scmp.eq.s32.totalorder %s29, 0
      %p379 = por %p377, %p378
      %p380 = scmp.ne.s32.totalorder %s369, %s372
      %p381 = scmp.eq.s32.totalorder %s34, 3
      %p382 = por %p380, %p381
      %p383 = scmp.ne.s32.totalorder %s372, %s373
      %p384 = scmp.eq.s32.totalorder %s34, 0
      %p385 = por %p383, %p384
      %p386 = scmp.ne.s32.totalorder %s372, %s373
      %p387 = scmp.eq.s32.totalorder %s35, 3
      %p388 = por %p386, %p387
      %p390 = scmp.ne.s32.totalorder %s373, %s389
      %p391 = scmp.eq.s32.totalorder %s35, 0
      %p392 = por %p390, %p391
      %s393 = ssub.s32 %s37, %s44
      %p394 = scmp.eq.s32.totalorder %s393, 0
      %s396 = sadd.s32 %s395, 1
      %s397 = scalar_select %p394, %s395, %s396
      %p400 = pneg %p394
      %p401 = scmp.eq.s32.totalorder %s29, 3
      %p402 = por %p400, %p401
      %p403 = scmp.ne.s32.totalorder %s395, %s398
      %p404 = scmp.eq.s32.totalorder %s29, 0
      %p405 = por %p403, %p404
      %p406 = scmp.ne.s32.totalorder %s395, %s398
      %p407 = scmp.eq.s32.totalorder %s34, 3
      %p408 = por %p406, %p407
      %p409 = scmp.ne.s32.totalorder %s398, %s399
      %p410 = scmp.eq.s32.totalorder %s34, 0
      %p411 = por %p409, %p410
      %p412 = scmp.ne.s32.totalorder %s398, %s399
      %p413 = scmp.eq.s32.totalorder %s35, 3
      %p414 = por %p412, %p413
      %p416 = scmp.ne.s32.totalorder %s399, %s415
      %p417 = scmp.eq.s32.totalorder %s35, 0
      %p418 = por %p416, %p417
      %s419 = ssub.s32 %s37, %s44
      %p420 = scmp.eq.s32.totalorder %s419, 0
      %s422 = sadd.s32 %s421, 1
      %s423 = scalar_select %p420, %s421, %s422
      %p426 = pneg %p420
      %p427 = scmp.eq.s32.totalorder %s29, 3
      %p428 = por %p426, %p427
      %p429 = scmp.ne.s32.totalorder %s421, %s424
      %p430 = scmp.eq.s32.totalorder %s29, 0
      %p431 = por %p429, %p430
      %p432 = scmp.ne.s32.totalorder %s421, %s424
      %p433 = scmp.eq.s32.totalorder %s34, 3
      %p434 = por %p432, %p433
      %p435 = scmp.ne.s32.totalorder %s424, %s425
      %p436 = scmp.eq.s32.totalorder %s34, 0
      %p437 = por %p435, %p436
      %p438 = scmp.ne.s32.totalorder %s424, %s425
      %p439 = scmp.eq.s32.totalorder %s35, 3
      %p440 = por %p438, %p439
      %p442 = scmp.ne.s32.totalorder %s425, %s441
      %p443 = scmp.eq.s32.totalorder %s35, 0
      %p444 = por %p442, %p443
      %s445 = ssub.s32 %s37, %s44
      %p446 = scmp.eq.s32.totalorder %s445, 0
      %s448 = sadd.s32 %s447, 1
      %s449 = scalar_select %p446, %s447, %s448
      %p452 = pneg %p446
      %p453 = scmp.eq.s32.totalorder %s29, 3
      %p454 = por %p452, %p453
      %p455 = scmp.ne.s32.totalorder %s447, %s450
      %p456 = scmp.eq.s32.totalorder %s29, 0
      %p457 = por %p455, %p456
      %p458 = scmp.ne.s32.totalorder %s447, %s450
      %p459 = scmp.eq.s32.totalorder %s34, 3
      %p460 = por %p458, %p459
      %p461 = scmp.ne.s32.totalorder %s450, %s451
      %p462 = scmp.eq.s32.totalorder %s34, 0
      %p463 = por %p461, %p462
      %p464 = scmp.ne.s32.totalorder %s450, %s451
      %p465 = scmp.eq.s32.totalorder %s35, 3
      %p466 = por %p464, %p465
      %p468 = scmp.ne.s32.totalorder %s451, %s467
      %p469 = scmp.eq.s32.totalorder %s35, 0
      %p470 = por %p468, %p469
      %s472 = sadd.s32 %s471, 1
      %p475 = scmp.eq.s32.totalorder %s29, 3
      %p476 = scmp.ne.s32.totalorder %s471, %s473
      %p477 = scmp.eq.s32.totalorder %s29, 0
      %p478 = por %p476, %p477
      %p479 = scmp.ne.s32.totalorder %s471, %s473
      %p480 = scmp.eq.s32.totalorder %s34, 3
      %p481 = por %p479, %p480
      %p482 = scmp.ne.s32.totalorder %s473, %s474
      %p483 = scmp.eq.s32.totalorder %s34, 0
      %p484 = por %p482, %p483
      %p485 = scmp.ne.s32.totalorder %s473, %s474
      %p486 = scmp.eq.s32.totalorder %s35, 3
      %p487 = por %p485, %p486
      %p489 = scmp.ne.s32.totalorder %s474, %s488
      %p490 = scmp.eq.s32.totalorder %s35, 0
      %p491 = por %p489, %p490
      %s493 = sadd.s32 %s492, 1
      %p496 = scmp.eq.s32.totalorder %s29, 3
      %p497 = scmp.ne.s32.totalorder %s492, %s494
      %p498 = scmp.eq.s32.totalorder %s29, 0
      %p499 = por %p497, %p498
      %p500 = scmp.ne.s32.totalorder %s492, %s494
      %p501 = scmp.eq.s32.totalorder %s34, 3
      %p502 = por %p500, %p501
      %p503 = scmp.ne.s32.totalorder %s494, %s495
      %p504 = scmp.eq.s32.totalorder %s34, 0
      %p505 = por %p503, %p504
      %p506 = scmp.ne.s32.totalorder %s494, %s495
      %p507 = scmp.eq.s32.totalorder %s35, 3
      %p508 = por %p506, %p507
      %p510 = scmp.ne.s32.totalorder %s495, %s509
      %p511 = scmp.eq.s32.totalorder %s35, 0
      %p512 = por %p510, %p511
      %s514 = sadd.s32 %s513, 1
      %p517 = scmp.eq.s32.totalorder %s29, 3
      %p518 = scmp.ne.s32.totalorder %s513, %s515
      %p519 = scmp.eq.s32.totalorder %s29, 0
      %p520 = por %p518, %p519
      %p521 = scmp.ne.s32.totalorder %s513, %s515
      %p522 = scmp.eq.s32.totalorder %s34, 3
      %p523 = por %p521, %p522
      %p524 = scmp.ne.s32.totalorder %s515, %s516
      %p525 = scmp.eq.s32.totalorder %s34, 0
      %p526 = por %p524, %p525
      %p527 = scmp.ne.s32.totalorder %s515, %s516
      %p528 = scmp.eq.s32.totalorder %s35, 3
      %p529 = por %p527, %p528
      %p531 = scmp.ne.s32.totalorder %s516, %s530
      %p532 = scmp.eq.s32.totalorder %s35, 0
      %p533 = por %p531, %p532
      %s535 = sadd.s32 %s534, 1
      %p538 = scmp.eq.s32.totalorder %s29, 3
      %p539 = scmp.ne.s32.totalorder %s534, %s536
      %p540 = scmp.eq.s32.totalorder %s29, 0
      %p541 = por %p539, %p540
      %p542 = scmp.ne.s32.totalorder %s534, %s536
      %p543 = scmp.eq.s32.totalorder %s34, 3
      %p544 = por %p542, %p543
      %p545 = scmp.ne.s32.totalorder %s536, %s537
      %p546 = scmp.eq.s32.totalorder %s34, 0
      %p547 = por %p545, %p546
      %p548 = scmp.ne.s32.totalorder %s536, %s537
      %p549 = scmp.eq.s32.totalorder %s35, 3
      %p550 = por %p548, %p549
      %p552 = scmp.ne.s32.totalorder %s537, %s551
      %p553 = scmp.eq.s32.totalorder %s35, 0
      %p554 = por %p552, %p553
      %s556 = sadd.s32 %s555, 1
      %p559 = scmp.eq.s32.totalorder %s29, 3
      %p560 = scmp.ne.s32.totalorder %s555, %s557
      %p561 = scmp.eq.s32.totalorder %s29, 0
      %p562 = por %p560, %p561
      %p563 = scmp.ne.s32.totalorder %s555, %s557
      %p564 = scmp.eq.s32.totalorder %s34, 3
      %p565 = por %p563, %p564
      %p566 = scmp.ne.s32.totalorder %s557, %s558
      %p567 = scmp.eq.s32.totalorder %s34, 0
      %p568 = por %p566, %p567
      %p569 = scmp.ne.s32.totalorder %s557, %s558
      %p570 = scmp.eq.s32.totalorder %s35, 3
      %p571 = por %p569, %p570
      %p573 = scmp.ne.s32.totalorder %s558, %s572
      %p574 = scmp.eq.s32.totalorder %s35, 0
      %p575 = por %p573, %p574
      %s576 = ssub.s32 %s36, %s48
      %p577 = scmp.eq.s32.totalorder %s576, 0
      %s579 = sadd.s32 %s578, 1
      %s580 = scalar_select %p577, %s578, %s579
      %p583 = pneg %p577
      %p584 = scmp.eq.s32.totalorder %s29, 3
      %p585 = por %p583, %p584
      %p586 = scmp.ne.s32.totalorder %s578, %s581
      %p587 = scmp.eq.s32.totalorder %s29, 0
      %p588 = por %p586, %p587
      %p589 = scmp.ne.s32.totalorder %s578, %s581
      %p590 = scmp.eq.s32.totalorder %s34, 3
      %p591 = por %p589, %p590
      %p592 = scmp.ne.s32.totalorder %s581, %s582
      %p593 = scmp.eq.s32.totalorder %s34, 0
      %p594 = por %p592, %p593
      %p595 = scmp.ne.s32.totalorder %s581, %s582
      %p596 = scmp.eq.s32.totalorder %s35, 3
      %p597 = por %p595, %p596
      %p599 = scmp.ne.s32.totalorder %s582, %s598
      %p600 = scmp.eq.s32.totalorder %s35, 0
      %p601 = por %p599, %p600
      %p602 = scmp.le.s32.totalorder 1, %s29
      %p603 = scmp.lt.s32.totalorder %s29, 5
      %p604 = pnand %p602, %p603
      %p605 = pneg %p604
      // Predicated region
      $region9: #{chaos_vit_forward.1} parent=5 // pred_check
        _
      $region10: #{chaos_vit_forward.1} parent=5 // pred_check_branch
        %607 = sbr.rel (%p604) target = $region12
      $region11: #{chaos_vit_forward.1} parent=5 // pred_region
        %s608 = ssub.s32 %s29, 1
        // Predicated region
        $region13: #{chaos_vit_forward.1} parent=11 // pred_check
          %p609 = pneg %p88
        $region14: #{chaos_vit_forward.1} parent=11 // pred_check_branch
          %611 = sbr.rel (%p609) target = $region16
        $region15: #{chaos_vit_forward.1} parent=11 // pred_region
          _
        $region16: #{chaos_vit_forward.1} parent=11 // pred_fallthru
          _
        // Predicated region
        $region17: #{chaos_vit_forward.1} parent=11 // pred_check
          %p612 = pneg %p109
        $region18: #{chaos_vit_forward.1} parent=11 // pred_check_branch
          %614 = sbr.rel (%p612) target = $region20
        $region19: #{chaos_vit_forward.1} parent=11 // pred_region
          _
        $region20: #{chaos_vit_forward.1} parent=11 // pred_fallthru
          _
        // Predicated region
        $region21: #{chaos_vit_forward.1} parent=11 // pred_check
          %p615 = pneg %p130
        $region22: #{chaos_vit_forward.1} parent=11 // pred_check_branch
          %617 = sbr.rel (%p615) target = $region24
        $region23: #{chaos_vit_forward.1} parent=11 // pred_region
          _
        $region24: #{chaos_vit_forward.1} parent=11 // pred_fallthru
          _
        // Predicated region
        $region25: #{chaos_vit_forward.1} parent=11 // pred_check
          %p618 = pneg %p151
        $region26: #{chaos_vit_forward.1} parent=11 // pred_check_branch
          %620 = sbr.rel (%p618) target = $region28
        $region27: #{chaos_vit_forward.1} parent=11 // pred_region
          _
        $region28: #{chaos_vit_forward.1} parent=11 // pred_fallthru
          _
        // Predicated region
        $region29: #{chaos_vit_forward.1} parent=11 // pred_check
          %p621 = pneg %p484
        $region30: #{chaos_vit_forward.1} parent=11 // pred_check_branch
          %623 = sbr.rel (%p621) target = $region32
        $region31: #{chaos_vit_forward.1} parent=11 // pred_region
          _
        $region32: #{chaos_vit_forward.1} parent=11 // pred_fallthru
          _
        // Predicated region
        $region33: #{chaos_vit_forward.1} parent=11 // pred_check
          %p624 = pneg %p505
        $region34: #{chaos_vit_forward.1} parent=11 // pred_check_branch
          %626 = sbr.rel (%p624) target = $region36
        $region35: #{chaos_vit_forward.1} parent=11 // pred_region
          _
        $region36: #{chaos_vit_forward.1} parent=11 // pred_fallthru
          _
        // Predicated region
        $region37: #{chaos_vit_forward.1} parent=11 // pred_check
          %p627 = pneg %p526
        $region38: #{chaos_vit_forward.1} parent=11 // pred_check_branch
          %629 = sbr.rel (%p627) target = $region40
        $region39: #{chaos_vit_forward.1} parent=11 // pred_region
          _
        $region40: #{chaos_vit_forward.1} parent=11 // pred_fallthru
          _
        // Predicated region
        $region41: #{chaos_vit_forward.1} parent=11 // pred_check
          %p630 = pneg %p547
        $region42: #{chaos_vit_forward.1} parent=11 // pred_check_branch
          %632 = sbr.rel (%p630) target = $region44
        $region43: #{chaos_vit_forward.1} parent=11 // pred_region
          _
        $region44: #{chaos_vit_forward.1} parent=11 // pred_fallthru
          _
        // Predicated region
        $region45: #{chaos_vit_forward.1} parent=11 // pred_check
          %p633 = pneg %p568
        $region46: #{chaos_vit_forward.1} parent=11 // pred_check_branch
          %635 = sbr.rel (%p633) target = $region48
        $region47: #{chaos_vit_forward.1} parent=11 // pred_region
          %637 = vsyncadd [#allocation5], 0
          %s639 = sshll.u32 %s21, 4
          %s640 = int_to_ptr.vmem [resolvable:$true] %s639
          %642 = dma.vmem_to_smem %s640, 32, [#allocation4], [#allocation5]
        $region48: #{chaos_vit_forward.1} parent=11 // pred_fallthru
          _
      $region12: #{chaos_vit_forward.1} parent=5 // pred_fallthru
        _
      %p643 = scmp.lt.s32.totalorder %s29, 4
      // Predicated region
      $region49: #{chaos_vit_forward.1} parent=5 // pred_check
        %p644 = pneg %p643
      $region50: #{chaos_vit_forward.1} parent=5 // pred_check_branch
        %646 = sbr.rel (%p644) target = $region52
      $region51: #{chaos_vit_forward.1} parent=5 // pred_region
        // Predicated region
        $region53: #{chaos_vit_forward.1} parent=51 // pred_check
          %p647 = pneg %p61
        $region54: #{chaos_vit_forward.1} parent=51 // pred_check_branch
          %649 = sbr.rel (%p647) target = $region56
        $region55: #{chaos_vit_forward.1} parent=51 // pred_region
          %s650 = smul.u32 2, %s36
          %p651 = scmp.lt.s32.totalorder %s650, 3
          %s652 = scalar_select %p651, %s650, 3
          %s653 = smul.addr %s652, 2
          %s654 = smul.addr %s653, 8
          %s655 = scalar_lea.vmem %s0, %s654
          %s656 = smul.u32 2, %s36
        $region56: #{chaos_vit_forward.1} parent=51 // pred_fallthru
          _
        // Predicated region
        $region57: #{chaos_vit_forward.1} parent=51 // pred_check
          %p657 = pneg %p171
        $region58: #{chaos_vit_forward.1} parent=51 // pred_check_branch
          %659 = sbr.rel (%p657) target = $region60
        $region59: #{chaos_vit_forward.1} parent=51 // pred_region
          %p660 = scmp.lt.s32.totalorder %s37, 1
          %s661 = scalar_select %p660, %s37, 1
          %s662 = scalar_lea.vmem %s5, %s661
        $region60: #{chaos_vit_forward.1} parent=51 // pred_fallthru
          _
        // Predicated region
        $region61: #{chaos_vit_forward.1} parent=51 // pred_check
          %p663 = pneg %p197
        $region62: #{chaos_vit_forward.1} parent=51 // pred_check_branch
          %665 = sbr.rel (%p663) target = $region64
        $region63: #{chaos_vit_forward.1} parent=51 // pred_region
          %p666 = scmp.lt.s32.totalorder %s37, 1
          %s667 = scalar_select %p666, %s37, 1
          %s668 = scalar_lea.vmem %s6, %s667
        $region64: #{chaos_vit_forward.1} parent=51 // pred_fallthru
          _
        // Predicated region
        $region65: #{chaos_vit_forward.1} parent=51 // pred_check
          %p669 = pneg %p223
        $region66: #{chaos_vit_forward.1} parent=51 // pred_check_branch
          %671 = sbr.rel (%p669) target = $region68
        $region67: #{chaos_vit_forward.1} parent=51 // pred_region
          %p672 = scmp.lt.s32.totalorder %s37, 1
          %s673 = scalar_select %p672, %s37, 1
          %s674 = smul.addr %s673, 4
          %s675 = smul.addr %s674, 8
          %s676 = scalar_lea.vmem %s7, %s675
        $region68: #{chaos_vit_forward.1} parent=51 // pred_fallthru
          _
        // Predicated region
        $region69: #{chaos_vit_forward.1} parent=51 // pred_check
          %p677 = pneg %p249
        $region70: #{chaos_vit_forward.1} parent=51 // pred_check_branch
          %679 = sbr.rel (%p677) target = $region72
        $region71: #{chaos_vit_forward.1} parent=51 // pred_region
          %p680 = scmp.lt.s32.totalorder %s37, 1
          %s681 = scalar_select %p680, %s37, 1
          %s682 = scalar_lea.vmem %s8, %s681
        $region72: #{chaos_vit_forward.1} parent=51 // pred_fallthru
          _
        // Predicated region
        $region73: #{chaos_vit_forward.1} parent=51 // pred_check
          %p683 = pneg %p275
        $region74: #{chaos_vit_forward.1} parent=51 // pred_check_branch
          %685 = sbr.rel (%p683) target = $region76
        $region75: #{chaos_vit_forward.1} parent=51 // pred_region
          %p686 = scmp.lt.s32.totalorder %s37, 1
          %s687 = scalar_select %p686, %s37, 1
          %s688 = smul.addr %s687, 4
          %s689 = smul.addr %s688, 8
          %s690 = scalar_lea.vmem %s9, %s689
        $region76: #{chaos_vit_forward.1} parent=51 // pred_fallthru
          _
        // Predicated region
        $region77: #{chaos_vit_forward.1} parent=51 // pred_check
          %p691 = pneg %p301
        $region78: #{chaos_vit_forward.1} parent=51 // pred_check_branch
          %693 = sbr.rel (%p691) target = $region80
        $region79: #{chaos_vit_forward.1} parent=51 // pred_region
          %p694 = scmp.lt.s32.totalorder %s37, 1
          %s695 = scalar_select %p694, %s37, 1
          %s696 = scalar_lea.vmem %s10, %s695
        $region80: #{chaos_vit_forward.1} parent=51 // pred_fallthru
          _
        // Predicated region
        $region81: #{chaos_vit_forward.1} parent=51 // pred_check
          %p697 = pneg %p327
        $region82: #{chaos_vit_forward.1} parent=51 // pred_check_branch
          %699 = sbr.rel (%p697) target = $region84
        $region83: #{chaos_vit_forward.1} parent=51 // pred_region
          %p700 = scmp.lt.s32.totalorder %s37, 1
          %s701 = scalar_select %p700, %s37, 1
          %s702 = scalar_lea.vmem %s11, %s701
        $region84: #{chaos_vit_forward.1} parent=51 // pred_fallthru
          _
        // Predicated region
        $region85: #{chaos_vit_forward.1} parent=51 // pred_check
          %p703 = pneg %p353
        $region86: #{chaos_vit_forward.1} parent=51 // pred_check_branch
          %705 = sbr.rel (%p703) target = $region88
        $region87: #{chaos_vit_forward.1} parent=51 // pred_region
          %p706 = scmp.lt.s32.totalorder %s37, 1
          %s707 = scalar_select %p706, %s37, 1
          %s708 = scalar_lea.vmem %s12, %s707
        $region88: #{chaos_vit_forward.1} parent=51 // pred_fallthru
          _
        // Predicated region
        $region89: #{chaos_vit_forward.1} parent=51 // pred_check
          %p709 = pneg %p379
        $region90: #{chaos_vit_forward.1} parent=51 // pred_check_branch
          %711 = sbr.rel (%p709) target = $region92
        $region91: #{chaos_vit_forward.1} parent=51 // pred_region
          %p712 = scmp.lt.s32.totalorder %s37, 1
          %s713 = scalar_select %p712, %s37, 1
          %s714 = smul.addr %s713, 4
          %s715 = smul.addr %s714, 8
          %s716 = scalar_lea.vmem %s13, %s715
        $region92: #{chaos_vit_forward.1} parent=51 // pred_fallthru
          _
        // Predicated region
        $region93: #{chaos_vit_forward.1} parent=51 // pred_check
          %p717 = pneg %p405
        $region94: #{chaos_vit_forward.1} parent=51 // pred_check_branch
          %719 = sbr.rel (%p717) target = $region96
        $region95: #{chaos_vit_forward.1} parent=51 // pred_region
          %p720 = scmp.lt.s32.totalorder %s37, 1
          %s721 = scalar_select %p720, %s37, 1
          %s722 = scalar_lea.vmem %s14, %s721
        $region96: #{chaos_vit_forward.1} parent=51 // pred_fallthru
          _
        // Predicated region
        $region97: #{chaos_vit_forward.1} parent=51 // pred_check
          %p723 = pneg %p431
        $region98: #{chaos_vit_forward.1} parent=51 // pred_check_branch
          %725 = sbr.rel (%p723) target = $region100
        $region99: #{chaos_vit_forward.1} parent=51 // pred_region
          %p726 = scmp.lt.s32.totalorder %s37, 1
          %s727 = scalar_select %p726, %s37, 1
          %s728 = smul.addr %s727, 8
          %s729 = smul.addr %s728, 8
          %s730 = scalar_lea.vmem %s15, %s729
        $region100: #{chaos_vit_forward.1} parent=51 // pred_fallthru
          _
        // Predicated region
        $region101: #{chaos_vit_forward.1} parent=51 // pred_check
          %p731 = pneg %p457
        $region102: #{chaos_vit_forward.1} parent=51 // pred_check_branch
          %733 = sbr.rel (%p731) target = $region104
        $region103: #{chaos_vit_forward.1} parent=51 // pred_region
          %p734 = scmp.lt.s32.totalorder %s37, 1
          %s735 = scalar_select %p734, %s37, 1
          %s736 = scalar_lea.vmem %s16, %s735
        $region104: #{chaos_vit_forward.1} parent=51 // pred_fallthru
          _
      $region52: #{chaos_vit_forward.1} parent=5 // pred_fallthru
        _
      %p737 = scmp.le.s32.totalorder 1, %s29
      %p738 = scmp.lt.s32.totalorder %s29, 5
      %p739 = pnand %p737, %p738
      %p740 = pneg %p739
      // Predicated region
      $region105: #{chaos_vit_forward.1} parent=5 // pred_check
        _
      $region106: #{chaos_vit_forward.1} parent=5 // pred_check_branch
        %742 = sbr.rel (%p739) target = $region108
      $region107: #{chaos_vit_forward.1} parent=5 // pred_region
        %s743 = ssub.s32 %s29, 1
        // Predicated region
        $region109: #{chaos_vit_forward.1} parent=107 // pred_check
          %p744 = pneg %p568
        $region110: #{chaos_vit_forward.1} parent=107 // pred_check_branch
          %746 = sbr.rel (%p744) target = $region112
        $region111: #{chaos_vit_forward.1} parent=107 // pred_region
          %748 = dma.done [#allocation5], 32
        $region112: #{chaos_vit_forward.1} parent=107 // pred_fallthru
          _
        %749 = sfence
        %s750 = smul.u32 2, %s38
        %p751 = scmp.lt.s32.totalorder %s750, 3
        %s752 = scalar_select %p751, %s750, 3
        %s753 = smul.addr %s752, 2
        %s754 = smul.addr %s753, 8
        %s755 = scalar_lea.vmem %s0, %s754
        %p756 = pneg %p67
        %p757 = pneg %p64
        %p758 = pneg %p88
        %p759 = pneg %p85
        %p760 = pneg %p109
        %p761 = pneg %p106
        %p762 = pneg %p130
        %p763 = pneg %p127
        %p764 = pneg %p151
        %p765 = pneg %p148
        %p766 = scmp.lt.s32.totalorder %s39, 1
        %s767 = scalar_select %p766, %s39, 1
        %s768 = scalar_lea.vmem %s5, %s767
        %p769 = pneg %p177
        %p770 = pneg %p174
        %p771 = scmp.lt.s32.totalorder %s39, 1
        %s772 = scalar_select %p771, %s39, 1
        %s773 = scalar_lea.vmem %s6, %s772
        %p774 = pneg %p203
        %p775 = pneg %p200
        %p776 = scmp.lt.s32.totalorder %s39, 1
        %s777 = scalar_select %p776, %s39, 1
        %s778 = smul.addr %s777, 4
        %s779 = smul.addr %s778, 8
        %s780 = scalar_lea.vmem %s7, %s779
        %p781 = pneg %p229
        %p782 = pneg %p226
        %p783 = scmp.lt.s32.totalorder %s39, 1
        %s784 = scalar_select %p783, %s39, 1
        %s785 = scalar_lea.vmem %s8, %s784
        %p786 = pneg %p255
        %p787 = pneg %p252
        %p788 = scmp.lt.s32.totalorder %s39, 1
        %s789 = scalar_select %p788, %s39, 1
        %s790 = smul.addr %s789, 4
        %s791 = smul.addr %s790, 8
        %s792 = scalar_lea.vmem %s9, %s791
        %p793 = pneg %p281
        %p794 = pneg %p278
        %p795 = scmp.lt.s32.totalorder %s39, 1
        %s796 = scalar_select %p795, %s39, 1
        %s797 = scalar_lea.vmem %s10, %s796
        %p798 = pneg %p307
        %p799 = pneg %p304
        %p800 = scmp.lt.s32.totalorder %s39, 1
        %s801 = scalar_select %p800, %s39, 1
        %s802 = scalar_lea.vmem %s11, %s801
        %p803 = pneg %p333
        %p804 = pneg %p330
        %p805 = scmp.lt.s32.totalorder %s39, 1
        %s806 = scalar_select %p805, %s39, 1
        %s807 = scalar_lea.vmem %s12, %s806
        %p808 = pneg %p359
        %p809 = pneg %p356
        %p810 = scmp.lt.s32.totalorder %s39, 1
        %s811 = scalar_select %p810, %s39, 1
        %s812 = smul.addr %s811, 4
        %s813 = smul.addr %s812, 8
        %s814 = scalar_lea.vmem %s13, %s813
        %p815 = pneg %p385
        %p816 = pneg %p382
        %p817 = scmp.lt.s32.totalorder %s39, 1
        %s818 = scalar_select %p817, %s39, 1
        %s819 = scalar_lea.vmem %s14, %s818
        %p820 = pneg %p411
        %p821 = pneg %p408
        %p822 = scmp.lt.s32.totalorder %s39, 1
        %s823 = scalar_select %p822, %s39, 1
        %s824 = smul.addr %s823, 8
        %s825 = smul.addr %s824, 8
        %s826 = scalar_lea.vmem %s15, %s825
        %p827 = pneg %p437
        %p828 = pneg %p434
        %p829 = scmp.lt.s32.totalorder %s39, 1
        %s830 = scalar_select %p829, %s39, 1
        %s831 = scalar_lea.vmem %s16, %s830
        %p832 = pneg %p463
        %p833 = pneg %p460
        %p834 = pneg %p484
        %p835 = pneg %p481
        %p836 = pneg %p505
        %p837 = pneg %p502
        %p838 = pneg %p526
        %p839 = pneg %p523
        %p840 = pneg %p547
        %p841 = pneg %p544
        %p842 = pneg %p568
        %p843 = pneg %p565
        %p844 = pneg %p594
        %p845 = pneg %p591
        %s846 = smul.u32 3, %s38
        %p847 = scmp.lt.s32.totalorder %s846, 5
        %s848 = scalar_select %p847, %s846, 5
        %s849 = smul.addr %s848, 8
        %s850 = scalar_lea.vmem %s22, %s849
        %s851 = smul.u32 2, %s38
        %p852 = scmp.lt.s32.totalorder %s851, 3
        %s853 = scalar_select %p852, %s851, 3
        %s854 = smul.addr %s853, 2
        %s855 = smul.addr %s854, 8
        %s856 = scalar_lea.vmem %s0, %s855
        %s857 = smul.u32 2, %s38
        %p858 = scmp.lt.s32.totalorder %s39, 1
        %s859 = scalar_select %p858, %s39, 1
        %s860 = scalar_lea.vmem %s5, %s859
        %p861 = scmp.lt.s32.totalorder %s39, 1
        %s862 = scalar_select %p861, %s39, 1
        %s863 = scalar_lea.vmem %s6, %s862
        %p864 = scmp.lt.s32.totalorder %s39, 1
        %s865 = scalar_select %p864, %s39, 1
        %s866 = smul.addr %s865, 4
        %s867 = smul.addr %s866, 8
        %s868 = scalar_lea.vmem %s7, %s867
        %p869 = scmp.lt.s32.totalorder %s39, 1
        %s870 = scalar_select %p869, %s39, 1
        %s871 = scalar_lea.vmem %s8, %s870
        %p872 = scmp.lt.s32.totalorder %s39, 1
        %s873 = scalar_select %p872, %s39, 1
        %s874 = smul.addr %s873, 4
        %s875 = smul.addr %s874, 8
        %s876 = scalar_lea.vmem %s9, %s875
        %p877 = scmp.lt.s32.totalorder %s39, 1
        %s878 = scalar_select %p877, %s39, 1
        %s879 = scalar_lea.vmem %s10, %s878
        %p880 = scmp.lt.s32.totalorder %s39, 1
        %s881 = scalar_select %p880, %s39, 1
        %s882 = scalar_lea.vmem %s11, %s881
        %p883 = scmp.lt.s32.totalorder %s39, 1
        %s884 = scalar_select %p883, %s39, 1
        %s885 = scalar_lea.vmem %s12, %s884
        %p886 = scmp.lt.s32.totalorder %s39, 1
        %s887 = scalar_select %p886, %s39, 1
        %s888 = smul.addr %s887, 4
        %s889 = smul.addr %s888, 8
        %s890 = scalar_lea.vmem %s13, %s889
        %p891 = scmp.lt.s32.totalorder %s39, 1
        %s892 = scalar_select %p891, %s39, 1
        %s893 = scalar_lea.vmem %s14, %s892
        %p894 = scmp.lt.s32.totalorder %s39, 1
        %s895 = scalar_select %p894, %s39, 1
        %s896 = smul.addr %s895, 8
        %s897 = smul.addr %s896, 8
        %s898 = scalar_lea.vmem %s15, %s897
        %p899 = scmp.lt.s32.totalorder %s39, 1
        %s900 = scalar_select %p899, %s39, 1
        %s901 = scalar_lea.vmem %s16, %s900
        %s902 = smul.u32 3, %s38
        %p903 = scmp.lt.s32.totalorder %s902, 5
        %s904 = scalar_select %p903, %s902, 5
        %s905 = smul.addr %s904, 8
        %s906 = scalar_lea.vmem %s22, %s905
        %s907 = smul.u32 3, %s38
        %p909 = scmp.eq.s32.totalorder %s39, 0
        // Predicated region
        $region113: #{chaos_vit_forward.1} parent=107 // pred_check
          %p910 = pneg %p909
        $region114: #{chaos_vit_forward.1} parent=107 // pred_check_branch
          %912 = sbr.rel (%p910) target = $region116
        $region115: #{chaos_vit_forward.1} parent=107 // pred_region
          %v913 = vld [vmem:[%s856] sm:$0xff]
          %v914 = vld [vmem:[%s856 + $0x8] sm:$0xff]
          %v915 = vld [vmem:[%s856 + $0x10] sm:$0xff]
          %v916 = vld [vmem:[%s856 + $0x18] sm:$0xff]
          %v917 = vld [vmem:[%s1] sm:$0xff]
          %v918 = vld [vmem:[%s1 + $0x8] sm:$0xff]
          %v919 = vld [vmem:[%s1 + $0x10] sm:$0xff]
          %v920 = vld [vmem:[%s1 + $0x18] sm:$0xff]
          %v921 = vld [vmem:[%s1 + $0x20] sm:$0xff]
          %v922 = vld [vmem:[%s1 + $0x28] sm:$0xff]
          %v923 = vld [vmem:[%s1 + $0x30] sm:$0xff]
          %v924 = vld [vmem:[%s1 + $0x38] sm:$0xff]
          %v925 = vld [vmem:[%s1 + $0x40] sm:$0xff]
          %v926 = vld [vmem:[%s1 + $0x48] sm:$0xff]
          %v927 = vld [vmem:[%s1 + $0x50] sm:$0xff]
          %v928 = vld [vmem:[%s1 + $0x58] sm:$0xff]
          %v929 = vld [vmem:[%s1 + $0x60] sm:$0xff]
          %v930 = vld [vmem:[%s1 + $0x68] sm:$0xff]
          %v931 = vld [vmem:[%s1 + $0x70] sm:$0xff]
          %v932 = vld [vmem:[%s1 + $0x78] sm:$0xff]
          %v933 = vld [vmem:[%s1 + $0x80] sm:$0xff]
          %v934 = vld [vmem:[%s1 + $0x88] sm:$0xff]
          %v935 = vld [vmem:[%s1 + $0x90] sm:$0xff]
          %v936 = vld [vmem:[%s1 + $0x98] sm:$0xff]
          %v937 = vld [vmem:[%s1 + $0xa0] sm:$0xff]
          %v938 = vld [vmem:[%s1 + $0xa8] sm:$0xff]
          %v939 = vld [vmem:[%s1 + $0xb0] sm:$0xff]
          %v940 = vld [vmem:[%s1 + $0xb8] sm:$0xff]
          %v941 = vld [vmem:[%s1 + $0xc0] sm:$0xff]
          %v942 = vld [vmem:[%s1 + $0xc8] sm:$0xff]
          %v943 = vld [vmem:[%s1 + $0xd0] sm:$0xff]
          %v944 = vld [vmem:[%s1 + $0xd8] sm:$0xff]
          %v945 = vld [vmem:[%s1 + $0xe0] sm:$0xff]
          %v946 = vld [vmem:[%s1 + $0xe8] sm:$0xff]
          %v947 = vld [vmem:[%s1 + $0xf0] sm:$0xff]
          %v948 = vld [vmem:[%s1 + $0xf8] sm:$0xff]
          %v949 = vpack.c.bf16 %v915, %v913
          %v950 = vpack.c.bf16 %v916, %v914
          %v951 = vpack.c.bf16 %v918, %v917
          %v952 = vpack.c.bf16 %v920, %v919
          %v953 = vpack.c.bf16 %v922, %v921
          %v954 = vpack.c.bf16 %v924, %v923
          %v955 = vpack.c.bf16 %v926, %v925
          %v956 = vpack.c.bf16 %v928, %v927
          %v957 = vpack.c.bf16 %v930, %v929
          %v958 = vpack.c.bf16 %v932, %v931
          %v959 = vpack.c.bf16 %v934, %v933
          %v960 = vpack.c.bf16 %v936, %v935
          %v961 = vpack.c.bf16 %v938, %v937
          %v962 = vpack.c.bf16 %v940, %v939
          %v963 = vpack.c.bf16 %v942, %v941
          %v964 = vpack.c.bf16 %v944, %v943
          %v965 = vpack.c.bf16 %v946, %v945
          %v966 = vpack.c.bf16 %v948, %v947
          %v967 = vld [vmem:[%s2] sm:$0x1]
          %v969 = vperm.slane %v967, 0
          %971 = vmatpush.bf16.msra.mxu0 %v958
          %972 = vmatpush.bf16.msra.mxu0 %v957
          %973 = vmatpush.bf16.msra.mxu0 %v956
          %974 = vmatpush.bf16.msra.mxu0 %v955
          %975 = vmatpush.bf16.msra.mxu0 %v954
          %976 = vmatpush.bf16.msra.mxu0 %v953
          %977 = vmatpush.bf16.msra.mxu0 %v952
          %978 = vmatpush.bf16.msra.mxu0 %v951
          %979 = vmatmul.bf16.gmra.mxu0 %v949
          %v980 = vpop.f32.mrf.mxu0
          %v981 = vadd.f32 %v969, %v980
          %v982 = vpop.f32.mrf.mxu0
          %v983 = vadd.f32 %v969, %v982
          %984 = vdwg.mxu0
          %985 = vmatpush.bf16.msra.mxu0 %v966
          %986 = vmatpush.bf16.msra.mxu0 %v965
          %987 = vmatpush.bf16.msra.mxu0 %v964
          %988 = vmatpush.bf16.msra.mxu0 %v963
          %989 = vmatpush.bf16.msra.mxu0 %v962
          %990 = vmatpush.bf16.msra.mxu0 %v961
          %991 = vmatpush.bf16.msra.mxu0 %v960
          %992 = vmatpush.bf16.msra.mxu0 %v959
          %993 = vmatmul.bf16.gmra.mxu0 %v950
          %v994 = vpop.f32.mrf.mxu0
          %v995 = vadd.f32 %v981, %v994
          %v996 = vpop.f32.mrf.mxu0
          %v997 = vadd.f32 %v983, %v996
          %998 = vdwg.mxu0
          %v999 = vld [vmem:[%s4] sm:$0xff]
          %v1000 = vld [vmem:[%s4 + $0x8] sm:$0xff]
          %v1001 = vld [vmem:[%s4 + $0x10] sm:$0x1]
          %v1002 = vld [vmem:[%s3] sm:$0x1]
          %v1003 = vadd.f32 %v1002, %v999
          %vm1004 = vcmask 253952
          %1005 = vst.msk [vmem:[#allocation2] sm:$0x1] %vm1004, %v1003
          %vm1009 = vcmask 1046528
          %v1010 = vrot.slane %v999, 1
          %v1011 = vrot.slane %v1000, 1
          %v1012 = vsel %vm1009, %v1010, %v1011
          %v1013 = vrot.slane %v1001, 1
          %v1014 = vsel %vm1009, %v1011, %v1013
          %v1017 = vadd.f32 %v995, %v1012
          %v1018 = vadd.f32 %v997, %v1014
          %vm1019 = vcmask 261120
          %1020 = vst.msk [vmem:[#allocation2 + $0x1] sm:$0xff] %vm1019, %v1017
          %1021 = vst.msk [vmem:[#allocation2 + $0x9] sm:$0xff] %vm1019, %v1018
          %vm1022 = vcmask 260096
          %1023 = vst.msk [vmem:[#allocation2 + $0x11] sm:$0x7f] %vm1022, 0.0
        $region116: #{chaos_vit_forward.1} parent=107 // pred_fallthru
          _
        %v1024 = vlaneseq
        %v1025 = vand.u32 %v1024, 127
        %vm1026 = vcmp.lt.s32.totalorder %v1025, 17
        %v1027 = vsel %vm1026, 0.0, -1e+09
        %v1028 = vld [vmem:[#allocation2] sm:$0xff]
        %v1029 = vld [vmem:[#allocation2 + $0x8] sm:$0xff]
        %v1030 = vld [vmem:[#allocation2 + $0x10] sm:$0xff]
        %v1031 = vld [vmem:[%s860] sm:$0x1]
        %v1032 = vld [vmem:[%s863] sm:$0x1]
        %vm1033 = vcmask 261120
        %v1034 = vsel %vm1033, %v1028, 0.0
        %1035 = vadd.xlane.f32.xlu0 %v1034
        %v1036 = vpop.xlane.xlu0 %1035
        %v1037 = vsel %vm1033, %v1029, 0.0
        %1038 = vadd.xlane.f32.xlu0 %v1037
        %v1039 = vpop.xlane.xlu0 %1038
        %v1040 = vsel %vm1033, %v1030, 0.0
        %1041 = vadd.xlane.f32.xlu0 %v1040
        %v1042 = vpop.xlane.xlu0 %1041
        %v1043 = vrcp.pop 32.0
        %v1044 = vmul.f32 32.0, %v1043
        %v1045 = vsub.f32 1.0, %v1044
        %v1046 = vmul.f32 %v1043, %v1045
        %v1047 = vadd.f32 %v1043, %v1046
        %vm1048 = vweird.f32 %v1043
        %v1049 = vsel %vm1048, %v1043, %v1047
        %v1050 = vmul.f32 %v1036, %v1049
        %v1051 = vmul.f32 %v1039, %v1049
        %v1052 = vmul.f32 %v1042, %v1049
        %v1053 = vsub.f32 %v1028, %v1050
        %v1054 = vsub.f32 %v1029, %v1051
        %v1055 = vsub.f32 %v1030, %v1052
        %v1056 = vmul.f32 %v1053, %v1053
        %v1057 = vmul.f32 %v1054, %v1054
        %v1058 = vmul.f32 %v1055, %v1055
        %v1059 = vsel %vm1033, %v1056, 0.0
        %1060 = vadd.xlane.f32.xlu0 %v1059
        %v1061 = vpop.xlane.xlu0 %1060
        %v1062 = vsel %vm1033, %v1057, 0.0
        %1063 = vadd.xlane.f32.xlu0 %v1062
        %v1064 = vpop.xlane.xlu0 %1063
        %v1065 = vsel %vm1033, %v1058, 0.0
        %1066 = vadd.xlane.f32.xlu0 %v1065
        %v1067 = vpop.xlane.xlu0 %1066
        %v1068 = vmul.f32 %v1061, %v1049
        %v1069 = vmul.f32 %v1064, %v1049
        %v1070 = vmul.f32 %v1067, %v1049
        %v1071 = vadd.f32 %v1068, 1e-05
        %v1072 = vadd.f32 %v1069, 1e-05
        %v1073 = vadd.f32 %v1070, 1e-05
        %v1074 = vrsqrt.pop %v1071
        %v1075 = vmul.f32 %v1074, %v1071
        %v1076 = vmul.f32 %v1075, %v1074
        %v1077 = vmul.f32 0.5, %v1076
        %v1078 = vsub.f32 1.5, %v1077
        %v1079 = vmul.f32 %v1074, %v1078
        %vm1080 = vweird.f32 %v1071
        %vm1081 = vweird.f32 %v1074
        %vm1082 = vmor %vm1080, %vm1081
        %v1083 = vsel %vm1082, %v1074, %v1079
        %v1084 = vrsqrt.pop %v1072
        %v1085 = vmul.f32 %v1084, %v1072
        %v1086 = vmul.f32 %v1085, %v1084
        %v1087 = vmul.f32 0.5, %v1086
        %v1088 = vsub.f32 1.5, %v1087
        %v1089 = vmul.f32 %v1084, %v1088
        %vm1090 = vweird.f32 %v1072
        %vm1091 = vweird.f32 %v1084
        %vm1092 = vmor %vm1090, %vm1091
        %v1093 = vsel %vm1092, %v1084, %v1089
        %v1094 = vrsqrt.pop %v1073
        %v1095 = vmul.f32 %v1094, %v1073
        %v1096 = vmul.f32 %v1095, %v1094
        %v1097 = vmul.f32 0.5, %v1096
        %v1098 = vsub.f32 1.5, %v1097
        %v1099 = vmul.f32 %v1094, %v1098
        %vm1100 = vweird.f32 %v1073
        %vm1101 = vweird.f32 %v1094
        %vm1102 = vmor %vm1100, %vm1101
        %v1103 = vsel %vm1102, %v1094, %v1099
        %v1104 = vmul.f32 %v1053, %v1083
        %v1105 = vmul.f32 %v1054, %v1093
        %v1106 = vmul.f32 %v1055, %v1103
        %v1108 = vperm.slane %v1031, 0
        %v1110 = vmul.f32 %v1104, %v1108
        %v1111 = vmul.f32 %v1105, %v1108
        %v1112 = vmul.f32 %v1106, %v1108
        %v1114 = vperm.slane %v1032, 0
        %v1116 = vadd.f32 %v1110, %v1114
        %v1117 = vadd.f32 %v1111, %v1114
        %v1118 = vadd.f32 %v1112, %v1114
        %v1119 = vld [vmem:[%s868] sm:$0xff]
        %v1120 = vld [vmem:[%s868 + $0x8] sm:$0xff]
        %v1121 = vld [vmem:[%s868 + $0x10] sm:$0xff]
        %v1122 = vld [vmem:[%s868 + $0x18] sm:$0xff]
        %v1123 = vpack.c.bf16 %v1117, %v1116
        %v1124 = vpack.c.bf16 %v1118, %v1118
        %v1125 = vpack.c.bf16 %v1120, %v1119
        %v1126 = vpack.c.bf16 %v1122, %v1121
        %v1127 = vld [vmem:[%s871] sm:$0x1]
        %v1129 = vperm.slane %v1127, 0
        %v1132 = vsel %vm1033, %v1123, 0
        %v1135 = vsel %vm1033, %v1124, 0
        %1137 = vmatpush.bf16.msra.mxu0 0
        %1138 = vmatpush.bf16.msra.mxu0 0
        %1139 = vmatpush.bf16.msra.mxu0 0
        %1140 = vmatpush.bf16.msra.mxu0 0
        %1141 = vmatpush.bf16.msra.mxu0 0
        %1142 = vmatpush.bf16.msra.mxu0 0
        %1143 = vmatpush.bf16.msra.mxu0 %v1126
        %1144 = vmatpush.bf16.msra.mxu0 %v1125
        %1145 = vmatmul.bf16.gmra.mxu0 %v1132
        %v1146 = vpop.f32.mrf.mxu0
        %v1147 = vadd.f32 %v1129, %v1146
        %v1148 = vpop.f32.mrf.mxu0
        %v1149 = vadd.f32 %v1129, %v1148
        %1150 = vmatmul.bf16.gmra.mxu0 %v1135
        %v1151 = vpop.f32.mrf.mxu0
        %v1152 = vadd.f32 %v1129, %v1151
        %v1153 = vpop.f32.mrf.mxu0
        %1154 = vdwg.mxu0
        %v1155 = vld [vmem:[%s876] sm:$0xff]
        %v1156 = vld [vmem:[%s876 + $0x8] sm:$0xff]
        %v1157 = vld [vmem:[%s876 + $0x10] sm:$0xff]
        %v1158 = vld [vmem:[%s876 + $0x18] sm:$0xff]
        %1162 = vrot.lane.b32.xlu0 %v1147, 96
        %v1163 = vpop.permute.xlu0 %1162
        %1164 = vrot.lane.b32.xlu0 %v1149, 96
        %v1165 = vpop.permute.xlu0 %1164
        %1166 = vrot.lane.b32.xlu0 %v1152, 96
        %v1167 = vpop.permute.xlu0 %1166
        %vm1168 = vcmask 64512
        %v1169 = vsel %vm1168, %v1147, 0
        %v1171 = vsel %vm1168, %v1149, 0
        %v1173 = vsel %vm1168, %v1152, 0
        %v1175 = vsel %vm1168, %v1163, 0
        %v1177 = vsel %vm1168, %v1165, 0
        %v1179 = vsel %vm1168, %v1167, 0
        %1181 = vmatpush.xpose.msra.mxu0 0.0
        %1182 = vmatpush.xpose.msra.mxu0 0.0
        %1183 = vmatpush.xpose.msra.mxu0 0.0
        %1184 = vmatpush.xpose.msra.mxu0 0.0
        %1185 = vmatpush.xpose.msra.mxu0 0.0
        %1186 = vmatpush.xpose.msra.mxu0 0.0
        %1187 = vmatpush.xpose.msra.mxu0 0.0
        %1188 = vmatpush.xpose.msra.mxu0 0.0
        %1189 = vmatpush.xpose.msra.mxu0 0.0
        %1190 = vmatpush.xpose.msra.mxu0 0.0
        %1191 = vmatpush.xpose.msra.mxu0 0.0
        %1192 = vmatpush.xpose.msra.mxu0 0.0
        %1193 = vmatpush.xpose.msra.mxu0 0.0
        %1194 = vmatpush.xpose.msra.mxu0 %v1179
        %1195 = vmatpush.xpose.msra.mxu0 %v1177
        %1196 = vmatpush.xpose.msra.mxu0 %v1175
        %1197 = vmatmul.f32.gmra.mxu0 %v1169
        %v1198 = vpop.f32.mrf.mxu0
        %v1199 = vadd.f32 0.0, %v1198
        %1200 = vmatmul.f32.gmra.mxu0 %v1171
        %v1201 = vpop.f32.mrf.mxu0
        %v1202 = vadd.f32 0.0, %v1201
        %1203 = vmatmul.f32.gmra.mxu0 %v1173
        %v1204 = vpop.f32.mrf.mxu0
        %v1205 = vadd.f32 0.0, %v1204
        %1206 = vdwg.mxu0
        %v1207 = vmul.f32 %v1199, 0.35355338
        %v1208 = vmul.f32 %v1202, 0.35355338
        %v1209 = vmul.f32 %v1205, 0.35355338
        %v1210 = vadd.f32 %v1207, %v1027
        %v1211 = vadd.f32 %v1208, %v1027
        %v1212 = vadd.f32 %v1209, %v1027
        %vm1213 = vcmask 195584
        %v1214 = vsel %vm1213, %v1210, -inf
        %1215 = vmax.xlane.f32.xlu0 %v1214
        %v1216 = vpop.xlane.xlu0 %1215
        %v1217 = vsel %vm1213, %v1211, -inf
        %1218 = vmax.xlane.f32.xlu0 %v1217
        %v1219 = vpop.xlane.xlu0 %1218
        %v1220 = vsel %vm1213, %v1212, -inf
        %1221 = vmax.xlane.f32.xlu0 %v1220
        %v1222 = vpop.xlane.xlu0 %1221
        %v1223 = vsub.f32 %v1210, %v1216
        %v1224 = vsub.f32 %v1211, %v1219
        %v1225 = vsub.f32 %v1212, %v1222
        %v1226 = vmul.f32 %v1223, 1.442695
        %v1227 = vpow.pop %v1226
        %v1228 = vmul.f32 %v1224, 1.442695
        %v1229 = vpow.pop %v1228
        %v1230 = vmul.f32 %v1225, 1.442695
        %v1231 = vpow.pop %v1230
        %v1232 = vsel %vm1213, %v1227, 0.0
        %1233 = vadd.xlane.f32.xlu0 %v1232
        %v1234 = vpop.xlane.xlu0 %1233
        %v1235 = vsel %vm1213, %v1229, 0.0
        %1236 = vadd.xlane.f32.xlu0 %v1235
        %v1237 = vpop.xlane.xlu0 %1236
        %v1238 = vsel %vm1213, %v1231, 0.0
        %1239 = vadd.xlane.f32.xlu0 %v1238
        %v1240 = vpop.xlane.xlu0 %1239
        %v1241 = vrcp.pop %v1234
        %v1242 = vmul.f32 %v1234, %v1241
        %v1243 = vsub.f32 1.0, %v1242
        %v1244 = vmul.f32 %v1241, %v1243
        %v1245 = vadd.f32 %v1241, %v1244
        %vm1246 = vweird.f32 %v1234
        %vm1247 = vweird.f32 %v1241
        %vm1248 = vmor %vm1246, %vm1247
        %v1249 = vsel %vm1248, %v1241, %v1245
        %v1250 = vand.u32 2147483647, %v1234
        %vm1251 = vcmp.eq.f32.partialorder %v1250, 8.507059e+37
        %v1252 = vand.u32 %v1234, 2147483648
        %v1253 = vor.u32 1.1754944e-38, %v1252
        %v1254 = vsel %vm1251, %v1253, %v1249
        %v1255 = vmul.f32 %v1227, %v1254
        %v1256 = vrcp.pop %v1237
        %v1257 = vmul.f32 %v1237, %v1256
        %v1258 = vsub.f32 1.0, %v1257
        %v1259 = vmul.f32 %v1256, %v1258
        %v1260 = vadd.f32 %v1256, %v1259
        %vm1261 = vweird.f32 %v1237
        %vm1262 = vweird.f32 %v1256
        %vm1263 = vmor %vm1261, %vm1262
        %v1264 = vsel %vm1263, %v1256, %v1260
        %v1265 = vand.u32 2147483647, %v1237
        %vm1266 = vcmp.eq.f32.partialorder %v1265, 8.507059e+37
        %v1267 = vand.u32 %v1237, 2147483648
        %v1268 = vor.u32 1.1754944e-38, %v1267
        %v1269 = vsel %vm1266, %v1268, %v1264
        %v1270 = vmul.f32 %v1229, %v1269
        %v1271 = vrcp.pop %v1240
        %v1272 = vmul.f32 %v1240, %v1271
        %v1273 = vsub.f32 1.0, %v1272
        %v1274 = vmul.f32 %v1271, %v1273
        %v1275 = vadd.f32 %v1271, %v1274
        %vm1276 = vweird.f32 %v1240
        %vm1277 = vweird.f32 %v1271
        %vm1278 = vmor %vm1276, %vm1277
        %v1279 = vsel %vm1278, %v1271, %v1275
        %v1280 = vand.u32 2147483647, %v1240
        %vm1281 = vcmp.eq.f32.partialorder %v1280, 8.507059e+37
        %v1282 = vand.u32 %v1240, 2147483648
        %v1283 = vor.u32 1.1754944e-38, %v1282
        %v1284 = vsel %vm1281, %v1283, %v1279
        %v1285 = vmul.f32 %v1231, %v1284
        %s1286 = smul.u32 %s39, 128
        %s1287 = sld [smem:[#allocation4 + %s1286]]
        %v1288 = vstv %s1287
        %v1289 = vmul.f32 %v1288, %v1255
        %v1290 = vmul.f32 %v1288, %v1270
        %v1291 = vmul.f32 %v1288, %v1285
        %v1292 = vsub.f32 1.0, %v1255
        %v1293 = vsub.f32 1.0, %v1270
        %v1294 = vsub.f32 1.0, %v1285
        %v1295 = vmul.f32 %v1289, %v1292
        %v1296 = vmul.f32 %v1290, %v1293
        %v1297 = vmul.f32 %v1291, %v1294
        %v1298 = vmul.f32 %v1288, %v1295
        %v1299 = vmul.f32 %v1288, %v1296
        %v1300 = vmul.f32 %v1288, %v1297
        %v1301 = vsub.f32 1.0, %v1295
        %v1302 = vsub.f32 1.0, %v1296
        %v1303 = vsub.f32 1.0, %v1297
        %v1304 = vmul.f32 %v1298, %v1301
        %v1305 = vmul.f32 %v1299, %v1302
        %v1306 = vmul.f32 %v1300, %v1303
        %v1307 = vmul.f32 %v1288, %v1304
        %v1308 = vmul.f32 %v1288, %v1305
        %v1309 = vmul.f32 %v1288, %v1306
        %v1310 = vsub.f32 1.0, %v1304
        %v1311 = vsub.f32 1.0, %v1305
        %v1312 = vsub.f32 1.0, %v1306
        %v1313 = vmul.f32 %v1307, %v1310
        %v1314 = vmul.f32 %v1308, %v1311
        %v1315 = vmul.f32 %v1309, %v1312
        %v1316 = vmul.f32 %v1288, %v1313
        %v1317 = vmul.f32 %v1288, %v1314
        %v1318 = vmul.f32 %v1288, %v1315
        %v1319 = vsub.f32 1.0, %v1313
        %v1320 = vsub.f32 1.0, %v1314
        %v1321 = vsub.f32 1.0, %v1315
        %v1322 = vmul.f32 %v1316, %v1319
        %v1323 = vmul.f32 %v1317, %v1320
        %v1324 = vmul.f32 %v1318, %v1321
        %v1325 = vmul.f32 %v1288, %v1322
        %v1326 = vmul.f32 %v1288, %v1323
        %v1327 = vmul.f32 %v1288, %v1324
        %v1328 = vsub.f32 1.0, %v1322
        %v1329 = vsub.f32 1.0, %v1323
        %v1330 = vsub.f32 1.0, %v1324
        %v1331 = vmul.f32 %v1325, %v1328
        %v1332 = vmul.f32 %v1326, %v1329
        %v1333 = vmul.f32 %v1327, %v1330
        %v1334 = vadd.f32 %v1331, %v1027
        %v1335 = vadd.f32 %v1332, %v1027
        %v1336 = vadd.f32 %v1333, %v1027
        %v1337 = vsel %vm1213, %v1334, -inf
        %1338 = vmax.xlane.f32.xlu0 %v1337
        %v1339 = vpop.xlane.xlu0 %1338
        %v1340 = vsel %vm1213, %v1335, -inf
        %1341 = vmax.xlane.f32.xlu0 %v1340
        %v1342 = vpop.xlane.xlu0 %1341
        %v1343 = vsel %vm1213, %v1336, -inf
        %1344 = vmax.xlane.f32.xlu0 %v1343
        %v1345 = vpop.xlane.xlu0 %1344
        %v1346 = vsub.f32 %v1334, %v1339
        %v1347 = vsub.f32 %v1335, %v1342
        %v1348 = vsub.f32 %v1336, %v1345
        %v1349 = vmul.f32 %v1346, 1.442695
        %v1350 = vpow.pop %v1349
        %v1351 = vmul.f32 %v1347, 1.442695
        %v1352 = vpow.pop %v1351
        %v1353 = vmul.f32 %v1348, 1.442695
        %v1354 = vpow.pop %v1353
        %v1355 = vsel %vm1213, %v1350, 0.0
        %1356 = vadd.xlane.f32.xlu0 %v1355
        %v1357 = vpop.xlane.xlu0 %1356
        %v1358 = vsel %vm1213, %v1352, 0.0
        %1359 = vadd.xlane.f32.xlu0 %v1358
        %v1360 = vpop.xlane.xlu0 %1359
        %v1361 = vsel %vm1213, %v1354, 0.0
        %1362 = vadd.xlane.f32.xlu0 %v1361
        %v1363 = vpop.xlane.xlu0 %1362
        %v1364 = vrcp.pop %v1357
        %v1365 = vrcp.pop %v1360
        %v1366 = vrcp.pop %v1363
        %v1367 = vmul.f32 %v1350, %v1364
        %v1368 = vmul.f32 %v1352, %v1365
        %v1369 = vmul.f32 %v1354, %v1366
        %v1370 = vpack.c.bf16 %v1368, %v1367
        %v1371 = vpack.c.bf16 %v1369, %v1369
        %v1372 = vpack.c.bf16 %v1149, %v1147
        %v1373 = vpack.c.bf16 %v1152, %v1152
        %1376 = vrot.lane.b32.xlu0 %v1372, 64
        %v1377 = vpop.permute.xlu0 %1376
        %1378 = vrot.lane.b32.xlu0 %v1373, 64
        %v1379 = vpop.permute.xlu0 %1378
        %v1382 = vsel %vm1213, %v1370, 0
        %v1385 = vsel %vm1213, %v1371, 0
        %vm1387 = vcmask 1043456
        %v1389 = vsel %vm1387, %v1379, 0
        %1391 = vmatpush.bf16.msra.mxu0 0
        %1392 = vmatpush.bf16.msra.mxu0 0
        %1393 = vmatpush.bf16.msra.mxu0 0
        %1394 = vmatpush.bf16.msra.mxu0 0
        %1395 = vmatpush.bf16.msra.mxu0 0
        %1396 = vmatpush.bf16.msra.mxu0 0
        %1397 = vmatpush.bf16.msra.mxu0 %v1389
        %1398 = vmatpush.bf16.msra.mxu0 %v1377
        %1399 = vmatmul.bf16.gmra.mxu0 %v1382
        %v1400 = vpop.f32.mrf.mxu0
        %v1401 = vadd.f32 0.0, %v1400
        %v1402 = vpop.f32.mrf.mxu0
        %v1403 = vadd.f32 0.0, %v1402
        %1404 = vmatmul.bf16.gmra.mxu0 %v1385
        %v1405 = vpop.f32.mrf.mxu0
        %v1406 = vadd.f32 0.0, %v1405
        %v1407 = vpop.f32.mrf.mxu0
        %1408 = vdwg.mxu0
        %1409 = vst.msk [vmem:[#allocation3] sm:$0xff] %vm1168, %v1401
        %1410 = vst.msk [vmem:[#allocation3 + $0x8] sm:$0xff] %vm1168, %v1403
        %1411 = vst.msk [vmem:[#allocation3 + $0x10] sm:$0xff] %vm1168, %v1406
        %1412 = vrot.lane.b32.xlu0 %v1147, 120
        %v1413 = vpop.permute.xlu0 %1412
        %1414 = vrot.lane.b32.xlu0 %v1149, 120
        %v1415 = vpop.permute.xlu0 %1414
        %1416 = vrot.lane.b32.xlu0 %v1152, 120
        %v1417 = vpop.permute.xlu0 %1416
        %1418 = vrot.lane.b32.xlu0 %v1147, 88
        %v1419 = vpop.permute.xlu0 %1418
        %1420 = vrot.lane.b32.xlu0 %v1149, 88
        %v1421 = vpop.permute.xlu0 %1420
        %1422 = vrot.lane.b32.xlu0 %v1152, 88
        %v1423 = vpop.permute.xlu0 %1422
        %v1424 = vsel %vm1168, %v1413, 0
        %v1426 = vsel %vm1168, %v1415, 0
        %v1428 = vsel %vm1168, %v1417, 0
        %v1430 = vsel %vm1168, %v1419, 0
        %v1432 = vsel %vm1168, %v1421, 0
        %v1434 = vsel %vm1168, %v1423, 0
        %1436 = vmatpush.xpose.msra.mxu0 0.0
        %1437 = vmatpush.xpose.msra.mxu0 0.0
        %1438 = vmatpush.xpose.msra.mxu0 0.0
        %1439 = vmatpush.xpose.msra.mxu0 0.0
        %1440 = vmatpush.xpose.msra.mxu0 0.0
        %1441 = vmatpush.xpose.msra.mxu0 0.0
        %1442 = vmatpush.xpose.msra.mxu0 0.0
        %1443 = vmatpush.xpose.msra.mxu0 0.0
        %1444 = vmatpush.xpose.msra.mxu0 0.0
        %1445 = vmatpush.xpose.msra.mxu0 0.0
        %1446 = vmatpush.xpose.msra.mxu0 0.0
        %1447 = vmatpush.xpose.msra.mxu0 0.0
        %1448 = vmatpush.xpose.msra.mxu0 0.0
        %1449 = vmatpush.xpose.msra.mxu0 %v1434
        %1450 = vmatpush.xpose.msra.mxu0 %v1432
        %1451 = vmatpush.xpose.msra.mxu0 %v1430
        %1452 = vmatmul.f32.gmra.mxu0 %v1424
        %v1453 = vpop.f32.mrf.mxu0
        %v1454 = vadd.f32 0.0, %v1453
        %1455 = vmatmul.f32.gmra.mxu0 %v1426
        %v1456 = vpop.f32.mrf.mxu0
        %v1457 = vadd.f32 0.0, %v1456
        %1458 = vmatmul.f32.gmra.mxu0 %v1428
        %v1459 = vpop.f32.mrf.mxu0
        %v1460 = vadd.f32 0.0, %v1459
        %1461 = vdwg.mxu0
        %v1462 = vmul.f32 %v1454, 0.35355338
        %v1463 = vmul.f32 %v1457, 0.35355338
        %v1464 = vmul.f32 %v1460, 0.35355338
        %v1465 = vadd.f32 %v1462, %v1027
        %v1466 = vadd.f32 %v1463, %v1027
        %v1467 = vadd.f32 %v1464, %v1027
        %v1468 = vsel %vm1213, %v1465, -inf
        %1469 = vmax.xlane.f32.xlu0 %v1468
        %v1470 = vpop.xlane.xlu0 %1469
        %v1471 = vsel %vm1213, %v1466, -inf
        %1472 = vmax.xlane.f32.xlu0 %v1471
        %v1473 = vpop.xlane.xlu0 %1472
        %v1474 = vsel %vm1213, %v1467, -inf
        %1475 = vmax.xlane.f32.xlu0 %v1474
        %v1476 = vpop.xlane.xlu0 %1475
        %v1477 = vsub.f32 %v1465, %v1470
        %v1478 = vsub.f32 %v1466, %v1473
        %v1479 = vsub.f32 %v1467, %v1476
        %v1480 = vmul.f32 %v1477, 1.442695
        %v1481 = vpow.pop %v1480
        %v1482 = vmul.f32 %v1478, 1.442695
        %v1483 = vpow.pop %v1482
        %v1484 = vmul.f32 %v1479, 1.442695
        %v1485 = vpow.pop %v1484
        %v1486 = vsel %vm1213, %v1481, 0.0
        %1487 = vadd.xlane.f32.xlu0 %v1486
        %v1488 = vpop.xlane.xlu0 %1487
        %v1489 = vsel %vm1213, %v1483, 0.0
        %1490 = vadd.xlane.f32.xlu0 %v1489
        %v1491 = vpop.xlane.xlu0 %1490
        %v1492 = vsel %vm1213, %v1485, 0.0
        %1493 = vadd.xlane.f32.xlu0 %v1492
        %v1494 = vpop.xlane.xlu0 %1493
        %v1495 = vrcp.pop %v1488
        %v1496 = vmul.f32 %v1488, %v1495
        %v1497 = vsub.f32 1.0, %v1496
        %v1498 = vmul.f32 %v1495, %v1497
        %v1499 = vadd.f32 %v1495, %v1498
        %vm1500 = vweird.f32 %v1488
        %vm1501 = vweird.f32 %v1495
        %vm1502 = vmor %vm1500, %vm1501
        %v1503 = vsel %vm1502, %v1495, %v1499
        %v1504 = vand.u32 2147483647, %v1488
        %vm1505 = vcmp.eq.f32.partialorder %v1504, 8.507059e+37
        %v1506 = vand.u32 %v1488, 2147483648
        %v1507 = vor.u32 1.1754944e-38, %v1506
        %v1508 = vsel %vm1505, %v1507, %v1503
        %v1509 = vmul.f32 %v1481, %v1508
        %v1510 = vrcp.pop %v1491
        %v1511 = vmul.f32 %v1491, %v1510
        %v1512 = vsub.f32 1.0, %v1511
        %v1513 = vmul.f32 %v1510, %v1512
        %v1514 = vadd.f32 %v1510, %v1513
        %vm1515 = vweird.f32 %v1491
        %vm1516 = vweird.f32 %v1510
        %vm1517 = vmor %vm1515, %vm1516
        %v1518 = vsel %vm1517, %v1510, %v1514
        %v1519 = vand.u32 2147483647, %v1491
        %vm1520 = vcmp.eq.f32.partialorder %v1519, 8.507059e+37
        %v1521 = vand.u32 %v1491, 2147483648
        %v1522 = vor.u32 1.1754944e-38, %v1521
        %v1523 = vsel %vm1520, %v1522, %v1518
        %v1524 = vmul.f32 %v1483, %v1523
        %v1525 = vrcp.pop %v1494
        %v1526 = vmul.f32 %v1494, %v1525
        %v1527 = vsub.f32 1.0, %v1526
        %v1528 = vmul.f32 %v1525, %v1527
        %v1529 = vadd.f32 %v1525, %v1528
        %vm1530 = vweird.f32 %v1494
        %vm1531 = vweird.f32 %v1525
        %vm1532 = vmor %vm1530, %vm1531
        %v1533 = vsel %vm1532, %v1525, %v1529
        %v1534 = vand.u32 2147483647, %v1494
        %vm1535 = vcmp.eq.f32.partialorder %v1534, 8.507059e+37
        %v1536 = vand.u32 %v1494, 2147483648
        %v1537 = vor.u32 1.1754944e-38, %v1536
        %v1538 = vsel %vm1535, %v1537, %v1533
        %v1539 = vmul.f32 %v1485, %v1538
        %s1540 = sadd.s32 %s1286, 1
        %s1541 = sld [smem:[#allocation4 + %s1540]]
        %v1542 = vstv %s1541
        %v1543 = vmul.f32 %v1542, %v1509
        %v1544 = vmul.f32 %v1542, %v1524
        %v1545 = vmul.f32 %v1542, %v1539
        %v1546 = vsub.f32 1.0, %v1509
        %v1547 = vsub.f32 1.0, %v1524
        %v1548 = vsub.f32 1.0, %v1539
        %v1549 = vmul.f32 %v1543, %v1546
        %v1550 = vmul.f32 %v1544, %v1547
        %v1551 = vmul.f32 %v1545, %v1548
        %v1552 = vmul.f32 %v1542, %v1549
        %v1553 = vmul.f32 %v1542, %v1550
        %v1554 = vmul.f32 %v1542, %v1551
        %v1555 = vsub.f32 1.0, %v1549
        %v1556 = vsub.f32 1.0, %v1550
        %v1557 = vsub.f32 1.0, %v1551
        %v1558 = vmul.f32 %v1552, %v1555
        %v1559 = vmul.f32 %v1553, %v1556
        %v1560 = vmul.f32 %v1554, %v1557
        %v1561 = vmul.f32 %v1542, %v1558
        %v1562 = vmul.f32 %v1542, %v1559
        %v1563 = vmul.f32 %v1542, %v1560
        %v1564 = vsub.f32 1.0, %v1558
        %v1565 = vsub.f32 1.0, %v1559
        %v1566 = vsub.f32 1.0, %v1560
        %v1567 = vmul.f32 %v1561, %v1564
        %v1568 = vmul.f32 %v1562, %v1565
        %v1569 = vmul.f32 %v1563, %v1566
        %v1570 = vmul.f32 %v1542, %v1567
        %v1571 = vmul.f32 %v1542, %v1568
        %v1572 = vmul.f32 %v1542, %v1569
        %v1573 = vsub.f32 1.0, %v1567
        %v1574 = vsub.f32 1.0, %v1568
        %v1575 = vsub.f32 1.0, %v1569
        %v1576 = vmul.f32 %v1570, %v1573
        %v1577 = vmul.f32 %v1571, %v1574
        %v1578 = vmul.f32 %v1572, %v1575
        %v1579 = vmul.f32 %v1542, %v1576
        %v1580 = vmul.f32 %v1542, %v1577
        %v1581 = vmul.f32 %v1542, %v1578
        %v1582 = vsub.f32 1.0, %v1576
        %v1583 = vsub.f32 1.0, %v1577
        %v1584 = vsub.f32 1.0, %v1578
        %v1585 = vmul.f32 %v1579, %v1582
        %v1586 = vmul.f32 %v1580, %v1583
        %v1587 = vmul.f32 %v1581, %v1584
        %v1588 = vadd.f32 %v1585, %v1027
        %v1589 = vadd.f32 %v1586, %v1027
        %v1590 = vadd.f32 %v1587, %v1027
        %v1591 = vsel %vm1213, %v1588, -inf
        %1592 = vmax.xlane.f32.xlu0 %v1591
        %v1593 = vpop.xlane.xlu0 %1592
        %v1594 = vsel %vm1213, %v1589, -inf
        %1595 = vmax.xlane.f32.xlu0 %v1594
        %v1596 = vpop.xlane.xlu0 %1595
        %v1597 = vsel %vm1213, %v1590, -inf
        %1598 = vmax.xlane.f32.xlu0 %v1597
        %v1599 = vpop.xlane.xlu0 %1598
        %v1600 = vsub.f32 %v1588, %v1593
        %v1601 = vsub.f32 %v1589, %v1596
        %v1602 = vsub.f32 %v1590, %v1599
        %v1603 = vmul.f32 %v1600, 1.442695
        %v1604 = vpow.pop %v1603
        %v1605 = vmul.f32 %v1601, 1.442695
        %v1606 = vpow.pop %v1605
        %v1607 = vmul.f32 %v1602, 1.442695
        %v1608 = vpow.pop %v1607
        %v1609 = vsel %vm1213, %v1604, 0.0
        %1610 = vadd.xlane.f32.xlu0 %v1609
        %v1611 = vpop.xlane.xlu0 %1610
        %v1612 = vsel %vm1213, %v1606, 0.0
        %1613 = vadd.xlane.f32.xlu0 %v1612
        %v1614 = vpop.xlane.xlu0 %1613
        %v1615 = vsel %vm1213, %v1608, 0.0
        %1616 = vadd.xlane.f32.xlu0 %v1615
        %v1617 = vpop.xlane.xlu0 %1616
        %v1618 = vrcp.pop %v1611
        %v1619 = vrcp.pop %v1614
        %v1620 = vrcp.pop %v1617
        %v1621 = vmul.f32 %v1604, %v1618
        %v1622 = vmul.f32 %v1606, %v1619
        %v1623 = vmul.f32 %v1608, %v1620
        %v1624 = vpack.c.bf16 %v1622, %v1621
        %v1625 = vpack.c.bf16 %v1623, %v1623
        %1626 = vrot.lane.b32.xlu0 %v1372, 56
        %v1627 = vpop.permute.xlu0 %1626
        %1628 = vrot.lane.b32.xlu0 %v1373, 56
        %v1629 = vpop.permute.xlu0 %1628
        %v1632 = vsel %vm1213, %v1624, 0
        %v1635 = vsel %vm1213, %v1625, 0
        %v1638 = vsel %vm1387, %v1629, 0
        %1640 = vmatpush.bf16.msra.mxu0 0
        %1641 = vmatpush.bf16.msra.mxu0 0
        %1642 = vmatpush.bf16.msra.mxu0 0
        %1643 = vmatpush.bf16.msra.mxu0 0
        %1644 = vmatpush.bf16.msra.mxu0 0
        %1645 = vmatpush.bf16.msra.mxu0 0
        %1646 = vmatpush.bf16.msra.mxu0 %v1638
        %1647 = vmatpush.bf16.msra.mxu0 %v1627
        %1648 = vmatmul.bf16.gmra.mxu0 %v1632
        %v1649 = vpop.f32.mrf.mxu0
        %v1650 = vadd.f32 0.0, %v1649
        %v1651 = vpop.f32.mrf.mxu0
        %v1652 = vadd.f32 0.0, %v1651
        %1653 = vmatmul.bf16.gmra.mxu0 %v1635
        %v1654 = vpop.f32.mrf.mxu0
        %v1655 = vadd.f32 0.0, %v1654
        %v1656 = vpop.f32.mrf.mxu0
        %1657 = vdwg.mxu0
        %1661 = vrot.lane.b32.xlu0 %v1650, 8
        %v1662 = vpop.permute.xlu0 %1661
        %1663 = vrot.lane.b32.xlu0 %v1652, 8
        %v1664 = vpop.permute.xlu0 %1663
        %1665 = vrot.lane.b32.xlu0 %v1655, 8
        %v1666 = vpop.permute.xlu0 %1665
        %vm1670 = vcmask 130112
        %1671 = vst.msk [vmem:[#allocation3] sm:$0xff] %vm1670, %v1662
        %1672 = vst.msk [vmem:[#allocation3 + $0x8] sm:$0xff] %vm1670, %v1664
        %1673 = vst.msk [vmem:[#allocation3 + $0x10] sm:$0xff] %vm1670, %v1666
        %1674 = vrot.lane.b32.xlu0 %v1147, 112
        %v1675 = vpop.permute.xlu0 %1674
        %1676 = vrot.lane.b32.xlu0 %v1149, 112
        %v1677 = vpop.permute.xlu0 %1676
        %1678 = vrot.lane.b32.xlu0 %v1152, 112
        %v1679 = vpop.permute.xlu0 %1678
        %1680 = vrot.lane.b32.xlu0 %v1147, 80
        %v1681 = vpop.permute.xlu0 %1680
        %1682 = vrot.lane.b32.xlu0 %v1149, 80
        %v1683 = vpop.permute.xlu0 %1682
        %1684 = vrot.lane.b32.xlu0 %v1152, 80
        %v1685 = vpop.permute.xlu0 %1684
        %v1686 = vsel %vm1168, %v1675, 0
        %v1688 = vsel %vm1168, %v1677, 0
        %v1690 = vsel %vm1168, %v1679, 0
        %v1692 = vsel %vm1168, %v1681, 0
        %v1694 = vsel %vm1168, %v1683, 0
        %v1696 = vsel %vm1168, %v1685, 0
        %1698 = vmatpush.xpose.msra.mxu0 0.0
        %1699 = vmatpush.xpose.msra.mxu0 0.0
        %1700 = vmatpush.xpose.msra.mxu0 0.0
        %1701 = vmatpush.xpose.msra.mxu0 0.0
        %1702 = vmatpush.xpose.msra.mxu0 0.0
        %1703 = vmatpush.xpose.msra.mxu0 0.0
        %1704 = vmatpush.xpose.msra.mxu0 0.0
        %1705 = vmatpush.xpose.msra.mxu0 0.0
        %1706 = vmatpush.xpose.msra.mxu0 0.0
        %1707 = vmatpush.xpose.msra.mxu0 0.0
        %1708 = vmatpush.xpose.msra.mxu0 0.0
        %1709 = vmatpush.xpose.msra.mxu0 0.0
        %1710 = vmatpush.xpose.msra.mxu0 0.0
        %1711 = vmatpush.xpose.msra.mxu0 %v1696
        %1712 = vmatpush.xpose.msra.mxu0 %v1694
        %1713 = vmatpush.xpose.msra.mxu0 %v1692
        %1714 = vmatmul.f32.gmra.mxu0 %v1686
        %v1715 = vpop.f32.mrf.mxu0
        %v1716 = vadd.f32 0.0, %v1715
        %1717 = vmatmul.f32.gmra.mxu0 %v1688
        %v1718 = vpop.f32.mrf.mxu0
        %v1719 = vadd.f32 0.0, %v1718
        %1720 = vmatmul.f32.gmra.mxu0 %v1690
        %v1721 = vpop.f32.mrf.mxu0
        %v1722 = vadd.f32 0.0, %v1721
        %1723 = vdwg.mxu0
        %v1724 = vmul.f32 %v1716, 0.35355338
        %v1725 = vmul.f32 %v1719, 0.35355338
        %v1726 = vmul.f32 %v1722, 0.35355338
        %v1727 = vadd.f32 %v1724, %v1027
        %v1728 = vadd.f32 %v1725, %v1027
        %v1729 = vadd.f32 %v1726, %v1027
        %v1730 = vsel %vm1213, %v1727, -inf
        %1731 = vmax.xlane.f32.xlu0 %v1730
        %v1732 = vpop.xlane.xlu0 %1731
        %v1733 = vsel %vm1213, %v1728, -inf
        %1734 = vmax.xlane.f32.xlu0 %v1733
        %v1735 = vpop.xlane.xlu0 %1734
        %v1736 = vsel %vm1213, %v1729, -inf
        %1737 = vmax.xlane.f32.xlu0 %v1736
        %v1738 = vpop.xlane.xlu0 %1737
        %v1739 = vsub.f32 %v1727, %v1732
        %v1740 = vsub.f32 %v1728, %v1735
        %v1741 = vsub.f32 %v1729, %v1738
        %v1742 = vmul.f32 %v1739, 1.442695
        %v1743 = vpow.pop %v1742
        %v1744 = vmul.f32 %v1740, 1.442695
        %v1745 = vpow.pop %v1744
        %v1746 = vmul.f32 %v1741, 1.442695
        %v1747 = vpow.pop %v1746
        %v1748 = vsel %vm1213, %v1743, 0.0
        %1749 = vadd.xlane.f32.xlu0 %v1748
        %v1750 = vpop.xlane.xlu0 %1749
        %v1751 = vsel %vm1213, %v1745, 0.0
        %1752 = vadd.xlane.f32.xlu0 %v1751
        %v1753 = vpop.xlane.xlu0 %1752
        %v1754 = vsel %vm1213, %v1747, 0.0
        %1755 = vadd.xlane.f32.xlu0 %v1754
        %v1756 = vpop.xlane.xlu0 %1755
        %v1757 = vrcp.pop %v1750
        %v1758 = vmul.f32 %v1750, %v1757
        %v1759 = vsub.f32 1.0, %v1758
        %v1760 = vmul.f32 %v1757, %v1759
        %v1761 = vadd.f32 %v1757, %v1760
        %vm1762 = vweird.f32 %v1750
        %vm1763 = vweird.f32 %v1757
        %vm1764 = vmor %vm1762, %vm1763
        %v1765 = vsel %vm1764, %v1757, %v1761
        %v1766 = vand.u32 2147483647, %v1750
        %vm1767 = vcmp.eq.f32.partialorder %v1766, 8.507059e+37
        %v1768 = vand.u32 %v1750, 2147483648
        %v1769 = vor.u32 1.1754944e-38, %v1768
        %v1770 = vsel %vm1767, %v1769, %v1765
        %v1771 = vmul.f32 %v1743, %v1770
        %v1772 = vrcp.pop %v1753
        %v1773 = vmul.f32 %v1753, %v1772
        %v1774 = vsub.f32 1.0, %v1773
        %v1775 = vmul.f32 %v1772, %v1774
        %v1776 = vadd.f32 %v1772, %v1775
        %vm1777 = vweird.f32 %v1753
        %vm1778 = vweird.f32 %v1772
        %vm1779 = vmor %vm1777, %vm1778
        %v1780 = vsel %vm1779, %v1772, %v1776
        %v1781 = vand.u32 2147483647, %v1753
        %vm1782 = vcmp.eq.f32.partialorder %v1781, 8.507059e+37
        %v1783 = vand.u32 %v1753, 2147483648
        %v1784 = vor.u32 1.1754944e-38, %v1783
        %v1785 = vsel %vm1782, %v1784, %v1780
        %v1786 = vmul.f32 %v1745, %v1785
        %v1787 = vrcp.pop %v1756
        %v1788 = vmul.f32 %v1756, %v1787
        %v1789 = vsub.f32 1.0, %v1788
        %v1790 = vmul.f32 %v1787, %v1789
        %v1791 = vadd.f32 %v1787, %v1790
        %vm1792 = vweird.f32 %v1756
        %vm1793 = vweird.f32 %v1787
        %vm1794 = vmor %vm1792, %vm1793
        %v1795 = vsel %vm1794, %v1787, %v1791
        %v1796 = vand.u32 2147483647, %v1756
        %vm1797 = vcmp.eq.f32.partialorder %v1796, 8.507059e+37
        %v1798 = vand.u32 %v1756, 2147483648
        %v1799 = vor.u32 1.1754944e-38, %v1798
        %v1800 = vsel %vm1797, %v1799, %v1795
        %v1801 = vmul.f32 %v1747, %v1800
        %s1802 = sadd.s32 %s1286, 2
        %s1803 = sld [smem:[#allocation4 + %s1802]]
        %v1804 = vstv %s1803
        %v1805 = vmul.f32 %v1804, %v1771
        %v1806 = vmul.f32 %v1804, %v1786
        %v1807 = vmul.f32 %v1804, %v1801
        %v1808 = vsub.f32 1.0, %v1771
        %v1809 = vsub.f32 1.0, %v1786
        %v1810 = vsub.f32 1.0, %v1801
        %v1811 = vmul.f32 %v1805, %v1808
        %v1812 = vmul.f32 %v1806, %v1809
        %v1813 = vmul.f32 %v1807, %v1810
        %v1814 = vmul.f32 %v1804, %v1811
        %v1815 = vmul.f32 %v1804, %v1812
        %v1816 = vmul.f32 %v1804, %v1813
        %v1817 = vsub.f32 1.0, %v1811
        %v1818 = vsub.f32 1.0, %v1812
        %v1819 = vsub.f32 1.0, %v1813
        %v1820 = vmul.f32 %v1814, %v1817
        %v1821 = vmul.f32 %v1815, %v1818
        %v1822 = vmul.f32 %v1816, %v1819
        %v1823 = vmul.f32 %v1804, %v1820
        %v1824 = vmul.f32 %v1804, %v1821
        %v1825 = vmul.f32 %v1804, %v1822
        %v1826 = vsub.f32 1.0, %v1820
        %v1827 = vsub.f32 1.0, %v1821
        %v1828 = vsub.f32 1.0, %v1822
        %v1829 = vmul.f32 %v1823, %v1826
        %v1830 = vmul.f32 %v1824, %v1827
        %v1831 = vmul.f32 %v1825, %v1828
        %v1832 = vmul.f32 %v1804, %v1829
        %v1833 = vmul.f32 %v1804, %v1830
        %v1834 = vmul.f32 %v1804, %v1831
        %v1835 = vsub.f32 1.0, %v1829
        %v1836 = vsub.f32 1.0, %v1830
        %v1837 = vsub.f32 1.0, %v1831
        %v1838 = vmul.f32 %v1832, %v1835
        %v1839 = vmul.f32 %v1833, %v1836
        %v1840 = vmul.f32 %v1834, %v1837
        %v1841 = vmul.f32 %v1804, %v1838
        %v1842 = vmul.f32 %v1804, %v1839
        %v1843 = vmul.f32 %v1804, %v1840
        %v1844 = vsub.f32 1.0, %v1838
        %v1845 = vsub.f32 1.0, %v1839
        %v1846 = vsub.f32 1.0, %v1840
        %v1847 = vmul.f32 %v1841, %v1844
        %v1848 = vmul.f32 %v1842, %v1845
        %v1849 = vmul.f32 %v1843, %v1846
        %v1850 = vadd.f32 %v1847, %v1027
        %v1851 = vadd.f32 %v1848, %v1027
        %v1852 = vadd.f32 %v1849, %v1027
        %v1853 = vsel %vm1213, %v1850, -inf
        %1854 = vmax.xlane.f32.xlu0 %v1853
        %v1855 = vpop.xlane.xlu0 %1854
        %v1856 = vsel %vm1213, %v1851, -inf
        %1857 = vmax.xlane.f32.xlu0 %v1856
        %v1858 = vpop.xlane.xlu0 %1857
        %v1859 = vsel %vm1213, %v1852, -inf
        %1860 = vmax.xlane.f32.xlu0 %v1859
        %v1861 = vpop.xlane.xlu0 %1860
        %v1862 = vsub.f32 %v1850, %v1855
        %v1863 = vsub.f32 %v1851, %v1858
        %v1864 = vsub.f32 %v1852, %v1861
        %v1865 = vmul.f32 %v1862, 1.442695
        %v1866 = vpow.pop %v1865
        %v1867 = vmul.f32 %v1863, 1.442695
        %v1868 = vpow.pop %v1867
        %v1869 = vmul.f32 %v1864, 1.442695
        %v1870 = vpow.pop %v1869
        %v1871 = vsel %vm1213, %v1866, 0.0
        %1872 = vadd.xlane.f32.xlu0 %v1871
        %v1873 = vpop.xlane.xlu0 %1872
        %v1874 = vsel %vm1213, %v1868, 0.0
        %1875 = vadd.xlane.f32.xlu0 %v1874
        %v1876 = vpop.xlane.xlu0 %1875
        %v1877 = vsel %vm1213, %v1870, 0.0
        %1878 = vadd.xlane.f32.xlu0 %v1877
        %v1879 = vpop.xlane.xlu0 %1878
        %v1880 = vrcp.pop %v1873
        %v1881 = vrcp.pop %v1876
        %v1882 = vrcp.pop %v1879
        %v1883 = vmul.f32 %v1866, %v1880
        %v1884 = vmul.f32 %v1868, %v1881
        %v1885 = vmul.f32 %v1870, %v1882
        %v1886 = vpack.c.bf16 %v1884, %v1883
        %v1887 = vpack.c.bf16 %v1885, %v1885
        %1888 = vrot.lane.b32.xlu0 %v1372, 48
        %v1889 = vpop.permute.xlu0 %1888
        %1890 = vrot.lane.b32.xlu0 %v1373, 48
        %v1891 = vpop.permute.xlu0 %1890
        %v1894 = vsel %vm1213, %v1886, 0
        %v1897 = vsel %vm1213, %v1887, 0
        %v1900 = vsel %vm1387, %v1891, 0
        %1902 = vmatpush.bf16.msra.mxu0 0
        %1903 = vmatpush.bf16.msra.mxu0 0
        %1904 = vmatpush.bf16.msra.mxu0 0
        %1905 = vmatpush.bf16.msra.mxu0 0
        %1906 = vmatpush.bf16.msra.mxu0 0
        %1907 = vmatpush.bf16.msra.mxu0 0
        %1908 = vmatpush.bf16.msra.mxu0 %v1900
        %1909 = vmatpush.bf16.msra.mxu0 %v1889
        %1910 = vmatmul.bf16.gmra.mxu0 %v1894
        %v1911 = vpop.f32.mrf.mxu0
        %v1912 = vadd.f32 0.0, %v1911
        %v1913 = vpop.f32.mrf.mxu0
        %v1914 = vadd.f32 0.0, %v1913
        %1915 = vmatmul.bf16.gmra.mxu0 %v1897
        %v1916 = vpop.f32.mrf.mxu0
        %v1917 = vadd.f32 0.0, %v1916
        %v1918 = vpop.f32.mrf.mxu0
        %1919 = vdwg.mxu0
        %1923 = vrot.lane.b32.xlu0 %v1912, 16
        %v1924 = vpop.permute.xlu0 %1923
        %1925 = vrot.lane.b32.xlu0 %v1914, 16
        %v1926 = vpop.permute.xlu0 %1925
        %1927 = vrot.lane.b32.xlu0 %v1917, 16
        %v1928 = vpop.permute.xlu0 %1927
        %vm1932 = vcmask 195712
        %1933 = vst.msk [vmem:[#allocation3] sm:$0xff] %vm1932, %v1924
        %1934 = vst.msk [vmem:[#allocation3 + $0x8] sm:$0xff] %vm1932, %v1926
        %1935 = vst.msk [vmem:[#allocation3 + $0x10] sm:$0xff] %vm1932, %v1928
        %1936 = vrot.lane.b32.xlu0 %v1147, 104
        %v1937 = vpop.permute.xlu0 %1936
        %1938 = vrot.lane.b32.xlu0 %v1149, 104
        %v1939 = vpop.permute.xlu0 %1938
        %1940 = vrot.lane.b32.xlu0 %v1152, 104
        %v1941 = vpop.permute.xlu0 %1940
        %1942 = vrot.lane.b32.xlu0 %v1147, 72
        %v1943 = vpop.permute.xlu0 %1942
        %1944 = vrot.lane.b32.xlu0 %v1149, 72
        %v1945 = vpop.permute.xlu0 %1944
        %1946 = vrot.lane.b32.xlu0 %v1152, 72
        %v1947 = vpop.permute.xlu0 %1946
        %v1948 = vsel %vm1168, %v1937, 0
        %v1950 = vsel %vm1168, %v1939, 0
        %v1952 = vsel %vm1168, %v1941, 0
        %v1954 = vsel %vm1168, %v1943, 0
        %v1956 = vsel %vm1168, %v1945, 0
        %v1958 = vsel %vm1168, %v1947, 0
        %1960 = vmatpush.xpose.msra.mxu0 0.0
        %1961 = vmatpush.xpose.msra.mxu0 0.0
        %1962 = vmatpush.xpose.msra.mxu0 0.0
        %1963 = vmatpush.xpose.msra.mxu0 0.0
        %1964 = vmatpush.xpose.msra.mxu0 0.0
        %1965 = vmatpush.xpose.msra.mxu0 0.0
        %1966 = vmatpush.xpose.msra.mxu0 0.0
        %1967 = vmatpush.xpose.msra.mxu0 0.0
        %1968 = vmatpush.xpose.msra.mxu0 0.0
        %1969 = vmatpush.xpose.msra.mxu0 0.0
        %1970 = vmatpush.xpose.msra.mxu0 0.0
        %1971 = vmatpush.xpose.msra.mxu0 0.0
        %1972 = vmatpush.xpose.msra.mxu0 0.0
        %1973 = vmatpush.xpose.msra.mxu0 %v1958
        %1974 = vmatpush.xpose.msra.mxu0 %v1956
        %1975 = vmatpush.xpose.msra.mxu0 %v1954
        %1976 = vmatmul.f32.gmra.mxu0 %v1948
        %v1977 = vpop.f32.mrf.mxu0
        %v1978 = vadd.f32 0.0, %v1977
        %1979 = vmatmul.f32.gmra.mxu0 %v1950
        %v1980 = vpop.f32.mrf.mxu0
        %v1981 = vadd.f32 0.0, %v1980
        %1982 = vmatmul.f32.gmra.mxu0 %v1952
        %v1983 = vpop.f32.mrf.mxu0
        %v1984 = vadd.f32 0.0, %v1983
        %1985 = vdwg.mxu0
        %v1986 = vmul.f32 %v1978, 0.35355338
        %v1987 = vmul.f32 %v1981, 0.35355338
        %v1988 = vmul.f32 %v1984, 0.35355338
        %v1989 = vadd.f32 %v1986, %v1027
        %v1990 = vadd.f32 %v1987, %v1027
        %v1991 = vadd.f32 %v1988, %v1027
        %v1992 = vsel %vm1213, %v1989, -inf
        %1993 = vmax.xlane.f32.xlu0 %v1992
        %v1994 = vpop.xlane.xlu0 %1993
        %v1995 = vsel %vm1213, %v1990, -inf
        %1996 = vmax.xlane.f32.xlu0 %v1995
        %v1997 = vpop.xlane.xlu0 %1996
        %v1998 = vsel %vm1213, %v1991, -inf
        %1999 = vmax.xlane.f32.xlu0 %v1998
        %v2000 = vpop.xlane.xlu0 %1999
        %v2001 = vsub.f32 %v1989, %v1994
        %v2002 = vsub.f32 %v1990, %v1997
        %v2003 = vsub.f32 %v1991, %v2000
        %v2004 = vmul.f32 %v2001, 1.442695
        %v2005 = vpow.pop %v2004
        %v2006 = vmul.f32 %v2002, 1.442695
        %v2007 = vpow.pop %v2006
        %v2008 = vmul.f32 %v2003, 1.442695
        %v2009 = vpow.pop %v2008
        %v2010 = vsel %vm1213, %v2005, 0.0
        %2011 = vadd.xlane.f32.xlu0 %v2010
        %v2012 = vpop.xlane.xlu0 %2011
        %v2013 = vsel %vm1213, %v2007, 0.0
        %2014 = vadd.xlane.f32.xlu0 %v2013
        %v2015 = vpop.xlane.xlu0 %2014
        %v2016 = vsel %vm1213, %v2009, 0.0
        %2017 = vadd.xlane.f32.xlu0 %v2016
        %v2018 = vpop.xlane.xlu0 %2017
        %v2019 = vrcp.pop %v2012
        %v2020 = vmul.f32 %v2012, %v2019
        %v2021 = vsub.f32 1.0, %v2020
        %v2022 = vmul.f32 %v2019, %v2021
        %v2023 = vadd.f32 %v2019, %v2022
        %vm2024 = vweird.f32 %v2012
        %vm2025 = vweird.f32 %v2019
        %vm2026 = vmor %vm2024, %vm2025
        %v2027 = vsel %vm2026, %v2019, %v2023
        %v2028 = vand.u32 2147483647, %v2012
        %vm2029 = vcmp.eq.f32.partialorder %v2028, 8.507059e+37
        %v2030 = vand.u32 %v2012, 2147483648
        %v2031 = vor.u32 1.1754944e-38, %v2030
        %v2032 = vsel %vm2029, %v2031, %v2027
        %v2033 = vmul.f32 %v2005, %v2032
        %v2034 = vrcp.pop %v2015
        %v2035 = vmul.f32 %v2015, %v2034
        %v2036 = vsub.f32 1.0, %v2035
        %v2037 = vmul.f32 %v2034, %v2036
        %v2038 = vadd.f32 %v2034, %v2037
        %vm2039 = vweird.f32 %v2015
        %vm2040 = vweird.f32 %v2034
        %vm2041 = vmor %vm2039, %vm2040
        %v2042 = vsel %vm2041, %v2034, %v2038
        %v2043 = vand.u32 2147483647, %v2015
        %vm2044 = vcmp.eq.f32.partialorder %v2043, 8.507059e+37
        %v2045 = vand.u32 %v2015, 2147483648
        %v2046 = vor.u32 1.1754944e-38, %v2045
        %v2047 = vsel %vm2044, %v2046, %v2042
        %v2048 = vmul.f32 %v2007, %v2047
        %v2049 = vrcp.pop %v2018
        %v2050 = vmul.f32 %v2018, %v2049
        %v2051 = vsub.f32 1.0, %v2050
        %v2052 = vmul.f32 %v2049, %v2051
        %v2053 = vadd.f32 %v2049, %v2052
        %vm2054 = vweird.f32 %v2018
        %vm2055 = vweird.f32 %v2049
        %vm2056 = vmor %vm2054, %vm2055
        %v2057 = vsel %vm2056, %v2049, %v2053
        %v2058 = vand.u32 2147483647, %v2018
        %vm2059 = vcmp.eq.f32.partialorder %v2058, 8.507059e+37
        %v2060 = vand.u32 %v2018, 2147483648
        %v2061 = vor.u32 1.1754944e-38, %v2060
        %v2062 = vsel %vm2059, %v2061, %v2057
        %v2063 = vmul.f32 %v2009, %v2062
        %s2064 = sadd.s32 %s1286, 3
        %s2065 = sld [smem:[#allocation4 + %s2064]]
        %v2066 = vstv %s2065
        %v2067 = vmul.f32 %v2066, %v2033
        %v2068 = vmul.f32 %v2066, %v2048
        %v2069 = vmul.f32 %v2066, %v2063
        %v2070 = vsub.f32 1.0, %v2033
        %v2071 = vsub.f32 1.0, %v2048
        %v2072 = vsub.f32 1.0, %v2063
        %v2073 = vmul.f32 %v2067, %v2070
        %v2074 = vmul.f32 %v2068, %v2071
        %v2075 = vmul.f32 %v2069, %v2072
        %v2076 = vmul.f32 %v2066, %v2073
        %v2077 = vmul.f32 %v2066, %v2074
        %v2078 = vmul.f32 %v2066, %v2075
        %v2079 = vsub.f32 1.0, %v2073
        %v2080 = vsub.f32 1.0, %v2074
        %v2081 = vsub.f32 1.0, %v2075
        %v2082 = vmul.f32 %v2076, %v2079
        %v2083 = vmul.f32 %v2077, %v2080
        %v2084 = vmul.f32 %v2078, %v2081
        %v2085 = vmul.f32 %v2066, %v2082
        %v2086 = vmul.f32 %v2066, %v2083
        %v2087 = vmul.f32 %v2066, %v2084
        %v2088 = vsub.f32 1.0, %v2082
        %v2089 = vsub.f32 1.0, %v2083
        %v2090 = vsub.f32 1.0, %v2084
        %v2091 = vmul.f32 %v2085, %v2088
        %v2092 = vmul.f32 %v2086, %v2089
        %v2093 = vmul.f32 %v2087, %v2090
        %v2094 = vmul.f32 %v2066, %v2091
        %v2095 = vmul.f32 %v2066, %v2092
        %v2096 = vmul.f32 %v2066, %v2093
        %v2097 = vsub.f32 1.0, %v2091
        %v2098 = vsub.f32 1.0, %v2092
        %v2099 = vsub.f32 1.0, %v2093
        %v2100 = vmul.f32 %v2094, %v2097
        %v2101 = vmul.f32 %v2095, %v2098
        %v2102 = vmul.f32 %v2096, %v2099
        %v2103 = vmul.f32 %v2066, %v2100
        %v2104 = vmul.f32 %v2066, %v2101
        %v2105 = vmul.f32 %v2066, %v2102
        %v2106 = vsub.f32 1.0, %v2100
        %v2107 = vsub.f32 1.0, %v2101
        %v2108 = vsub.f32 1.0, %v2102
        %v2109 = vmul.f32 %v2103, %v2106
        %v2110 = vmul.f32 %v2104, %v2107
        %v2111 = vmul.f32 %v2105, %v2108
        %v2112 = vadd.f32 %v2109, %v1027
        %v2113 = vadd.f32 %v2110, %v1027
        %v2114 = vadd.f32 %v2111, %v1027
        %v2115 = vsel %vm1213, %v2112, -inf
        %2116 = vmax.xlane.f32.xlu0 %v2115
        %v2117 = vpop.xlane.xlu0 %2116
        %v2118 = vsel %vm1213, %v2113, -inf
        %2119 = vmax.xlane.f32.xlu0 %v2118
        %v2120 = vpop.xlane.xlu0 %2119
        %v2121 = vsel %vm1213, %v2114, -inf
        %2122 = vmax.xlane.f32.xlu0 %v2121
        %v2123 = vpop.xlane.xlu0 %2122
        %v2124 = vsub.f32 %v2112, %v2117
        %v2125 = vsub.f32 %v2113, %v2120
        %v2126 = vsub.f32 %v2114, %v2123
        %v2127 = vmul.f32 %v2124, 1.442695
        %v2128 = vpow.pop %v2127
        %v2129 = vmul.f32 %v2125, 1.442695
        %v2130 = vpow.pop %v2129
        %v2131 = vmul.f32 %v2126, 1.442695
        %v2132 = vpow.pop %v2131
        %v2133 = vsel %vm1213, %v2128, 0.0
        %2134 = vadd.xlane.f32.xlu0 %v2133
        %v2135 = vpop.xlane.xlu0 %2134
        %v2136 = vsel %vm1213, %v2130, 0.0
        %2137 = vadd.xlane.f32.xlu0 %v2136
        %v2138 = vpop.xlane.xlu0 %2137
        %v2139 = vsel %vm1213, %v2132, 0.0
        %2140 = vadd.xlane.f32.xlu0 %v2139
        %v2141 = vpop.xlane.xlu0 %2140
        %v2142 = vrcp.pop %v2135
        %v2143 = vrcp.pop %v2138
        %v2144 = vrcp.pop %v2141
        %v2145 = vmul.f32 %v2128, %v2142
        %v2146 = vmul.f32 %v2130, %v2143
        %v2147 = vmul.f32 %v2132, %v2144
        %v2148 = vpack.c.bf16 %v2146, %v2145
        %v2149 = vpack.c.bf16 %v2147, %v2147
        %2150 = vrot.lane.b32.xlu0 %v1372, 40
        %v2151 = vpop.permute.xlu0 %2150
        %2152 = vrot.lane.b32.xlu0 %v1373, 40
        %v2153 = vpop.permute.xlu0 %2152
        %v2156 = vsel %vm1213, %v2148, 0
        %v2159 = vsel %vm1213, %v2149, 0
        %v2162 = vsel %vm1387, %v2153, 0
        %2164 = vmatpush.bf16.msra.mxu0 0
        %2165 = vmatpush.bf16.msra.mxu0 0
        %2166 = vmatpush.bf16.msra.mxu0 0
        %2167 = vmatpush.bf16.msra.mxu0 0
        %2168 = vmatpush.bf16.msra.mxu0 0
        %2169 = vmatpush.bf16.msra.mxu0 0
        %2170 = vmatpush.bf16.msra.mxu0 %v2162
        %2171 = vmatpush.bf16.msra.mxu0 %v2151
        %2172 = vmatmul.bf16.gmra.mxu0 %v2156
        %v2173 = vpop.f32.mrf.mxu0
        %v2174 = vadd.f32 0.0, %v2173
        %v2175 = vpop.f32.mrf.mxu0
        %v2176 = vadd.f32 0.0, %v2175
        %2177 = vmatmul.bf16.gmra.mxu0 %v2159
        %v2178 = vpop.f32.mrf.mxu0
        %v2179 = vadd.f32 0.0, %v2178
        %v2180 = vpop.f32.mrf.mxu0
        %2181 = vdwg.mxu0
        %2185 = vrot.lane.b32.xlu0 %v2174, 24
        %v2186 = vpop.permute.xlu0 %2185
        %2187 = vrot.lane.b32.xlu0 %v2176, 24
        %v2188 = vpop.permute.xlu0 %2187
        %2189 = vrot.lane.b32.xlu0 %v2179, 24
        %v2190 = vpop.permute.xlu0 %2189
        %vm2194 = vcmask 261312
        %2195 = vst.msk [vmem:[#allocation3] sm:$0xff] %vm2194, %v2186
        %2196 = vst.msk [vmem:[#allocation3 + $0x8] sm:$0xff] %vm2194, %v2188
        %2197 = vst.msk [vmem:[#allocation3 + $0x10] sm:$0xff] %vm2194, %v2190
        %v2198 = vld [vmem:[#allocation3] sm:$0xff]
        %v2199 = vld [vmem:[#allocation3 + $0x8] sm:$0xff]
        %v2200 = vld [vmem:[#allocation3 + $0x10] sm:$0xff]
        %v2201 = vpack.c.bf16 %v2199, %v2198
        %v2202 = vpack.c.bf16 %v2200, %v2200
        %v2203 = vpack.c.bf16 %v1156, %v1155
        %v2204 = vpack.c.bf16 %v1158, %v1157
        %v2205 = vld [vmem:[%s879] sm:$0x1]
        %v2207 = vperm.slane %v2205, 0
        %v2210 = vsel %vm1033, %v2201, 0
        %v2213 = vsel %vm1033, %v2202, 0
        %2215 = vmatpush.bf16.msra.mxu0 0
        %2216 = vmatpush.bf16.msra.mxu0 0
        %2217 = vmatpush.bf16.msra.mxu0 0
        %2218 = vmatpush.bf16.msra.mxu0 0
        %2219 = vmatpush.bf16.msra.mxu0 0
        %2220 = vmatpush.bf16.msra.mxu0 0
        %2221 = vmatpush.bf16.msra.mxu0 %v2204
        %2222 = vmatpush.bf16.msra.mxu0 %v2203
        %2223 = vmatmul.bf16.gmra.mxu0 %v2210
        %v2224 = vpop.f32.mrf.mxu0
        %v2225 = vadd.f32 %v2207, %v2224
        %v2226 = vpop.f32.mrf.mxu0
        %v2227 = vadd.f32 %v2207, %v2226
        %2228 = vmatmul.bf16.gmra.mxu0 %v2213
        %v2229 = vpop.f32.mrf.mxu0
        %v2230 = vadd.f32 %v2207, %v2229
        %v2231 = vpop.f32.mrf.mxu0
        %2232 = vdwg.mxu0
        %v2233 = vadd.f32 %v1028, %v2225
        %v2234 = vadd.f32 %v1029, %v2227
        %v2235 = vadd.f32 %v1030, %v2230
        %2236 = vst.msk [vmem:[#allocation2] sm:$0xff] %vm1033, %v2233
        %2237 = vst.msk [vmem:[#allocation2 + $0x8] sm:$0xff] %vm1033, %v2234
        %2238 = vst.msk [vmem:[#allocation2 + $0x10] sm:$0xff] %vm1033, %v2235
        %v2239 = vld [vmem:[#allocation2] sm:$0xff]
        %v2240 = vld [vmem:[#allocation2 + $0x8] sm:$0xff]
        %v2241 = vld [vmem:[#allocation2 + $0x10] sm:$0xff]
        %v2242 = vld [vmem:[%s882] sm:$0x1]
        %v2243 = vld [vmem:[%s885] sm:$0x1]
        %v2244 = vsel %vm1033, %v2239, 0.0
        %2245 = vadd.xlane.f32.xlu0 %v2244
        %v2246 = vpop.xlane.xlu0 %2245
        %v2247 = vsel %vm1033, %v2240, 0.0
        %2248 = vadd.xlane.f32.xlu0 %v2247
        %v2249 = vpop.xlane.xlu0 %2248
        %v2250 = vsel %vm1033, %v2241, 0.0
        %2251 = vadd.xlane.f32.xlu0 %v2250
        %v2252 = vpop.xlane.xlu0 %2251
        %v2253 = vmul.f32 %v2246, %v1049
        %v2254 = vmul.f32 %v2249, %v1049
        %v2255 = vmul.f32 %v2252, %v1049
        %v2256 = vsub.f32 %v2239, %v2253
        %v2257 = vsub.f32 %v2240, %v2254
        %v2258 = vsub.f32 %v2241, %v2255
        %v2259 = vmul.f32 %v2256, %v2256
        %v2260 = vmul.f32 %v2257, %v2257
        %v2261 = vmul.f32 %v2258, %v2258
        %v2262 = vsel %vm1033, %v2259, 0.0
        %2263 = vadd.xlane.f32.xlu0 %v2262
        %v2264 = vpop.xlane.xlu0 %2263
        %v2265 = vsel %vm1033, %v2260, 0.0
        %2266 = vadd.xlane.f32.xlu0 %v2265
        %v2267 = vpop.xlane.xlu0 %2266
        %v2268 = vsel %vm1033, %v2261, 0.0
        %2269 = vadd.xlane.f32.xlu0 %v2268
        %v2270 = vpop.xlane.xlu0 %2269
        %v2271 = vmul.f32 %v2264, %v1049
        %v2272 = vmul.f32 %v2267, %v1049
        %v2273 = vmul.f32 %v2270, %v1049
        %v2274 = vadd.f32 %v2271, 1e-05
        %v2275 = vadd.f32 %v2272, 1e-05
        %v2276 = vadd.f32 %v2273, 1e-05
        %v2277 = vrsqrt.pop %v2274
        %v2278 = vmul.f32 %v2277, %v2274
        %v2279 = vmul.f32 %v2278, %v2277
        %v2280 = vmul.f32 0.5, %v2279
        %v2281 = vsub.f32 1.5, %v2280
        %v2282 = vmul.f32 %v2277, %v2281
        %vm2283 = vweird.f32 %v2274
        %vm2284 = vweird.f32 %v2277
        %vm2285 = vmor %vm2283, %vm2284
        %v2286 = vsel %vm2285, %v2277, %v2282
        %v2287 = vrsqrt.pop %v2275
        %v2288 = vmul.f32 %v2287, %v2275
        %v2289 = vmul.f32 %v2288, %v2287
        %v2290 = vmul.f32 0.5, %v2289
        %v2291 = vsub.f32 1.5, %v2290
        %v2292 = vmul.f32 %v2287, %v2291
        %vm2293 = vweird.f32 %v2275
        %vm2294 = vweird.f32 %v2287
        %vm2295 = vmor %vm2293, %vm2294
        %v2296 = vsel %vm2295, %v2287, %v2292
        %v2297 = vrsqrt.pop %v2276
        %v2298 = vmul.f32 %v2297, %v2276
        %v2299 = vmul.f32 %v2298, %v2297
        %v2300 = vmul.f32 0.5, %v2299
        %v2301 = vsub.f32 1.5, %v2300
        %v2302 = vmul.f32 %v2297, %v2301
        %vm2303 = vweird.f32 %v2276
        %vm2304 = vweird.f32 %v2297
        %vm2305 = vmor %vm2303, %vm2304
        %v2306 = vsel %vm2305, %v2297, %v2302
        %v2307 = vmul.f32 %v2256, %v2286
        %v2308 = vmul.f32 %v2257, %v2296
        %v2309 = vmul.f32 %v2258, %v2306
        %v2311 = vperm.slane %v2242, 0
        %v2313 = vmul.f32 %v2307, %v2311
        %v2314 = vmul.f32 %v2308, %v2311
        %v2315 = vmul.f32 %v2309, %v2311
        %v2317 = vperm.slane %v2243, 0
        %v2319 = vadd.f32 %v2313, %v2317
        %v2320 = vadd.f32 %v2314, %v2317
        %v2321 = vadd.f32 %v2315, %v2317
        %v2322 = vld [vmem:[%s890] sm:$0xff]
        %v2323 = vld [vmem:[%s890 + $0x8] sm:$0xff]
        %v2324 = vld [vmem:[%s890 + $0x10] sm:$0xff]
        %v2325 = vld [vmem:[%s890 + $0x18] sm:$0xff]
        %v2326 = vpack.c.bf16 %v2320, %v2319
        %v2327 = vpack.c.bf16 %v2321, %v2321
        %v2328 = vpack.c.bf16 %v2323, %v2322
        %v2329 = vpack.c.bf16 %v2325, %v2324
        %v2330 = vld [vmem:[%s893] sm:$0x1]
        %v2332 = vperm.slane %v2330, 0
        %v2335 = vsel %vm1033, %v2326, 0
        %v2338 = vsel %vm1033, %v2327, 0
        %2340 = vmatpush.bf16.msra.mxu0 0
        %2341 = vmatpush.bf16.msra.mxu0 0
        %2342 = vmatpush.bf16.msra.mxu0 0
        %2343 = vmatpush.bf16.msra.mxu0 0
        %2344 = vmatpush.bf16.msra.mxu0 0
        %2345 = vmatpush.bf16.msra.mxu0 0
        %2346 = vmatpush.bf16.msra.mxu0 %v2329
        %2347 = vmatpush.bf16.msra.mxu0 %v2328
        %2348 = vmatmul.bf16.gmra.mxu0 %v2335
        %v2349 = vpop.f32.mrf.mxu0
        %v2350 = vadd.f32 %v2332, %v2349
        %v2351 = vpop.f32.mrf.mxu0
        %v2352 = vadd.f32 %v2332, %v2351
        %2353 = vmatmul.bf16.gmra.mxu0 %v2338
        %v2354 = vpop.f32.mrf.mxu0
        %v2355 = vadd.f32 %v2332, %v2354
        %v2356 = vpop.f32.mrf.mxu0
        %2357 = vdwg.mxu0
        %v2358 = vmul.f32 %v2350, 0.5
        %v2359 = vmul.f32 %v2352, 0.5
        %v2360 = vmul.f32 %v2355, 0.5
        %v2361 = vmul.f32 %v2350, 0.044715
        %v2362 = vmul.f32 %v2352, 0.044715
        %v2363 = vmul.f32 %v2355, 0.044715
        %v2364 = vmul.f32 %v2361, %v2350
        %v2365 = vmul.f32 %v2362, %v2352
        %v2366 = vmul.f32 %v2363, %v2355
        %v2367 = vmul.f32 %v2364, %v2350
        %v2368 = vmul.f32 %v2365, %v2352
        %v2369 = vmul.f32 %v2366, %v2355
        %v2370 = vadd.f32 %v2350, %v2367
        %v2371 = vadd.f32 %v2352, %v2368
        %v2372 = vadd.f32 %v2355, %v2369
        %v2373 = vmul.f32 %v2370, 0.7978846
        %v2374 = vmul.f32 %v2371, 0.7978846
        %v2375 = vmul.f32 %v2372, 0.7978846
        %v2376 = vtanh.pop %v2373
        %v2377 = vtanh.pop %v2374
        %v2378 = vtanh.pop %v2375
        %v2379 = vadd.f32 %v2376, 1.0
        %v2380 = vadd.f32 %v2377, 1.0
        %v2381 = vadd.f32 %v2378, 1.0
        %v2382 = vmul.f32 %v2358, %v2379
        %v2383 = vmul.f32 %v2359, %v2380
        %v2384 = vmul.f32 %v2360, %v2381
        %v2385 = vld [vmem:[%s898] sm:$0xff]
        %v2386 = vld [vmem:[%s898 + $0x8] sm:$0xff]
        %v2387 = vld [vmem:[%s898 + $0x10] sm:$0xff]
        %v2388 = vld [vmem:[%s898 + $0x18] sm:$0xff]
        %v2389 = vld [vmem:[%s898 + $0x20] sm:$0xff]
        %v2390 = vld [vmem:[%s898 + $0x28] sm:$0xff]
        %v2391 = vld [vmem:[%s898 + $0x30] sm:$0xff]
        %v2392 = vld [vmem:[%s898 + $0x38] sm:$0xff]
        %v2393 = vpack.c.bf16 %v2383, %v2382
        %v2394 = vpack.c.bf16 %v2384, %v2384
        %v2395 = vpack.c.bf16 %v2386, %v2385
        %v2396 = vpack.c.bf16 %v2388, %v2387
        %v2397 = vpack.c.bf16 %v2390, %v2389
        %v2398 = vpack.c.bf16 %v2392, %v2391
        %vm2399 = vcmask 523264
        %v2401 = vsel %vm2399, %v2393, 0
        %v2404 = vsel %vm2399, %v2394, 0
        %2406 = vmatpush.bf16.msra.mxu0 0
        %2407 = vmatpush.bf16.msra.mxu0 0
        %2408 = vmatpush.bf16.msra.mxu0 0
        %2409 = vmatpush.bf16.msra.mxu0 0
        %2410 = vmatpush.bf16.msra.mxu0 %v2398
        %2411 = vmatpush.bf16.msra.mxu0 %v2397
        %2412 = vmatpush.bf16.msra.mxu0 %v2396
        %2413 = vmatpush.bf16.msra.mxu0 %v2395
        %2414 = vmatmul.bf16.gmra.mxu0 %v2401
        %v2415 = vpop.f32.mrf.mxu0
        %v2416 = vadd.f32 0.0, %v2415
        %v2417 = vpop.f32.mrf.mxu0
        %v2418 = vadd.f32 0.0, %v2417
        %2419 = vmatmul.bf16.gmra.mxu0 %v2404
        %v2420 = vpop.f32.mrf.mxu0
        %v2421 = vadd.f32 0.0, %v2420
        %v2422 = vpop.f32.mrf.mxu0
        %2423 = vdwg.mxu0
        %v2424 = vadd.f32 %v2239, %v2416
        %v2425 = vadd.f32 %v2240, %v2418
        %v2426 = vadd.f32 %v2241, %v2421
        %v2427 = vld [vmem:[%s901] sm:$0x1]
        %v2429 = vperm.slane %v2427, 0
        %v2431 = vadd.f32 %v2424, %v2429
        %v2432 = vadd.f32 %v2425, %v2429
        %v2433 = vadd.f32 %v2426, %v2429
        %2434 = vst.msk [vmem:[#allocation2] sm:$0xff] %vm1033, %v2431
        %2435 = vst.msk [vmem:[#allocation2 + $0x8] sm:$0xff] %vm1033, %v2432
        %2436 = vst.msk [vmem:[#allocation2 + $0x10] sm:$0xff] %vm1033, %v2433
        %p2437 = scmp.eq.s32.totalorder %s39, 1
        // Predicated region
        $region117: #{chaos_vit_forward.1} parent=107 // pred_check
          %p2438 = pneg %p2437
        $region118: #{chaos_vit_forward.1} parent=107 // pred_check_branch
          %2440 = sbr.rel (%p2438) target = $region120
        $region119: #{chaos_vit_forward.1} parent=107 // pred_region
          %v2441 = vld [vmem:[#allocation2] sm:$0xff]
          %v2442 = vld [vmem:[#allocation2 + $0x8] sm:$0xff]
          %v2443 = vld [vmem:[#allocation2 + $0x10] sm:$0xff]
          %v2444 = vld [vmem:[%s17] sm:$0x1]
          %v2445 = vld [vmem:[%s18] sm:$0x1]
          %v2446 = vsel %vm1033, %v2441, 0.0
          %2447 = vadd.xlane.f32.xlu0 %v2446
          %v2448 = vpop.xlane.xlu0 %2447
          %v2449 = vsel %vm1033, %v2442, 0.0
          %2450 = vadd.xlane.f32.xlu0 %v2449
          %v2451 = vpop.xlane.xlu0 %2450
          %v2452 = vsel %vm1033, %v2443, 0.0
          %2453 = vadd.xlane.f32.xlu0 %v2452
          %v2454 = vpop.xlane.xlu0 %2453
          %v2455 = vmul.f32 %v2448, %v1049
          %v2456 = vmul.f32 %v2451, %v1049
          %v2457 = vmul.f32 %v2454, %v1049
          %v2458 = vsub.f32 %v2441, %v2455
          %v2459 = vsub.f32 %v2442, %v2456
          %v2460 = vsub.f32 %v2443, %v2457
          %v2461 = vmul.f32 %v2458, %v2458
          %v2462 = vmul.f32 %v2459, %v2459
          %v2463 = vmul.f32 %v2460, %v2460
          %v2464 = vsel %vm1033, %v2461, 0.0
          %2465 = vadd.xlane.f32.xlu0 %v2464
          %v2466 = vpop.xlane.xlu0 %2465
          %v2467 = vsel %vm1033, %v2462, 0.0
          %2468 = vadd.xlane.f32.xlu0 %v2467
          %v2469 = vpop.xlane.xlu0 %2468
          %v2470 = vsel %vm1033, %v2463, 0.0
          %2471 = vadd.xlane.f32.xlu0 %v2470
          %v2472 = vpop.xlane.xlu0 %2471
          %v2473 = vmul.f32 %v2466, %v1049
          %v2474 = vmul.f32 %v2469, %v1049
          %v2475 = vmul.f32 %v2472, %v1049
          %v2476 = vadd.f32 %v2473, 1e-05
          %v2477 = vadd.f32 %v2474, 1e-05
          %v2478 = vadd.f32 %v2475, 1e-05
          %v2479 = vrsqrt.pop %v2476
          %v2480 = vmul.f32 %v2479, %v2476
          %v2481 = vmul.f32 %v2480, %v2479
          %v2482 = vmul.f32 0.5, %v2481
          %v2483 = vsub.f32 1.5, %v2482
          %v2484 = vmul.f32 %v2479, %v2483
          %vm2485 = vweird.f32 %v2476
          %vm2486 = vweird.f32 %v2479
          %vm2487 = vmor %vm2485, %vm2486
          %v2488 = vsel %vm2487, %v2479, %v2484
          %v2489 = vrsqrt.pop %v2477
          %v2490 = vmul.f32 %v2489, %v2477
          %v2491 = vmul.f32 %v2490, %v2489
          %v2492 = vmul.f32 0.5, %v2491
          %v2493 = vsub.f32 1.5, %v2492
          %v2494 = vmul.f32 %v2489, %v2493
          %vm2495 = vweird.f32 %v2477
          %vm2496 = vweird.f32 %v2489
          %vm2497 = vmor %vm2495, %vm2496
          %v2498 = vsel %vm2497, %v2489, %v2494
          %v2499 = vrsqrt.pop %v2478
          %v2500 = vmul.f32 %v2499, %v2478
          %v2501 = vmul.f32 %v2500, %v2499
          %v2502 = vmul.f32 0.5, %v2501
          %v2503 = vsub.f32 1.5, %v2502
          %v2504 = vmul.f32 %v2499, %v2503
          %vm2505 = vweird.f32 %v2478
          %vm2506 = vweird.f32 %v2499
          %vm2507 = vmor %vm2505, %vm2506
          %v2508 = vsel %vm2507, %v2499, %v2504
          %v2509 = vmul.f32 %v2458, %v2488
          %v2510 = vmul.f32 %v2459, %v2498
          %v2511 = vmul.f32 %v2460, %v2508
          %v2513 = vperm.slane %v2444, 0
          %v2515 = vmul.f32 %v2509, %v2513
          %v2516 = vmul.f32 %v2510, %v2513
          %v2517 = vmul.f32 %v2511, %v2513
          %v2519 = vperm.slane %v2445, 0
          %v2521 = vadd.f32 %v2515, %v2519
          %v2522 = vadd.f32 %v2516, %v2519
          %v2523 = vadd.f32 %v2517, %v2519
          %v2524 = vld [vmem:[%s19] sm:$0xff]
          %v2525 = vld [vmem:[%s19 + $0x8] sm:$0xff]
          %v2526 = vld [vmem:[%s19 + $0x10] sm:$0xff]
          %v2527 = vld [vmem:[%s19 + $0x18] sm:$0xff]
          %v2528 = vpack.c.bf16 %v2522, %v2521
          %v2529 = vpack.c.bf16 %v2523, %v2523
          %v2530 = vpack.c.bf16 %v2525, %v2524
          %v2531 = vpack.c.bf16 %v2527, %v2526
          %v2532 = vld [vmem:[%s20] sm:$0x1]
          %v2534 = vperm.slane %v2532, 0
          %v2537 = vsel %vm1033, %v2528, 0
          %v2540 = vsel %vm1033, %v2529, 0
          %2542 = vmatpush.bf16.msra.mxu0 0
          %2543 = vmatpush.bf16.msra.mxu0 0
          %2544 = vmatpush.bf16.msra.mxu0 0
          %2545 = vmatpush.bf16.msra.mxu0 0
          %2546 = vmatpush.bf16.msra.mxu0 0
          %2547 = vmatpush.bf16.msra.mxu0 0
          %2548 = vmatpush.bf16.msra.mxu0 %v2531
          %2549 = vmatpush.bf16.msra.mxu0 %v2530
          %2550 = vmatmul.bf16.gmra.mxu0 %v2537
          %v2551 = vpop.f32.mrf.mxu0
          %v2552 = vadd.f32 %v2534, %v2551
          %v2553 = vpop.f32.mrf.mxu0
          %v2554 = vadd.f32 %v2534, %v2553
          %2555 = vmatmul.bf16.gmra.mxu0 %v2540
          %v2556 = vpop.f32.mrf.mxu0
          %v2557 = vadd.f32 %v2534, %v2556
          %v2558 = vpop.f32.mrf.mxu0
          %2559 = vdwg.mxu0
          %2560 = vst [vmem:[%s906] sm:$0xff] %v2552
          %2561 = vst [vmem:[%s906 + $0x8] sm:$0xff] %v2554
          %2562 = vst [vmem:[%s906 + $0x10] sm:$0xff] %v2557
        $region120: #{chaos_vit_forward.1} parent=107 // pred_fallthru
          _
        %s2563 = smul.u32 3, %s38
        %p2564 = scmp.lt.s32.totalorder %s2563, 5
        %s2565 = scalar_select %p2564, %s2563, 5
        %s2566 = smul.addr %s2565, 8
        %s2567 = scalar_lea.vmem %s22, %s2566
        // Predicated region
        $region121: #{chaos_vit_forward.1} parent=107 // pred_check
          %p2568 = pneg %p591
        $region122: #{chaos_vit_forward.1} parent=107 // pred_check_branch
          %2570 = sbr.rel (%p2568) target = $region124
        $region123: #{chaos_vit_forward.1} parent=107 // pred_region
          %s2571 = smul.u32 3, %s38
        $region124: #{chaos_vit_forward.1} parent=107 // pred_fallthru
          _
      $region108: #{chaos_vit_forward.1} parent=5 // pred_fallthru
        _
      %p2572 = scmp.le.s32.totalorder 2, %s29
      // Predicated region
      $region125: #{chaos_vit_forward.1} parent=5 // pred_check
        %p2573 = pneg %p2572
      $region126: #{chaos_vit_forward.1} parent=5 // pred_check_branch
        %2575 = sbr.rel (%p2573) target = $region128
      $region127: #{chaos_vit_forward.1} parent=5 // pred_region
        %s2576 = ssub.s32 %s29, 2
        // Predicated region
        $region129: #{chaos_vit_forward.1} parent=127 // pred_check
          %p2577 = pneg %p597
        $region130: #{chaos_vit_forward.1} parent=127 // pred_check_branch
          %2579 = sbr.rel (%p2577) target = $region132
        $region131: #{chaos_vit_forward.1} parent=127 // pred_region
          %s2580 = smul.u32 3, %s40
          %p2581 = scmp.lt.s32.totalorder %s2580, 5
          %s2582 = scalar_select %p2581, %s2580, 5
          %s2583 = smul.addr %s2582, 8
          %s2584 = scalar_lea.vmem %s22, %s2583
        $region132: #{chaos_vit_forward.1} parent=127 // pred_fallthru
          _
      $region128: #{chaos_vit_forward.1} parent=5 // pred_fallthru
        _
    $region6: #{chaos_vit_forward.1} parent=1 // loop_footer
      %s33 = sadd.s32 1, %s29
    $region7: #{chaos_vit_forward.1} parent=1 // loop_footer_branch
      %28 = sbr.rel target = $region3
    $region8: #{chaos_vit_forward.1} parent=1 // loop_exit
      _
    %2585 = vsyncpa [#allocation5], 1
    %s2586 = scalar_lea.sflag [#allocation5], 1
    %2587 = vsyncpa %s2586, 1

</llo_original>
